<compile_context>
chip_gen: v7x
topology: tpu7x:2x2x1
jax: 0.10.0
libtpu: 0.0.40
codegen_flags: <defaults>
</compile_context>

<pallas_src>
import numpy as np
import jax
import jax.numpy as jnp
from jax.experimental import pallas as pl
from jax.experimental.pallas import tpu as pltpu

# ----------------------- config (mirrors MLPNetworkConfig) -----------------------
ARG_DIM = 6                        # per-scene argument feature dim
OTHER_DIM = 10                     # per-object "other" feature dim
DIM_IN = ARG_DIM + OTHER_DIM       # config.dim_in = 16
HIDDEN = [32, 32]                  # config.layers
DIM_OUT = 8                        # config.dim_out
DIM_OUT_PAD = 128                  # lane-dense output columns (zero padded)
POOLING = "mean"                   # config.custom['graph_pooling'] in {'add','mean'}

TILE_N = 2048                      # row tile along the reduction axis


def _next_pow2(x: int) -> int:
    return 1 << (max(1, int(x)) - 1).bit_length()


# ----------------------------- Pallas kernel --------------------------------------
def mlp_encoder_kernel(x_ref, seg_ref, sclb_ref,
                       w1_ref, b1_ref, w2_ref, b2_ref, w3_ref, b3_ref,
                       o_ref, acc_ref, wsum_ref):
    k = pl.program_id(1)

    @pl.when(k == 0)
    def _():
        acc_ref[...] = jnp.zeros_like(acc_ref)
        wsum_ref[...] = jnp.zeros_like(wsum_ref)

    # pyg.nn.MLP([16, 32, 32, 8], norm=None): Linear -> ReLU -> Linear -> ReLU -> Linear
    # (the last Linear is applied AFTER pooling, which is valid because both are linear).
    x = x_ref[...]                                                   # (TILE_N, 16) bf16
    h1 = jnp.dot(x, w1_ref[...], preferred_element_type=jnp.float32) + b1_ref[...]
    h1 = jnp.maximum(h1, 0.0)
    h2 = jnp.dot(h1.astype(jnp.bfloat16), w2_ref[...],
                 preferred_element_type=jnp.float32) + b2_ref[...]
    h2 = jnp.maximum(h2, 0.0)                                        # (TILE_N, 32) f32

    # Segment pooling at hidden width 32: exact 0/1 one-hot built on the fly.
    # Padded rows carry seg = -1 so they never match any scene row.
    b_pad = acc_ref.shape[0]
    tile_n = seg_ref.shape[1]
    row_ids = jax.lax.broadcasted_iota(jnp.int32, (b_pad, tile_n), 0)
    match = row_ids == seg_ref[...]                                  # (B_pad, TILE_N) bool
    p16 = match.astype(jnp.bfloat16)                                 # exact 0/1 in bf16
    acc_ref[...] += jnp.dot(p16, h2.astype(jnp.bfloat16),
                            preferred_element_type=jnp.float32)      # (B_pad, 32)
    wsum_ref[...] += jnp.sum(match.astype(jnp.float32), axis=1, keepdims=True)

    @pl.when(k == pl.num_programs(1) - 1)
    def _():
        pooled = jnp.dot(acc_ref[...], w3_ref[...],
                         preferred_element_type=jnp.float32)         # (B_pad, 128) f32
        # mean: scale = 1/n_i (exact, f32); add: scale = 1.  wsum carries the n_i * b3 term.
        o_ref[...] = sclb_ref[...] * (pooled + wsum_ref[...] * b3_ref[...])


@jax.jit
def _pallas_mlp_encode(x, seg, scale_b, w1, b1, w2, b2, w3, b3):
    n_pad = x.shape[0]
    b_pad = scale_b.shape[0]
    n_tiles = n_pad // TILE_N
    n_splits = 2 if n_tiles >= 2 else 1        # 2-way megacore split on v7x when possible
    kps = n_tiles // n_splits

    parts = pl.pallas_call(
        mlp_encoder_kernel,
        out_shape=jax.ShapeDtypeStruct((n_splits, b_pad, DIM_OUT_PAD), jnp.float32),
        grid=(n_splits, kps),
        in_specs=[
            pl.BlockSpec((TILE_N, DIM_IN), lambda s, k, kps=kps: (s * kps + k, 0)),  # x
            pl.BlockSpec((1, TILE_N),      lambda s, k, kps=kps: (0, s * kps + k)),  # seg ids
            pl.BlockSpec((b_pad, 1),            lambda s, k: (0, 0)),                # per-scene scale
            pl.BlockSpec((DIM_IN, HIDDEN[0]),   lambda s, k: (0, 0)),                # w1 (resident)
            pl.BlockSpec((1, HIDDEN[0]),        lambda s, k: (0, 0)),                # b1
            pl.BlockSpec((HIDDEN[0], HIDDEN[1]), lambda s, k: (0, 0)),               # w2
            pl.BlockSpec((1, HIDDEN[1]),        lambda s, k: (0, 0)),                # b2
            pl.BlockSpec((HIDDEN[1], DIM_OUT_PAD), lambda s, k: (0, 0)),             # w3 (lane padded)
            pl.BlockSpec((1, DIM_OUT_PAD),      lambda s, k: (0, 0)),                # b3 (lane padded)
        ],
        out_specs=pl.BlockSpec((None, b_pad, DIM_OUT_PAD), lambda s, k: (s, 0, 0)),
        scratch_shapes=[pltpu.VMEM((b_pad, HIDDEN[1]), jnp.float32),   # acc
                        pltpu.VMEM((b_pad, 1), jnp.float32)],          # wsum (row counts)
        compiler_params=pltpu.CompilerParams(
            dimension_semantics=("parallel", "arbitrary"),
            vmem_limit_bytes=32 * 1024 * 1024),
    )(x, seg, scale_b, w1, b1, w2, b2, w3, b3)

    return jnp.sum(parts, axis=0)              # combine the per-split partial outputs


# ------------------------- parameter prep (done once) ------------------------------
def prepare_params(params):
    """Kernel-ready params: bf16 W1/W2, f32 biases, W3/b3 zero-padded to 128 cols (f32)."""
    w1, b1, w2, b2, w3, b3 = params
    w3p = jnp.zeros((w3.shape[0], DIM_OUT_PAD), jnp.float32).at[:, :DIM_OUT].set(w3)
    b3p = jnp.zeros((1, DIM_OUT_PAD), jnp.float32).at[:, :DIM_OUT].set(b3)
    return (w1.astype(jnp.bfloat16), b1.astype(jnp.float32),
            w2.astype(jnp.bfloat16), b2.astype(jnp.float32),
            w3p, b3p)


# ------------------------------- wrapper (glue) -------------------------------------
def manual_mlp_encoder_forward(argument_features, other_features, kernel_params,
                               pooling=POOLING):
    """Replicates ManualMLPEncoder.forward for a list of ragged scenes."""
    batch_size = len(argument_features)
    if batch_size == 0:
        return jnp.zeros((0, DIM_OUT), jnp.float32)
    b_pad = 8 * _next_pow2(pl.cdiv(batch_size, 8))       # bucketed (8, 16, 32, ...)

    # Ragged scene assembly on host (numpy), single device transfer afterwards.
    rows, seg_list = [], []
    scale_b = np.ones((b_pad, 1), np.float32)
    for i in range(batch_size):
        of = np.asarray(other_features[i], np.float32)
        if of.size > 0:
            n_i = of.shape[0]
            af = np.asarray(argument_features[i], np.float32).reshape(1, -1)
            af = np.broadcast_to(af, (n_i, af.shape[1]))
            rows.append(np.concatenate([af, of], axis=1))
        else:
            n_i = 1                                      # empty scene -> one zero row
            rows.append(np.zeros((1, DIM_IN), np.float32))
        seg_list.append(np.full((n_i,), i, np.int32))
        if pooling == "mean":
            scale_b[i, 0] = 1.0 / n_i

    x = np.concatenate(rows, axis=0)
    seg = np.concatenate(seg_list)

    n_total = x.shape[0]
    n_pad = TILE_N * _next_pow2(pl.cdiv(n_total, TILE_N))  # bucketed tile counts
    x = np.pad(x, ((0, n_pad - n_total), (0, 0)))
    seg = np.pad(seg, (0, n_pad - n_total), constant_values=-1)   # padded rows match no scene

    out = _pallas_mlp_encode(
        jnp.asarray(x, jnp.bfloat16),
        jnp.asarray(seg.reshape(1, -1), jnp.int32),
        jnp.asarray(scale_b),
        *kernel_params)
    return out[:batch_size, :DIM_OUT]


# ------------------------- deterministic parameter init ----------------------------
def init_params(key):
    dims = [DIM_IN, *HIDDEN, DIM_OUT]
    params = []
    for i in range(len(dims) - 1):
        key, kw, kb = jax.random.split(key, 3)
        fan_in, fan_out = dims[i], dims[i + 1]
        w = jax.random.normal(kw, (fan_in, fan_out), jnp.float32) / np.sqrt(fan_in)
        b = 0.01 * jax.random.normal(kb, (1, fan_out), jnp.float32)
        params.extend([w, b])
    return tuple(params)


# ------------------------------ pure-JAX f32 reference ------------------------------
def reference_forward(argument_features, other_features, params, pooling=POOLING):
    w1, b1, w2, b2, w3, b3 = params
    outs = []
    for i in range(len(argument_features)):
        of = other_features[i]
        if of.size > 0:
            af = jnp.asarray(argument_features[i], jnp.float32).reshape(1, -1)
            af = jnp.broadcast_to(af, (of.shape[0], af.shape[1]))
            xi = jnp.concatenate([af, jnp.asarray(of, jnp.float32)], axis=1)
        else:
            xi = jnp.zeros((1, DIM_IN), jnp.float32)
        h = jnp.maximum(xi @ w1 + b1, 0.0)
        h = jnp.maximum(h @ w2 + b2, 0.0)
        y = h @ w3 + b3
        outs.append(jnp.mean(y, axis=0) if pooling == "mean" else jnp.sum(y, axis=0))
    return jnp.stack(outs)


def _make_batch(key, other_counts):
    argument_features, other_features = [], []
    for c in other_counts:
        key, ka, ko = jax.random.split(key, 3)
        argument_features.append(jax.random.normal(ka, (ARG_DIM,), jnp.float32))
        if c > 0:
            other_features.append(jax.random.normal(ko, (c, OTHER_DIM), jnp.float32))
        else:
            other_features.append(jnp.zeros((0, OTHER_DIM), jnp.float32))
    return key, argument_features, other_features


# ----------------------------------- main -------------------------------------------
if __name__ == "__main__":
    key = jax.random.PRNGKey(0)
    key, kp = jax.random.split(key)
    params = init_params(kp)
    kernel_params = prepare_params(params)

    # Test 1: small batch of 3 scenes: 3 objects, 0 objects (empty-scene path), 5 objects.
    key, arg_feats, other_feats = _make_batch(key, [3, 0, 5])
    out = manual_mlp_encoder_forward(arg_feats, other_feats, kernel_params)
    out = jax.block_until_ready(out)
    ref = reference_forward(arg_feats, other_feats, params)
    # bf16 MXU inputs with f32 accumulation -> small drift vs the pure-f32 reference.
    np.testing.assert_allclose(np.asarray(out), np.asarray(ref), rtol=3e-2, atol=5e-2)

    # Test 2: larger scenes -> exercises multi-tile accumulation and the 2-way row split.
    key, arg_feats2, other_feats2 = _make_batch(key, [1500, 700, 2500])
    out2 = manual_mlp_encoder_forward(arg_feats2, other_feats2, kernel_params)
    out2 = jax.block_until_ready(out2)
    ref2 = reference_forward(arg_feats2, other_feats2, params)
    np.testing.assert_allclose(np.asarray(out2), np.asarray(ref2), rtol=3e-2, atol=5e-2)

    print("KERNEL_OK")
</pallas_src>

<mosaic_0001>
module attributes {stable_mosaic.version = 11 : i64} {
  func.func @mlp_encoder_kernel(%arg0: i32, %arg1: i32, %arg2: memref<2048x16xbf16, #tpu.memory_space<vmem>>, %arg3: memref<1x2048xi32, #tpu.memory_space<vmem>>, %arg4: memref<8x1xf32, #tpu.memory_space<vmem>>, %arg5: memref<16x32xbf16, #tpu.memory_space<vmem>>, %arg6: memref<1x32xf32, #tpu.memory_space<vmem>>, %arg7: memref<32x32xbf16, #tpu.memory_space<vmem>>, %arg8: memref<1x32xf32, #tpu.memory_space<vmem>>, %arg9: memref<32x128xf32, #tpu.memory_space<vmem>>, %arg10: memref<1x128xf32, #tpu.memory_space<vmem>>, %arg11: memref<1x8x128xf32, #tpu.memory_space<vmem>>, %arg12: memref<8x32xf32, #tpu.memory_space<vmem>>, %arg13: memref<8x1xf32, #tpu.memory_space<vmem>>) attributes {dimension_semantics = [#tpu.dimension_semantics<parallel>, #tpu.dimension_semantics<arbitrary>], iteration_bounds = array<i64: 1, 1>, scalar_prefetch = 0 : i64, scratch_operands = 2 : i64, tpu.core_type = #tpu.core_type<tc>, window_params = [{transform_indices = @transform_0, window_bounds = array<i64: 2048, 16>}, {transform_indices = @transform_1, window_bounds = array<i64: 1, 2048>}, {pipeline_mode = #tpu.pipeline_mode<synchronous>, transform_indices = @transform_2, window_bounds = array<i64: 8, 1>}, {pipeline_mode = #tpu.pipeline_mode<synchronous>, transform_indices = @transform_3, window_bounds = array<i64: 16, 32>}, {pipeline_mode = #tpu.pipeline_mode<synchronous>, transform_indices = @transform_4, window_bounds = array<i64: 1, 32>}, {pipeline_mode = #tpu.pipeline_mode<synchronous>, transform_indices = @transform_5, window_bounds = array<i64: 32, 32>}, {pipeline_mode = #tpu.pipeline_mode<synchronous>, transform_indices = @transform_6, window_bounds = array<i64: 1, 32>}, {pipeline_mode = #tpu.pipeline_mode<synchronous>, transform_indices = @transform_7, window_bounds = array<i64: 32, 128>}, {pipeline_mode = #tpu.pipeline_mode<synchronous>, transform_indices = @transform_8, window_bounds = array<i64: 1, 128>}, {transform_indices = @transform_9, window_bounds = array<i64: 1, 8, 128>}]} {
    %c0_i32 = arith.constant 0 : i32
    %0 = arith.cmpi eq, %arg1, %c0_i32 : i32
    %1 = arith.extui %0 : i1 to i32
    %c0_i32_0 = arith.constant 0 : i32
    %2 = arith.cmpi ne, %1, %c0_i32_0 : i32
    scf.if %2 {
      %cst_27 = arith.constant 0.000000e+00 : f32
      %41 = vector.broadcast %cst_27 : f32 to vector<8x32xf32>
      %c0_28 = arith.constant 0 : index
      %c0_29 = arith.constant 0 : index
      %42 = vector.load %arg12[%c0_28, %c0_29] : memref<8x32xf32, #tpu.memory_space<vmem>>, vector<8x32xf32>
      tpu.vector_store %arg12[%c0_28, %c0_29], %41 {strides = array<i32>} : memref<8x32xf32, #tpu.memory_space<vmem>>, vector<8x32xf32>,
      %cst_30 = arith.constant 0.000000e+00 : f32
      %43 = vector.broadcast %cst_30 : f32 to vector<8x1xf32>
      %c0_31 = arith.constant 0 : index
      %c0_32 = arith.constant 0 : index
      %44 = vector.load %arg13[%c0_31, %c0_32] : memref<8x1xf32, #tpu.memory_space<vmem>>, vector<8x1xf32>
      tpu.vector_store %arg13[%c0_31, %c0_32], %43 {strides = array<i32>} : memref<8x1xf32, #tpu.memory_space<vmem>>, vector<8x1xf32>,
    } else {
    }
    %c0 = arith.constant 0 : index
    %c0_1 = arith.constant 0 : index
    %3 = vector.load %arg2[%c0, %c0_1] : memref<2048x16xbf16, #tpu.memory_space<vmem>>, vector<2048x16xbf16>
    %c0_2 = arith.constant 0 : index
    %c0_3 = arith.constant 0 : index
    %4 = vector.load %arg5[%c0_2, %c0_3] : memref<16x32xbf16, #tpu.memory_space<vmem>>, vector<16x32xbf16>
    %cst = arith.constant dense<0.000000e+00> : vector<2048x32xf32>
    %5 = tpu.matmul %3, %4, %cst {dimension_numbers = #tpu.dot_dimension_numbers<[1], [0], [0], [1], [0, 0, 1, 1], [], []>} : vector<2048x16xbf16>, vector<16x32xbf16>, vector<2048x32xf32> -> vector<2048x32xf32>
    %c0_4 = arith.constant 0 : index
    %c0_5 = arith.constant 0 : index
    %6 = vector.load %arg6[%c0_4, %c0_5] : memref<1x32xf32, #tpu.memory_space<vmem>>, vector<1x32xf32>
    %7 = vector.broadcast %6 : vector<1x32xf32> to vector<2048x32xf32>
    %8 = arith.addf %5, %7 : vector<2048x32xf32>
    %cst_6 = arith.constant 0.000000e+00 : f32
    %9 = vector.broadcast %cst_6 : f32 to vector<2048x32xf32>
    %10 = arith.maximumf %8, %9 : vector<2048x32xf32>
    %11 = arith.truncf %10 : vector<2048x32xf32> to vector<2048x32xbf16>
    %c0_7 = arith.constant 0 : index
    %c0_8 = arith.constant 0 : index
    %12 = vector.load %arg7[%c0_7, %c0_8] : memref<32x32xbf16, #tpu.memory_space<vmem>>, vector<32x32xbf16>
    %cst_9 = arith.constant dense<0.000000e+00> : vector<2048x32xf32>
    %13 = tpu.matmul %11, %12, %cst_9 {dimension_numbers = #tpu.dot_dimension_numbers<[1], [0], [0], [1], [0, 0, 1, 1], [], []>} : vector<2048x32xbf16>, vector<32x32xbf16>, vector<2048x32xf32> -> vector<2048x32xf32>
    %c0_10 = arith.constant 0 : index
    %c0_11 = arith.constant 0 : index
    %14 = vector.load %arg8[%c0_10, %c0_11] : memref<1x32xf32, #tpu.memory_space<vmem>>, vector<1x32xf32>
    %15 = vector.broadcast %14 : vector<1x32xf32> to vector<2048x32xf32>
    %16 = arith.addf %13, %15 : vector<2048x32xf32>
    %cst_12 = arith.constant 0.000000e+00 : f32
    %17 = vector.broadcast %cst_12 : f32 to vector<2048x32xf32>
    %18 = arith.maximumf %16, %17 : vector<2048x32xf32>
    %19 = tpu.iota {dimensions = array<i32: 0>} : vector<8x2048xi32>
    %c0_13 = arith.constant 0 : index
    %c0_14 = arith.constant 0 : index
    %20 = vector.load %arg3[%c0_13, %c0_14] : memref<1x2048xi32, #tpu.memory_space<vmem>>, vector<1x2048xi32>
    %21 = vector.broadcast %20 : vector<1x2048xi32> to vector<8x2048xi32>
    %22 = arith.cmpi eq, %19, %21 : vector<8x2048xi32>
    %23 = arith.extui %22 : vector<8x2048xi1> to vector<8x2048xi32>
    %24 = arith.sitofp %23 : vector<8x2048xi32> to vector<8x2048xf32>
    %25 = arith.truncf %24 : vector<8x2048xf32> to vector<8x2048xbf16>
    %c0_15 = arith.constant 0 : index
    %c0_16 = arith.constant 0 : index
    %26 = vector.load %arg12[%c0_15, %c0_16] : memref<8x32xf32, #tpu.memory_space<vmem>>, vector<8x32xf32>
    %27 = arith.truncf %18 : vector<2048x32xf32> to vector<2048x32xbf16>
    %cst_17 = arith.constant dense<0.000000e+00> : vector<8x32xf32>
    %28 = tpu.matmul %25, %27, %cst_17 {dimension_numbers = #tpu.dot_dimension_numbers<[1], [0], [0], [1], [0, 0, 1, 1], [], []>} : vector<8x2048xbf16>, vector<2048x32xbf16>, vector<8x32xf32> -> vector<8x32xf32>
    %29 = arith.addf %26, %28 : vector<8x32xf32>
    %c0_18 = arith.constant 0 : index
    %c0_19 = arith.constant 0 : index
    %30 = vector.load %arg12[%c0_18, %c0_19] : memref<8x32xf32, #tpu.memory_space<vmem>>, vector<8x32xf32>
    tpu.vector_store %arg12[%c0_18, %c0_19], %29 {strides = array<i32>} : memref<8x32xf32, #tpu.memory_space<vmem>>, vector<8x32xf32>,
    %c0_20 = arith.constant 0 : index
    %c0_21 = arith.constant 0 : index
    %31 = vector.load %arg13[%c0_20, %c0_21] : memref<8x1xf32, #tpu.memory_space<vmem>>, vector<8x1xf32>
    %32 = arith.extui %22 : vector<8x2048xi1> to vector<8x2048xi32>
    %33 = arith.sitofp %32 : vector<8x2048xi32> to vector<8x2048xf32>
    %cst_22 = arith.constant dense<0.000000e+00> : vector<8xf32>
    %34 = vector.multi_reduction <add>, %33, %cst_22 [1] : vector<8x2048xf32> to vector<8xf32>
    %35 = vector.shape_cast %34 : vector<8xf32> to vector<8x1xf32>
    %36 = arith.addf %31, %35 : vector<8x1xf32>
    %c0_23 = arith.constant 0 : index
    %c0_24 = arith.constant 0 : index
    %37 = vector.load %arg13[%c0_23, %c0_24] : memref<8x1xf32, #tpu.memory_space<vmem>>, vector<8x1xf32>
    tpu.vector_store %arg13[%c0_23, %c0_24], %36 {strides = array<i32>} : memref<8x1xf32, #tpu.memory_space<vmem>>, vector<8x1xf32>,
    %c0_i32_25 = arith.constant 0 : i32
    %38 = arith.cmpi eq, %arg1, %c0_i32_25 : i32
    %39 = arith.extui %38 : i1 to i32
    %c0_i32_26 = arith.constant 0 : i32
    %40 = arith.cmpi ne, %39, %c0_i32_26 : i32
    scf.if %40 {
      %c0_27 = arith.constant 0 : index
      %c0_28 = arith.constant 0 : index
      %41 = vector.load %arg12[%c0_27, %c0_28] : memref<8x32xf32, #tpu.memory_space<vmem>>, vector<8x32xf32>
      %c0_29 = arith.constant 0 : index
      %c0_30 = arith.constant 0 : index
      %42 = vector.load %arg9[%c0_29, %c0_30] : memref<32x128xf32, #tpu.memory_space<vmem>>, vector<32x128xf32>
      %cst_31 = arith.constant dense<0.000000e+00> : vector<8x128xf32>
      %43 = tpu.matmul %41, %42, %cst_31 {dimension_numbers = #tpu.dot_dimension_numbers<[1], [0], [0], [1], [0, 0, 1, 1], [], []>} : vector<8x32xf32>, vector<32x128xf32>, vector<8x128xf32> -> vector<8x128xf32>
      %c0_32 = arith.constant 0 : index
      %c0_33 = arith.constant 0 : index
      %44 = vector.load %arg4[%c0_32, %c0_33] : memref<8x1xf32, #tpu.memory_space<vmem>>, vector<8x1xf32>
      %c0_34 = arith.constant 0 : index
      %c0_35 = arith.constant 0 : index
      %45 = vector.load %arg13[%c0_34, %c0_35] : memref<8x1xf32, #tpu.memory_space<vmem>>, vector<8x1xf32>
      %c0_36 = arith.constant 0 : index
      %c0_37 = arith.constant 0 : index
      %46 = vector.load %arg10[%c0_36, %c0_37] : memref<1x128xf32, #tpu.memory_space<vmem>>, vector<1x128xf32>
      %47 = vector.broadcast %45 : vector<8x1xf32> to vector<8x128xf32>
      %48 = vector.broadcast %46 : vector<1x128xf32> to vector<8x128xf32>
      %49 = arith.mulf %47, %48 : vector<8x128xf32>
      %50 = arith.addf %43, %49 : vector<8x128xf32>
      %51 = vector.broadcast %44 : vector<8x1xf32> to vector<8x128xf32>
      %52 = arith.mulf %51, %50 : vector<8x128xf32>
      %c0_38 = arith.constant 0 : index
      %c0_39 = arith.constant 0 : index
      %c0_40 = arith.constant 0 : index
      %53 = vector.load %arg11[%c0_38, %c0_39, %c0_40] : memref<1x8x128xf32, #tpu.memory_space<vmem>>, vector<1x8x128xf32>
      %54 = vector.shape_cast %53 : vector<1x8x128xf32> to vector<8x128xf32>
      %55 = vector.shape_cast %52 : vector<8x128xf32> to vector<1x8x128xf32>
      tpu.vector_store %arg11[%c0_38, %c0_39, %c0_40], %55 {strides = array<i32>} : memref<1x8x128xf32, #tpu.memory_space<vmem>>, vector<1x8x128xf32>,
    } else {
    }
    return
  }
  func.func @transform_0(%arg0: i32, %arg1: i32) -> (i32, i32) {
    %c1_i32 = arith.constant 1 : i32
    %0 = arith.muli %arg0, %c1_i32 : i32
    %1 = arith.addi %0, %arg1 : i32
    %c0_i32 = arith.constant 0 : i32
    %c0_i32_0 = arith.constant 0 : i32
    return %1, %c0_i32 : i32, i32
  }
  func.func @transform_1(%arg0: i32, %arg1: i32) -> (i32, i32) {
    %c1_i32 = arith.constant 1 : i32
    %0 = arith.muli %arg0, %c1_i32 : i32
    %1 = arith.addi %0, %arg1 : i32
    %c0_i32 = arith.constant 0 : i32
    %c0_i32_0 = arith.constant 0 : i32
    return %c0_i32, %1 : i32, i32
  }
  func.func @transform_2(%arg0: i32, %arg1: i32) -> (i32, i32) {
    %c0_i32 = arith.constant 0 : i32
    %c0_i32_0 = arith.constant 0 : i32
    %c0_i32_1 = arith.constant 0 : i32
    return %c0_i32, %c0_i32_0 : i32, i32
  }
  func.func @transform_3(%arg0: i32, %arg1: i32) -> (i32, i32) {
    %c0_i32 = arith.constant 0 : i32
    %c0_i32_0 = arith.constant 0 : i32
    %c0_i32_1 = arith.constant 0 : i32
    return %c0_i32, %c0_i32_0 : i32, i32
  }
  func.func @transform_4(%arg0: i32, %arg1: i32) -> (i32, i32) {
    %c0_i32 = arith.constant 0 : i32
    %c0_i32_0 = arith.constant 0 : i32
    %c0_i32_1 = arith.constant 0 : i32
    return %c0_i32, %c0_i32_0 : i32, i32
  }
  func.func @transform_5(%arg0: i32, %arg1: i32) -> (i32, i32) {
    %c0_i32 = arith.constant 0 : i32
    %c0_i32_0 = arith.constant 0 : i32
    %c0_i32_1 = arith.constant 0 : i32
    return %c0_i32, %c0_i32_0 : i32, i32
  }
  func.func @transform_6(%arg0: i32, %arg1: i32) -> (i32, i32) {
    %c0_i32 = arith.constant 0 : i32
    %c0_i32_0 = arith.constant 0 : i32
    %c0_i32_1 = arith.constant 0 : i32
    return %c0_i32, %c0_i32_0 : i32, i32
  }
  func.func @transform_7(%arg0: i32, %arg1: i32) -> (i32, i32) {
    %c0_i32 = arith.constant 0 : i32
    %c0_i32_0 = arith.constant 0 : i32
    %c0_i32_1 = arith.constant 0 : i32
    return %c0_i32, %c0_i32_0 : i32, i32
  }
  func.func @transform_8(%arg0: i32, %arg1: i32) -> (i32, i32) {
    %c0_i32 = arith.constant 0 : i32
    %c0_i32_0 = arith.constant 0 : i32
    %c0_i32_1 = arith.constant 0 : i32
    return %c0_i32, %c0_i32_0 : i32, i32
  }
  func.func @transform_9(%arg0: i32, %arg1: i32) -> (i32, i32, i32) {
    %c0_i32 = arith.constant 0 : i32
    %c0_i32_0 = arith.constant 0 : i32
    %c0_i32_1 = arith.constant 0 : i32
    return %arg0, %c0_i32, %c0_i32_0 : i32, i32, i32
  }
}

</mosaic_0001>

<llo_original>
// kernel: _pallas_mlp_encode.1
$region0: #{_pallas_mlp_encode.1}
  #allocation0 [shape = 'u32[]', space=smem, size = 0x4, offset = 0x4, fixed_abs, tag = 'smem constant byte address 0x4 - core index']
  #allocation1 [shape = 'u32[144,128]{1,0:T(1,128)}', space=vmem, size = 0x12000, scoped, tag = 'internal scratch']
  #allocation2 [shape = 'f32[8,32]{1,0:T(8,128)}', space=vmem, size = 0x1000, scoped, tag = 'scratch operand']
  #allocation3 [shape = 'f32[8,1]{1,0:T(8,128)}', space=vmem, size = 0x1000, scoped, tag = 'scratch operand']
  %s0 = inlined_call_operand.vmem [shape: bf16[2048,16], index: 0, kind: input, shape index: {}]
  %s1 = inlined_call_operand.vmem [shape: s32[1,2048], index: 1, kind: input, shape index: {}]
  %s2 = inlined_call_operand.vmem [shape: f32[8,1], index: 2, kind: input, shape index: {}]
  %s3 = inlined_call_operand.vmem [shape: bf16[16,32], index: 3, kind: input, shape index: {}]
  %s4 = inlined_call_operand.vmem [shape: f32[1,32], index: 4, kind: input, shape index: {}]
  %s5 = inlined_call_operand.vmem [shape: bf16[32,32], index: 5, kind: input, shape index: {}]
  %s6 = inlined_call_operand.vmem [shape: f32[1,32], index: 6, kind: input, shape index: {}]
  %s7 = inlined_call_operand.vmem [shape: f32[32,128], index: 7, kind: input, shape index: {}]
  %s8 = inlined_call_operand.vmem [shape: f32[1,128], index: 8, kind: input, shape index: {}]
  %s9 = inlined_call_operand.hbm [shape: f32[1,8,128], index: 9, kind: output, shape index: {}]
  %s10 = sld [smem:[#allocation0]]
  $region54: #{_pallas_mlp_encode.1} parent=0
    _
  %s12 = ssub.s32 1, %s10
  %s13 = scalar_select 0, %s12, %s10
  $region1: #{_pallas_mlp_encode.1} parent=0
    #allocation4 [shape = 'u8[4096]{0}', space=vmem, size = 0x1000, scoped, tag = 'output window, operand 0, single buffered']
    #allocation5 [shape = 's32[1]{0}', space=sflag, size = 0x4, scoped, tag = 'scoped memory for _pallas_mlp_encode.1']
    %14 = vsyncpa [#allocation5], 0
    // Predicated region
    $region2: #{_pallas_mlp_encode.1} parent=1 // pred_check
      _
    $region3: #{_pallas_mlp_encode.1} parent=1 // pred_check_branch
      %16 = sbr.rel (0) target = $region5
    $region4: #{_pallas_mlp_encode.1} parent=1 // pred_region
      %s17 = sadd.s32 0, 0
      %s18 = smul.u32 256, %s17
      %p19 = scmp.lt.s32.totalorder %s18, 255
      %s20 = scalar_select %p19, %s18, 255
      %s21 = smul.addr %s20, 4
      %s22 = scalar_lea.vmem %s0, %s21
      %s23 = sadd.s32 0, 0
      %s24 = smul.u32 256, %s23
    $region5: #{_pallas_mlp_encode.1} parent=1 // pred_fallthru
      _
    // Predicated region
    $region6: #{_pallas_mlp_encode.1} parent=1 // pred_check
      _
    $region7: #{_pallas_mlp_encode.1} parent=1 // pred_check_branch
      %26 = sbr.rel (0) target = $region9
    $region8: #{_pallas_mlp_encode.1} parent=1 // pred_region
      %s27 = sadd.s32 0, 0
      %s28 = smul.u32 16, %s27
      %p29 = scmp.lt.s32.totalorder %s28, 15
      %s30 = scalar_select %p29, %s28, 15
      %s31 = scalar_lea.vmem %s1, %s30
      %s32 = sadd.s32 0, 0
      %s33 = smul.u32 16, %s32
    $region9: #{_pallas_mlp_encode.1} parent=1 // pred_fallthru
      _
    // Predicated region
    $region10: #{_pallas_mlp_encode.1} parent=1 // pred_check
      _
    $region11: #{_pallas_mlp_encode.1} parent=1 // pred_check_branch
      %35 = sbr.rel (0) target = $region13
    $region12: #{_pallas_mlp_encode.1} parent=1 // pred_region
      _
    $region13: #{_pallas_mlp_encode.1} parent=1 // pred_fallthru
      _
    // Predicated region
    $region14: #{_pallas_mlp_encode.1} parent=1 // pred_check
      _
    $region15: #{_pallas_mlp_encode.1} parent=1 // pred_check_branch
      %37 = sbr.rel (0) target = $region17
    $region16: #{_pallas_mlp_encode.1} parent=1 // pred_region
      _
    $region17: #{_pallas_mlp_encode.1} parent=1 // pred_fallthru
      _
    // Predicated region
    $region18: #{_pallas_mlp_encode.1} parent=1 // pred_check
      _
    $region19: #{_pallas_mlp_encode.1} parent=1 // pred_check_branch
      %39 = sbr.rel (0) target = $region21
    $region20: #{_pallas_mlp_encode.1} parent=1 // pred_region
      _
    $region21: #{_pallas_mlp_encode.1} parent=1 // pred_fallthru
      _
    // Predicated region
    $region22: #{_pallas_mlp_encode.1} parent=1 // pred_check
      _
    $region23: #{_pallas_mlp_encode.1} parent=1 // pred_check_branch
      %41 = sbr.rel (0) target = $region25
    $region24: #{_pallas_mlp_encode.1} parent=1 // pred_region
      _
    $region25: #{_pallas_mlp_encode.1} parent=1 // pred_fallthru
      _
    // Predicated region
    $region26: #{_pallas_mlp_encode.1} parent=1 // pred_check
      _
    $region27: #{_pallas_mlp_encode.1} parent=1 // pred_check_branch
      %43 = sbr.rel (0) target = $region29
    $region28: #{_pallas_mlp_encode.1} parent=1 // pred_region
      _
    $region29: #{_pallas_mlp_encode.1} parent=1 // pred_fallthru
      _
    // Predicated region
    $region30: #{_pallas_mlp_encode.1} parent=1 // pred_check
      _
    $region31: #{_pallas_mlp_encode.1} parent=1 // pred_check_branch
      %45 = sbr.rel (0) target = $region33
    $region32: #{_pallas_mlp_encode.1} parent=1 // pred_region
      _
    $region33: #{_pallas_mlp_encode.1} parent=1 // pred_fallthru
      _
    // Predicated region
    $region34: #{_pallas_mlp_encode.1} parent=1 // pred_check
      _
    $region35: #{_pallas_mlp_encode.1} parent=1 // pred_check_branch
      %47 = sbr.rel (0) target = $region37
    $region36: #{_pallas_mlp_encode.1} parent=1 // pred_region
      _
    $region37: #{_pallas_mlp_encode.1} parent=1 // pred_fallthru
      _
    %s48 = sadd.s32 0, 0
    %s49 = smul.u32 256, %s48
    %p50 = scmp.lt.s32.totalorder %s49, 255
    %s51 = scalar_select %p50, %s49, 255
    %s52 = smul.addr %s51, 4
    %s53 = scalar_lea.vmem %s0, %s52
    %s54 = sadd.s32 0, 0
    %s55 = smul.u32 16, %s54
    %p56 = scmp.lt.s32.totalorder %s55, 15
    %s57 = scalar_select %p56, %s55, 15
    %s58 = scalar_lea.vmem %s1, %s57
    %s59 = sadd.s32 0, 0
    %s60 = smul.u32 256, %s59
    %p61 = scmp.lt.s32.totalorder %s60, 255
    %s62 = scalar_select %p61, %s60, 255
    %s63 = smul.addr %s62, 4
    %s64 = scalar_lea.vmem %s0, %s63
    %s65 = sadd.s32 0, 0
    %s66 = smul.u32 256, %s65
    %s67 = sadd.s32 0, 0
    %s68 = smul.u32 16, %s67
    %p69 = scmp.lt.s32.totalorder %s68, 15
    %s70 = scalar_select %p69, %s68, 15
    %s71 = scalar_lea.vmem %s1, %s70
    %s72 = sadd.s32 0, 0
    %s73 = smul.u32 16, %s72
    %p75 = scmp.eq.s32.totalorder 0, 0
    // Predicated region
    $region38: #{_pallas_mlp_encode.1} parent=1 // pred_check
      %p76 = pneg %p75
    $region39: #{_pallas_mlp_encode.1} parent=1 // pred_check_branch
      %78 = sbr.rel (%p76) target = $region41
    $region40: #{_pallas_mlp_encode.1} parent=1 // pred_region
      %vm79 = vcmask 261120
      %80 = vst.msk [vmem:[#allocation2] sm:$0xff] %vm79, 0.0
      %vm81 = vcmask 7168
      %82 = vst.msk [vmem:[#allocation3] sm:$0xff] %vm81, 0.0
    $region41: #{_pallas_mlp_encode.1} parent=1 // pred_fallthru
      _
    %v83 = vld [vmem:[%s64] sm:$0xf]
    %v84 = vld [vmem:[%s64 + $0x4] sm:$0xf]
    %v85 = vld [vmem:[%s64 + $0x8] sm:$0xf]
    %v86 = vld [vmem:[%s64 + $0xc] sm:$0xf]
    %v87 = vld [vmem:[%s64 + $0x10] sm:$0xf]
    %v88 = vld [vmem:[%s64 + $0x14] sm:$0xf]
    %v89 = vld [vmem:[%s64 + $0x18] sm:$0xf]
    %v90 = vld [vmem:[%s64 + $0x1c] sm:$0xf]
    %v91 = vld [vmem:[%s64 + $0x20] sm:$0xf]
    %v92 = vld [vmem:[%s64 + $0x24] sm:$0xf]
    %v93 = vld [vmem:[%s64 + $0x28] sm:$0xf]
    %v94 = vld [vmem:[%s64 + $0x2c] sm:$0xf]
    %v95 = vld [vmem:[%s64 + $0x30] sm:$0xf]
    %v96 = vld [vmem:[%s64 + $0x34] sm:$0xf]
    %v97 = vld [vmem:[%s64 + $0x38] sm:$0xf]
    %v98 = vld [vmem:[%s64 + $0x3c] sm:$0xf]
    %v99 = vld [vmem:[%s64 + $0x40] sm:$0xf]
    %v100 = vld [vmem:[%s64 + $0x44] sm:$0xf]
    %v101 = vld [vmem:[%s64 + $0x48] sm:$0xf]
    %v102 = vld [vmem:[%s64 + $0x4c] sm:$0xf]
    %v103 = vld [vmem:[%s64 + $0x50] sm:$0xf]
    %v104 = vld [vmem:[%s64 + $0x54] sm:$0xf]
    %v105 = vld [vmem:[%s64 + $0x58] sm:$0xf]
    %v106 = vld [vmem:[%s64 + $0x5c] sm:$0xf]
    %v107 = vld [vmem:[%s64 + $0x60] sm:$0xf]
    %v108 = vld [vmem:[%s64 + $0x64] sm:$0xf]
    %v109 = vld [vmem:[%s64 + $0x68] sm:$0xf]
    %v110 = vld [vmem:[%s64 + $0x6c] sm:$0xf]
    %v111 = vld [vmem:[%s64 + $0x70] sm:$0xf]
    %v112 = vld [vmem:[%s64 + $0x74] sm:$0xf]
    %v113 = vld [vmem:[%s64 + $0x78] sm:$0xf]
    %v114 = vld [vmem:[%s64 + $0x7c] sm:$0xf]
    %v115 = vld [vmem:[%s64 + $0x80] sm:$0xf]
    %v116 = vld [vmem:[%s64 + $0x84] sm:$0xf]
    %v117 = vld [vmem:[%s64 + $0x88] sm:$0xf]
    %v118 = vld [vmem:[%s64 + $0x8c] sm:$0xf]
    %v119 = vld [vmem:[%s64 + $0x90] sm:$0xf]
    %v120 = vld [vmem:[%s64 + $0x94] sm:$0xf]
    %v121 = vld [vmem:[%s64 + $0x98] sm:$0xf]
    %v122 = vld [vmem:[%s64 + $0x9c] sm:$0xf]
    %v123 = vld [vmem:[%s64 + $0xa0] sm:$0xf]
    %v124 = vld [vmem:[%s64 + $0xa4] sm:$0xf]
    %v125 = vld [vmem:[%s64 + $0xa8] sm:$0xf]
    %v126 = vld [vmem:[%s64 + $0xac] sm:$0xf]
    %v127 = vld [vmem:[%s64 + $0xb0] sm:$0xf]
    %v128 = vld [vmem:[%s64 + $0xb4] sm:$0xf]
    %v129 = vld [vmem:[%s64 + $0xb8] sm:$0xf]
    %v130 = vld [vmem:[%s64 + $0xbc] sm:$0xf]
    %v131 = vld [vmem:[%s64 + $0xc0] sm:$0xf]
    %v132 = vld [vmem:[%s64 + $0xc4] sm:$0xf]
    %v133 = vld [vmem:[%s64 + $0xc8] sm:$0xf]
    %v134 = vld [vmem:[%s64 + $0xcc] sm:$0xf]
    %v135 = vld [vmem:[%s64 + $0xd0] sm:$0xf]
    %v136 = vld [vmem:[%s64 + $0xd4] sm:$0xf]
    %v137 = vld [vmem:[%s64 + $0xd8] sm:$0xf]
    %v138 = vld [vmem:[%s64 + $0xdc] sm:$0xf]
    %v139 = vld [vmem:[%s64 + $0xe0] sm:$0xf]
    %v140 = vld [vmem:[%s64 + $0xe4] sm:$0xf]
    %v141 = vld [vmem:[%s64 + $0xe8] sm:$0xf]
    %v142 = vld [vmem:[%s64 + $0xec] sm:$0xf]
    %v143 = vld [vmem:[%s64 + $0xf0] sm:$0xf]
    %v144 = vld [vmem:[%s64 + $0xf4] sm:$0xf]
    %v145 = vld [vmem:[%s64 + $0xf8] sm:$0xf]
    %v146 = vld [vmem:[%s64 + $0xfc] sm:$0xf]
    %v147 = vld [vmem:[%s64 + $0x100] sm:$0xf]
    %v148 = vld [vmem:[%s64 + $0x104] sm:$0xf]
    %v149 = vld [vmem:[%s64 + $0x108] sm:$0xf]
    %v150 = vld [vmem:[%s64 + $0x10c] sm:$0xf]
    %v151 = vld [vmem:[%s64 + $0x110] sm:$0xf]
    %v152 = vld [vmem:[%s64 + $0x114] sm:$0xf]
    %v153 = vld [vmem:[%s64 + $0x118] sm:$0xf]
    %v154 = vld [vmem:[%s64 + $0x11c] sm:$0xf]
    %v155 = vld [vmem:[%s64 + $0x120] sm:$0xf]
    %v156 = vld [vmem:[%s64 + $0x124] sm:$0xf]
    %v157 = vld [vmem:[%s64 + $0x128] sm:$0xf]
    %v158 = vld [vmem:[%s64 + $0x12c] sm:$0xf]
    %v159 = vld [vmem:[%s64 + $0x130] sm:$0xf]
    %v160 = vld [vmem:[%s64 + $0x134] sm:$0xf]
    %v161 = vld [vmem:[%s64 + $0x138] sm:$0xf]
    %v162 = vld [vmem:[%s64 + $0x13c] sm:$0xf]
    %v163 = vld [vmem:[%s64 + $0x140] sm:$0xf]
    %v164 = vld [vmem:[%s64 + $0x144] sm:$0xf]
    %v165 = vld [vmem:[%s64 + $0x148] sm:$0xf]
    %v166 = vld [vmem:[%s64 + $0x14c] sm:$0xf]
    %v167 = vld [vmem:[%s64 + $0x150] sm:$0xf]
    %v168 = vld [vmem:[%s64 + $0x154] sm:$0xf]
    %v169 = vld [vmem:[%s64 + $0x158] sm:$0xf]
    %v170 = vld [vmem:[%s64 + $0x15c] sm:$0xf]
    %v171 = vld [vmem:[%s64 + $0x160] sm:$0xf]
    %v172 = vld [vmem:[%s64 + $0x164] sm:$0xf]
    %v173 = vld [vmem:[%s64 + $0x168] sm:$0xf]
    %v174 = vld [vmem:[%s64 + $0x16c] sm:$0xf]
    %v175 = vld [vmem:[%s64 + $0x170] sm:$0xf]
    %v176 = vld [vmem:[%s64 + $0x174] sm:$0xf]
    %v177 = vld [vmem:[%s64 + $0x178] sm:$0xf]
    %v178 = vld [vmem:[%s64 + $0x17c] sm:$0xf]
    %v179 = vld [vmem:[%s64 + $0x180] sm:$0xf]
    %v180 = vld [vmem:[%s64 + $0x184] sm:$0xf]
    %v181 = vld [vmem:[%s64 + $0x188] sm:$0xf]
    %v182 = vld [vmem:[%s64 + $0x18c] sm:$0xf]
    %v183 = vld [vmem:[%s64 + $0x190] sm:$0xf]
    %v184 = vld [vmem:[%s64 + $0x194] sm:$0xf]
    %v185 = vld [vmem:[%s64 + $0x198] sm:$0xf]
    %v186 = vld [vmem:[%s64 + $0x19c] sm:$0xf]
    %v187 = vld [vmem:[%s64 + $0x1a0] sm:$0xf]
    %v188 = vld [vmem:[%s64 + $0x1a4] sm:$0xf]
    %v189 = vld [vmem:[%s64 + $0x1a8] sm:$0xf]
    %v190 = vld [vmem:[%s64 + $0x1ac] sm:$0xf]
    %v191 = vld [vmem:[%s64 + $0x1b0] sm:$0xf]
    %v192 = vld [vmem:[%s64 + $0x1b4] sm:$0xf]
    %v193 = vld [vmem:[%s64 + $0x1b8] sm:$0xf]
    %v194 = vld [vmem:[%s64 + $0x1bc] sm:$0xf]
    %v195 = vld [vmem:[%s64 + $0x1c0] sm:$0xf]
    %v196 = vld [vmem:[%s64 + $0x1c4] sm:$0xf]
    %v197 = vld [vmem:[%s64 + $0x1c8] sm:$0xf]
    %v198 = vld [vmem:[%s64 + $0x1cc] sm:$0xf]
    %v199 = vld [vmem:[%s64 + $0x1d0] sm:$0xf]
    %v200 = vld [vmem:[%s64 + $0x1d4] sm:$0xf]
    %v201 = vld [vmem:[%s64 + $0x1d8] sm:$0xf]
    %v202 = vld [vmem:[%s64 + $0x1dc] sm:$0xf]
    %v203 = vld [vmem:[%s64 + $0x1e0] sm:$0xf]
    %v204 = vld [vmem:[%s64 + $0x1e4] sm:$0xf]
    %v205 = vld [vmem:[%s64 + $0x1e8] sm:$0xf]
    %v206 = vld [vmem:[%s64 + $0x1ec] sm:$0xf]
    %v207 = vld [vmem:[%s64 + $0x1f0] sm:$0xf]
    %v208 = vld [vmem:[%s64 + $0x1f4] sm:$0xf]
    %v209 = vld [vmem:[%s64 + $0x1f8] sm:$0xf]
    %v210 = vld [vmem:[%s64 + $0x1fc] sm:$0xf]
    %v211 = vld [vmem:[%s64 + $0x200] sm:$0xf]
    %v212 = vld [vmem:[%s64 + $0x204] sm:$0xf]
    %v213 = vld [vmem:[%s64 + $0x208] sm:$0xf]
    %v214 = vld [vmem:[%s64 + $0x20c] sm:$0xf]
    %v215 = vld [vmem:[%s64 + $0x210] sm:$0xf]
    %v216 = vld [vmem:[%s64 + $0x214] sm:$0xf]
    %v217 = vld [vmem:[%s64 + $0x218] sm:$0xf]
    %v218 = vld [vmem:[%s64 + $0x21c] sm:$0xf]
    %v219 = vld [vmem:[%s64 + $0x220] sm:$0xf]
    %v220 = vld [vmem:[%s64 + $0x224] sm:$0xf]
    %v221 = vld [vmem:[%s64 + $0x228] sm:$0xf]
    %v222 = vld [vmem:[%s64 + $0x22c] sm:$0xf]
    %v223 = vld [vmem:[%s64 + $0x230] sm:$0xf]
    %v224 = vld [vmem:[%s64 + $0x234] sm:$0xf]
    %v225 = vld [vmem:[%s64 + $0x238] sm:$0xf]
    %v226 = vld [vmem:[%s64 + $0x23c] sm:$0xf]
    %v227 = vld [vmem:[%s64 + $0x240] sm:$0xf]
    %v228 = vld [vmem:[%s64 + $0x244] sm:$0xf]
    %v229 = vld [vmem:[%s64 + $0x248] sm:$0xf]
    %v230 = vld [vmem:[%s64 + $0x24c] sm:$0xf]
    %v231 = vld [vmem:[%s64 + $0x250] sm:$0xf]
    %v232 = vld [vmem:[%s64 + $0x254] sm:$0xf]
    %v233 = vld [vmem:[%s64 + $0x258] sm:$0xf]
    %v234 = vld [vmem:[%s64 + $0x25c] sm:$0xf]
    %v235 = vld [vmem:[%s64 + $0x260] sm:$0xf]
    %v236 = vld [vmem:[%s64 + $0x264] sm:$0xf]
    %v237 = vld [vmem:[%s64 + $0x268] sm:$0xf]
    %v238 = vld [vmem:[%s64 + $0x26c] sm:$0xf]
    %v239 = vld [vmem:[%s64 + $0x270] sm:$0xf]
    %v240 = vld [vmem:[%s64 + $0x274] sm:$0xf]
    %v241 = vld [vmem:[%s64 + $0x278] sm:$0xf]
    %v242 = vld [vmem:[%s64 + $0x27c] sm:$0xf]
    %v243 = vld [vmem:[%s64 + $0x280] sm:$0xf]
    %v244 = vld [vmem:[%s64 + $0x284] sm:$0xf]
    %v245 = vld [vmem:[%s64 + $0x288] sm:$0xf]
    %v246 = vld [vmem:[%s64 + $0x28c] sm:$0xf]
    %v247 = vld [vmem:[%s64 + $0x290] sm:$0xf]
    %v248 = vld [vmem:[%s64 + $0x294] sm:$0xf]
    %v249 = vld [vmem:[%s64 + $0x298] sm:$0xf]
    %v250 = vld [vmem:[%s64 + $0x29c] sm:$0xf]
    %v251 = vld [vmem:[%s64 + $0x2a0] sm:$0xf]
    %v252 = vld [vmem:[%s64 + $0x2a4] sm:$0xf]
    %v253 = vld [vmem:[%s64 + $0x2a8] sm:$0xf]
    %v254 = vld [vmem:[%s64 + $0x2ac] sm:$0xf]
    %v255 = vld [vmem:[%s64 + $0x2b0] sm:$0xf]
    %v256 = vld [vmem:[%s64 + $0x2b4] sm:$0xf]
    %v257 = vld [vmem:[%s64 + $0x2b8] sm:$0xf]
    %v258 = vld [vmem:[%s64 + $0x2bc] sm:$0xf]
    %v259 = vld [vmem:[%s64 + $0x2c0] sm:$0xf]
    %v260 = vld [vmem:[%s64 + $0x2c4] sm:$0xf]
    %v261 = vld [vmem:[%s64 + $0x2c8] sm:$0xf]
    %v262 = vld [vmem:[%s64 + $0x2cc] sm:$0xf]
    %v263 = vld [vmem:[%s64 + $0x2d0] sm:$0xf]
    %v264 = vld [vmem:[%s64 + $0x2d4] sm:$0xf]
    %v265 = vld [vmem:[%s64 + $0x2d8] sm:$0xf]
    %v266 = vld [vmem:[%s64 + $0x2dc] sm:$0xf]
    %v267 = vld [vmem:[%s64 + $0x2e0] sm:$0xf]
    %v268 = vld [vmem:[%s64 + $0x2e4] sm:$0xf]
    %v269 = vld [vmem:[%s64 + $0x2e8] sm:$0xf]
    %v270 = vld [vmem:[%s64 + $0x2ec] sm:$0xf]
    %v271 = vld [vmem:[%s64 + $0x2f0] sm:$0xf]
    %v272 = vld [vmem:[%s64 + $0x2f4] sm:$0xf]
    %v273 = vld [vmem:[%s64 + $0x2f8] sm:$0xf]
    %v274 = vld [vmem:[%s64 + $0x2fc] sm:$0xf]
    %v275 = vld [vmem:[%s64 + $0x300] sm:$0xf]
    %v276 = vld [vmem:[%s64 + $0x304] sm:$0xf]
    %v277 = vld [vmem:[%s64 + $0x308] sm:$0xf]
    %v278 = vld [vmem:[%s64 + $0x30c] sm:$0xf]
    %v279 = vld [vmem:[%s64 + $0x310] sm:$0xf]
    %v280 = vld [vmem:[%s64 + $0x314] sm:$0xf]
    %v281 = vld [vmem:[%s64 + $0x318] sm:$0xf]
    %v282 = vld [vmem:[%s64 + $0x31c] sm:$0xf]
    %v283 = vld [vmem:[%s64 + $0x320] sm:$0xf]
    %v284 = vld [vmem:[%s64 + $0x324] sm:$0xf]
    %v285 = vld [vmem:[%s64 + $0x328] sm:$0xf]
    %v286 = vld [vmem:[%s64 + $0x32c] sm:$0xf]
    %v287 = vld [vmem:[%s64 + $0x330] sm:$0xf]
    %v288 = vld [vmem:[%s64 + $0x334] sm:$0xf]
    %v289 = vld [vmem:[%s64 + $0x338] sm:$0xf]
    %v290 = vld [vmem:[%s64 + $0x33c] sm:$0xf]
    %v291 = vld [vmem:[%s64 + $0x340] sm:$0xf]
    %v292 = vld [vmem:[%s64 + $0x344] sm:$0xf]
    %v293 = vld [vmem:[%s64 + $0x348] sm:$0xf]
    %v294 = vld [vmem:[%s64 + $0x34c] sm:$0xf]
    %v295 = vld [vmem:[%s64 + $0x350] sm:$0xf]
    %v296 = vld [vmem:[%s64 + $0x354] sm:$0xf]
    %v297 = vld [vmem:[%s64 + $0x358] sm:$0xf]
    %v298 = vld [vmem:[%s64 + $0x35c] sm:$0xf]
    %v299 = vld [vmem:[%s64 + $0x360] sm:$0xf]
    %v300 = vld [vmem:[%s64 + $0x364] sm:$0xf]
    %v301 = vld [vmem:[%s64 + $0x368] sm:$0xf]
    %v302 = vld [vmem:[%s64 + $0x36c] sm:$0xf]
    %v303 = vld [vmem:[%s64 + $0x370] sm:$0xf]
    %v304 = vld [vmem:[%s64 + $0x374] sm:$0xf]
    %v305 = vld [vmem:[%s64 + $0x378] sm:$0xf]
    %v306 = vld [vmem:[%s64 + $0x37c] sm:$0xf]
    %v307 = vld [vmem:[%s64 + $0x380] sm:$0xf]
    %v308 = vld [vmem:[%s64 + $0x384] sm:$0xf]
    %v309 = vld [vmem:[%s64 + $0x388] sm:$0xf]
    %v310 = vld [vmem:[%s64 + $0x38c] sm:$0xf]
    %v311 = vld [vmem:[%s64 + $0x390] sm:$0xf]
    %v312 = vld [vmem:[%s64 + $0x394] sm:$0xf]
    %v313 = vld [vmem:[%s64 + $0x398] sm:$0xf]
    %v314 = vld [vmem:[%s64 + $0x39c] sm:$0xf]
    %v315 = vld [vmem:[%s64 + $0x3a0] sm:$0xf]
    %v316 = vld [vmem:[%s64 + $0x3a4] sm:$0xf]
    %v317 = vld [vmem:[%s64 + $0x3a8] sm:$0xf]
    %v318 = vld [vmem:[%s64 + $0x3ac] sm:$0xf]
    %v319 = vld [vmem:[%s64 + $0x3b0] sm:$0xf]
    %v320 = vld [vmem:[%s64 + $0x3b4] sm:$0xf]
    %v321 = vld [vmem:[%s64 + $0x3b8] sm:$0xf]
    %v322 = vld [vmem:[%s64 + $0x3bc] sm:$0xf]
    %v323 = vld [vmem:[%s64 + $0x3c0] sm:$0xf]
    %v324 = vld [vmem:[%s64 + $0x3c4] sm:$0xf]
    %v325 = vld [vmem:[%s64 + $0x3c8] sm:$0xf]
    %v326 = vld [vmem:[%s64 + $0x3cc] sm:$0xf]
    %v327 = vld [vmem:[%s64 + $0x3d0] sm:$0xf]
    %v328 = vld [vmem:[%s64 + $0x3d4] sm:$0xf]
    %v329 = vld [vmem:[%s64 + $0x3d8] sm:$0xf]
    %v330 = vld [vmem:[%s64 + $0x3dc] sm:$0xf]
    %v331 = vld [vmem:[%s64 + $0x3e0] sm:$0xf]
    %v332 = vld [vmem:[%s64 + $0x3e4] sm:$0xf]
    %v333 = vld [vmem:[%s64 + $0x3e8] sm:$0xf]
    %v334 = vld [vmem:[%s64 + $0x3ec] sm:$0xf]
    %v335 = vld [vmem:[%s64 + $0x3f0] sm:$0xf]
    %v336 = vld [vmem:[%s64 + $0x3f4] sm:$0xf]
    %v337 = vld [vmem:[%s64 + $0x3f8] sm:$0xf]
    %v338 = vld [vmem:[%s64 + $0x3fc] sm:$0xf]
    %v339 = vld [vmem:[%s3] sm:$0xf]
    %v340 = vld [vmem:[%s3 + $0x4] sm:$0xf]
    %v341 = vld [vmem:[%s4] sm:$0x1]
    %v343 = vlaneseq
    %v344 = vshrl.u32 %v343, 7
    %v345 = vsub.s32 0, %v344
    %v346 = vrot.slane %v341, %v345
    %v604 = vunpack.c.l.b16 %v83
    %v605 = vunpack.c.l.b16 %v84
    %v606 = vunpack.c.l.b16 %v85
    %v607 = vunpack.c.l.b16 %v86
    %v608 = vunpack.c.l.b16 %v87
    %v609 = vunpack.c.l.b16 %v88
    %v610 = vunpack.c.l.b16 %v89
    %v611 = vunpack.c.l.b16 %v90
    %v612 = vunpack.c.l.b16 %v91
    %v613 = vunpack.c.l.b16 %v92
    %v614 = vunpack.c.l.b16 %v93
    %v615 = vunpack.c.l.b16 %v94
    %v616 = vunpack.c.l.b16 %v95
    %v617 = vunpack.c.l.b16 %v96
    %v618 = vunpack.c.l.b16 %v97
    %v619 = vunpack.c.l.b16 %v98
    %v620 = vunpack.c.l.b16 %v99
    %v621 = vunpack.c.l.b16 %v100
    %v622 = vunpack.c.l.b16 %v101
    %v623 = vunpack.c.l.b16 %v102
    %v624 = vunpack.c.l.b16 %v103
    %v625 = vunpack.c.l.b16 %v104
    %v626 = vunpack.c.l.b16 %v105
    %v627 = vunpack.c.l.b16 %v106
    %v628 = vunpack.c.l.b16 %v107
    %v629 = vunpack.c.l.b16 %v108
    %v630 = vunpack.c.l.b16 %v109
    %v631 = vunpack.c.l.b16 %v110
    %v632 = vunpack.c.l.b16 %v111
    %v633 = vunpack.c.l.b16 %v112
    %v634 = vunpack.c.l.b16 %v113
    %v635 = vunpack.c.l.b16 %v114
    %v636 = vunpack.c.l.b16 %v115
    %v637 = vunpack.c.l.b16 %v116
    %v638 = vunpack.c.l.b16 %v117
    %v639 = vunpack.c.l.b16 %v118
    %v640 = vunpack.c.l.b16 %v119
    %v641 = vunpack.c.l.b16 %v120
    %v642 = vunpack.c.l.b16 %v121
    %v643 = vunpack.c.l.b16 %v122
    %v644 = vunpack.c.l.b16 %v123
    %v645 = vunpack.c.l.b16 %v124
    %v646 = vunpack.c.l.b16 %v125
    %v647 = vunpack.c.l.b16 %v126
    %v648 = vunpack.c.l.b16 %v127
    %v649 = vunpack.c.l.b16 %v128
    %v650 = vunpack.c.l.b16 %v129
    %v651 = vunpack.c.l.b16 %v130
    %v652 = vunpack.c.l.b16 %v131
    %v653 = vunpack.c.l.b16 %v132
    %v654 = vunpack.c.l.b16 %v133
    %v655 = vunpack.c.l.b16 %v134
    %v656 = vunpack.c.l.b16 %v135
    %v657 = vunpack.c.l.b16 %v136
    %v658 = vunpack.c.l.b16 %v137
    %v659 = vunpack.c.l.b16 %v138
    %v660 = vunpack.c.l.b16 %v139
    %v661 = vunpack.c.l.b16 %v140
    %v662 = vunpack.c.l.b16 %v141
    %v663 = vunpack.c.l.b16 %v142
    %v664 = vunpack.c.l.b16 %v143
    %v665 = vunpack.c.l.b16 %v144
    %v666 = vunpack.c.l.b16 %v145
    %v667 = vunpack.c.l.b16 %v146
    %v668 = vunpack.c.l.b16 %v147
    %v669 = vunpack.c.l.b16 %v148
    %v670 = vunpack.c.l.b16 %v149
    %v671 = vunpack.c.l.b16 %v150
    %v672 = vunpack.c.l.b16 %v151
    %v673 = vunpack.c.l.b16 %v152
    %v674 = vunpack.c.l.b16 %v153
    %v675 = vunpack.c.l.b16 %v154
    %v676 = vunpack.c.l.b16 %v155
    %v677 = vunpack.c.l.b16 %v156
    %v678 = vunpack.c.l.b16 %v157
    %v679 = vunpack.c.l.b16 %v158
    %v680 = vunpack.c.l.b16 %v159
    %v681 = vunpack.c.l.b16 %v160
    %v682 = vunpack.c.l.b16 %v161
    %v683 = vunpack.c.l.b16 %v162
    %v684 = vunpack.c.l.b16 %v163
    %v685 = vunpack.c.l.b16 %v164
    %v686 = vunpack.c.l.b16 %v165
    %v687 = vunpack.c.l.b16 %v166
    %v688 = vunpack.c.l.b16 %v167
    %v689 = vunpack.c.l.b16 %v168
    %v690 = vunpack.c.l.b16 %v169
    %v691 = vunpack.c.l.b16 %v170
    %v692 = vunpack.c.l.b16 %v171
    %v693 = vunpack.c.l.b16 %v172
    %v694 = vunpack.c.l.b16 %v173
    %v695 = vunpack.c.l.b16 %v174
    %v696 = vunpack.c.l.b16 %v175
    %v697 = vunpack.c.l.b16 %v176
    %v698 = vunpack.c.l.b16 %v177
    %v699 = vunpack.c.l.b16 %v178
    %v700 = vunpack.c.l.b16 %v179
    %v701 = vunpack.c.l.b16 %v180
    %v702 = vunpack.c.l.b16 %v181
    %v703 = vunpack.c.l.b16 %v182
    %v704 = vunpack.c.l.b16 %v183
    %v705 = vunpack.c.l.b16 %v184
    %v706 = vunpack.c.l.b16 %v185
    %v707 = vunpack.c.l.b16 %v186
    %v708 = vunpack.c.l.b16 %v187
    %v709 = vunpack.c.l.b16 %v188
    %v710 = vunpack.c.l.b16 %v189
    %v711 = vunpack.c.l.b16 %v190
    %v712 = vunpack.c.l.b16 %v191
    %v713 = vunpack.c.l.b16 %v192
    %v714 = vunpack.c.l.b16 %v193
    %v715 = vunpack.c.l.b16 %v194
    %v716 = vunpack.c.l.b16 %v195
    %v717 = vunpack.c.l.b16 %v196
    %v718 = vunpack.c.l.b16 %v197
    %v719 = vunpack.c.l.b16 %v198
    %v720 = vunpack.c.l.b16 %v199
    %v721 = vunpack.c.l.b16 %v200
    %v722 = vunpack.c.l.b16 %v201
    %v723 = vunpack.c.l.b16 %v202
    %v724 = vunpack.c.l.b16 %v203
    %v725 = vunpack.c.l.b16 %v204
    %v726 = vunpack.c.l.b16 %v205
    %v727 = vunpack.c.l.b16 %v206
    %v728 = vunpack.c.l.b16 %v207
    %v729 = vunpack.c.l.b16 %v208
    %v730 = vunpack.c.l.b16 %v209
    %v731 = vunpack.c.l.b16 %v210
    %v732 = vunpack.c.l.b16 %v211
    %v733 = vunpack.c.l.b16 %v212
    %v734 = vunpack.c.l.b16 %v213
    %v735 = vunpack.c.l.b16 %v214
    %v736 = vunpack.c.l.b16 %v215
    %v737 = vunpack.c.l.b16 %v216
    %v738 = vunpack.c.l.b16 %v217
    %v739 = vunpack.c.l.b16 %v218
    %v740 = vunpack.c.l.b16 %v219
    %v741 = vunpack.c.l.b16 %v220
    %v742 = vunpack.c.l.b16 %v221
    %v743 = vunpack.c.l.b16 %v222
    %v744 = vunpack.c.l.b16 %v223
    %v745 = vunpack.c.l.b16 %v224
    %v746 = vunpack.c.l.b16 %v225
    %v747 = vunpack.c.l.b16 %v226
    %v748 = vunpack.c.l.b16 %v227
    %v749 = vunpack.c.l.b16 %v228
    %v750 = vunpack.c.l.b16 %v229
    %v751 = vunpack.c.l.b16 %v230
    %v752 = vunpack.c.l.b16 %v231
    %v753 = vunpack.c.l.b16 %v232
    %v754 = vunpack.c.l.b16 %v233
    %v755 = vunpack.c.l.b16 %v234
    %v756 = vunpack.c.l.b16 %v235
    %v757 = vunpack.c.l.b16 %v236
    %v758 = vunpack.c.l.b16 %v237
    %v759 = vunpack.c.l.b16 %v238
    %v760 = vunpack.c.l.b16 %v239
    %v761 = vunpack.c.l.b16 %v240
    %v762 = vunpack.c.l.b16 %v241
    %v763 = vunpack.c.l.b16 %v242
    %v764 = vunpack.c.l.b16 %v243
    %v765 = vunpack.c.l.b16 %v244
    %v766 = vunpack.c.l.b16 %v245
    %v767 = vunpack.c.l.b16 %v246
    %v768 = vunpack.c.l.b16 %v247
    %v769 = vunpack.c.l.b16 %v248
    %v770 = vunpack.c.l.b16 %v249
    %v771 = vunpack.c.l.b16 %v250
    %v772 = vunpack.c.l.b16 %v251
    %v773 = vunpack.c.l.b16 %v252
    %v774 = vunpack.c.l.b16 %v253
    %v775 = vunpack.c.l.b16 %v254
    %v776 = vunpack.c.l.b16 %v255
    %v777 = vunpack.c.l.b16 %v256
    %v778 = vunpack.c.l.b16 %v257
    %v779 = vunpack.c.l.b16 %v258
    %v780 = vunpack.c.l.b16 %v259
    %v781 = vunpack.c.l.b16 %v260
    %v782 = vunpack.c.l.b16 %v261
    %v783 = vunpack.c.l.b16 %v262
    %v784 = vunpack.c.l.b16 %v263
    %v785 = vunpack.c.l.b16 %v264
    %v786 = vunpack.c.l.b16 %v265
    %v787 = vunpack.c.l.b16 %v266
    %v788 = vunpack.c.l.b16 %v267
    %v789 = vunpack.c.l.b16 %v268
    %v790 = vunpack.c.l.b16 %v269
    %v791 = vunpack.c.l.b16 %v270
    %v792 = vunpack.c.l.b16 %v271
    %v793 = vunpack.c.l.b16 %v272
    %v794 = vunpack.c.l.b16 %v273
    %v795 = vunpack.c.l.b16 %v274
    %v796 = vunpack.c.l.b16 %v275
    %v797 = vunpack.c.l.b16 %v276
    %v798 = vunpack.c.l.b16 %v277
    %v799 = vunpack.c.l.b16 %v278
    %v800 = vunpack.c.l.b16 %v279
    %v801 = vunpack.c.l.b16 %v280
    %v802 = vunpack.c.l.b16 %v281
    %v803 = vunpack.c.l.b16 %v282
    %v804 = vunpack.c.l.b16 %v283
    %v805 = vunpack.c.l.b16 %v284
    %v806 = vunpack.c.l.b16 %v285
    %v807 = vunpack.c.l.b16 %v286
    %v808 = vunpack.c.l.b16 %v287
    %v809 = vunpack.c.l.b16 %v288
    %v810 = vunpack.c.l.b16 %v289
    %v811 = vunpack.c.l.b16 %v290
    %v812 = vunpack.c.l.b16 %v291
    %v813 = vunpack.c.l.b16 %v292
    %v814 = vunpack.c.l.b16 %v293
    %v815 = vunpack.c.l.b16 %v294
    %v816 = vunpack.c.l.b16 %v295
    %v817 = vunpack.c.l.b16 %v296
    %v818 = vunpack.c.l.b16 %v297
    %v819 = vunpack.c.l.b16 %v298
    %v820 = vunpack.c.l.b16 %v299
    %v821 = vunpack.c.l.b16 %v300
    %v822 = vunpack.c.l.b16 %v301
    %v823 = vunpack.c.l.b16 %v302
    %v824 = vunpack.c.l.b16 %v303
    %v825 = vunpack.c.l.b16 %v304
    %v826 = vunpack.c.l.b16 %v305
    %v827 = vunpack.c.l.b16 %v306
    %v828 = vunpack.c.l.b16 %v307
    %v829 = vunpack.c.l.b16 %v308
    %v830 = vunpack.c.l.b16 %v309
    %v831 = vunpack.c.l.b16 %v310
    %v832 = vunpack.c.l.b16 %v311
    %v833 = vunpack.c.l.b16 %v312
    %v834 = vunpack.c.l.b16 %v313
    %v835 = vunpack.c.l.b16 %v314
    %v836 = vunpack.c.l.b16 %v315
    %v837 = vunpack.c.l.b16 %v316
    %v838 = vunpack.c.l.b16 %v317
    %v839 = vunpack.c.l.b16 %v318
    %v840 = vunpack.c.l.b16 %v319
    %v841 = vunpack.c.l.b16 %v320
    %v842 = vunpack.c.l.b16 %v321
    %v843 = vunpack.c.l.b16 %v322
    %v844 = vunpack.c.l.b16 %v323
    %v845 = vunpack.c.l.b16 %v324
    %v846 = vunpack.c.l.b16 %v325
    %v847 = vunpack.c.l.b16 %v326
    %v848 = vunpack.c.l.b16 %v327
    %v849 = vunpack.c.l.b16 %v328
    %v850 = vunpack.c.l.b16 %v329
    %v851 = vunpack.c.l.b16 %v330
    %v852 = vunpack.c.l.b16 %v331
    %v853 = vunpack.c.l.b16 %v332
    %v854 = vunpack.c.l.b16 %v333
    %v855 = vunpack.c.l.b16 %v334
    %v856 = vunpack.c.l.b16 %v335
    %v857 = vunpack.c.l.b16 %v336
    %v858 = vunpack.c.l.b16 %v337
    %v859 = vunpack.c.l.b16 %v338
    %v860 = vpack.c.b16 %v605, %v604
    %v861 = vpack.c.b16 %v607, %v606
    %v862 = vpack.c.b16 %v609, %v608
    %v863 = vpack.c.b16 %v611, %v610
    %v864 = vpack.c.b16 %v613, %v612
    %v865 = vpack.c.b16 %v615, %v614
    %v866 = vpack.c.b16 %v617, %v616
    %v867 = vpack.c.b16 %v619, %v618
    %v868 = vpack.c.b16 %v621, %v620
    %v869 = vpack.c.b16 %v623, %v622
    %v870 = vpack.c.b16 %v625, %v624
    %v871 = vpack.c.b16 %v627, %v626
    %v872 = vpack.c.b16 %v629, %v628
    %v873 = vpack.c.b16 %v631, %v630
    %v874 = vpack.c.b16 %v633, %v632
    %v875 = vpack.c.b16 %v635, %v634
    %v876 = vpack.c.b16 %v637, %v636
    %v877 = vpack.c.b16 %v639, %v638
    %v878 = vpack.c.b16 %v641, %v640
    %v879 = vpack.c.b16 %v643, %v642
    %v880 = vpack.c.b16 %v645, %v644
    %v881 = vpack.c.b16 %v647, %v646
    %v882 = vpack.c.b16 %v649, %v648
    %v883 = vpack.c.b16 %v651, %v650
    %v884 = vpack.c.b16 %v653, %v652
    %v885 = vpack.c.b16 %v655, %v654
    %v886 = vpack.c.b16 %v657, %v656
    %v887 = vpack.c.b16 %v659, %v658
    %v888 = vpack.c.b16 %v661, %v660
    %v889 = vpack.c.b16 %v663, %v662
    %v890 = vpack.c.b16 %v665, %v664
    %v891 = vpack.c.b16 %v667, %v666
    %v892 = vpack.c.b16 %v669, %v668
    %v893 = vpack.c.b16 %v671, %v670
    %v894 = vpack.c.b16 %v673, %v672
    %v895 = vpack.c.b16 %v675, %v674
    %v896 = vpack.c.b16 %v677, %v676
    %v897 = vpack.c.b16 %v679, %v678
    %v898 = vpack.c.b16 %v681, %v680
    %v899 = vpack.c.b16 %v683, %v682
    %v900 = vpack.c.b16 %v685, %v684
    %v901 = vpack.c.b16 %v687, %v686
    %v902 = vpack.c.b16 %v689, %v688
    %v903 = vpack.c.b16 %v691, %v690
    %v904 = vpack.c.b16 %v693, %v692
    %v905 = vpack.c.b16 %v695, %v694
    %v906 = vpack.c.b16 %v697, %v696
    %v907 = vpack.c.b16 %v699, %v698
    %v908 = vpack.c.b16 %v701, %v700
    %v909 = vpack.c.b16 %v703, %v702
    %v910 = vpack.c.b16 %v705, %v704
    %v911 = vpack.c.b16 %v707, %v706
    %v912 = vpack.c.b16 %v709, %v708
    %v913 = vpack.c.b16 %v711, %v710
    %v914 = vpack.c.b16 %v713, %v712
    %v915 = vpack.c.b16 %v715, %v714
    %v916 = vpack.c.b16 %v717, %v716
    %v917 = vpack.c.b16 %v719, %v718
    %v918 = vpack.c.b16 %v721, %v720
    %v919 = vpack.c.b16 %v723, %v722
    %v920 = vpack.c.b16 %v725, %v724
    %v921 = vpack.c.b16 %v727, %v726
    %v922 = vpack.c.b16 %v729, %v728
    %v923 = vpack.c.b16 %v731, %v730
    %v924 = vpack.c.b16 %v733, %v732
    %v925 = vpack.c.b16 %v735, %v734
    %v926 = vpack.c.b16 %v737, %v736
    %v927 = vpack.c.b16 %v739, %v738
    %v928 = vpack.c.b16 %v741, %v740
    %v929 = vpack.c.b16 %v743, %v742
    %v930 = vpack.c.b16 %v745, %v744
    %v931 = vpack.c.b16 %v747, %v746
    %v932 = vpack.c.b16 %v749, %v748
    %v933 = vpack.c.b16 %v751, %v750
    %v934 = vpack.c.b16 %v753, %v752
    %v935 = vpack.c.b16 %v755, %v754
    %v936 = vpack.c.b16 %v757, %v756
    %v937 = vpack.c.b16 %v759, %v758
    %v938 = vpack.c.b16 %v761, %v760
    %v939 = vpack.c.b16 %v763, %v762
    %v940 = vpack.c.b16 %v765, %v764
    %v941 = vpack.c.b16 %v767, %v766
    %v942 = vpack.c.b16 %v769, %v768
    %v943 = vpack.c.b16 %v771, %v770
    %v944 = vpack.c.b16 %v773, %v772
    %v945 = vpack.c.b16 %v775, %v774
    %v946 = vpack.c.b16 %v777, %v776
    %v947 = vpack.c.b16 %v779, %v778
    %v948 = vpack.c.b16 %v781, %v780
    %v949 = vpack.c.b16 %v783, %v782
    %v950 = vpack.c.b16 %v785, %v784
    %v951 = vpack.c.b16 %v787, %v786
    %v952 = vpack.c.b16 %v789, %v788
    %v953 = vpack.c.b16 %v791, %v790
    %v954 = vpack.c.b16 %v793, %v792
    %v955 = vpack.c.b16 %v795, %v794
    %v956 = vpack.c.b16 %v797, %v796
    %v957 = vpack.c.b16 %v799, %v798
    %v958 = vpack.c.b16 %v801, %v800
    %v959 = vpack.c.b16 %v803, %v802
    %v960 = vpack.c.b16 %v805, %v804
    %v961 = vpack.c.b16 %v807, %v806
    %v962 = vpack.c.b16 %v809, %v808
    %v963 = vpack.c.b16 %v811, %v810
    %v964 = vpack.c.b16 %v813, %v812
    %v965 = vpack.c.b16 %v815, %v814
    %v966 = vpack.c.b16 %v817, %v816
    %v967 = vpack.c.b16 %v819, %v818
    %v968 = vpack.c.b16 %v821, %v820
    %v969 = vpack.c.b16 %v823, %v822
    %v970 = vpack.c.b16 %v825, %v824
    %v971 = vpack.c.b16 %v827, %v826
    %v972 = vpack.c.b16 %v829, %v828
    %v973 = vpack.c.b16 %v831, %v830
    %v974 = vpack.c.b16 %v833, %v832
    %v975 = vpack.c.b16 %v835, %v834
    %v976 = vpack.c.b16 %v837, %v836
    %v977 = vpack.c.b16 %v839, %v838
    %v978 = vpack.c.b16 %v841, %v840
    %v979 = vpack.c.b16 %v843, %v842
    %v980 = vpack.c.b16 %v845, %v844
    %v981 = vpack.c.b16 %v847, %v846
    %v982 = vpack.c.b16 %v849, %v848
    %v983 = vpack.c.b16 %v851, %v850
    %v984 = vpack.c.b16 %v853, %v852
    %v985 = vpack.c.b16 %v855, %v854
    %v986 = vpack.c.b16 %v857, %v856
    %v987 = vpack.c.b16 %v859, %v858
    %v990 = vunpack.c.l.b16 %v339
    %v991 = vunpack.c.l.b16 %v340
    %v992 = vpack.c.b16 %v991, %v990
    %vm994 = vcmask 130048
    %v996 = vsel %vm994, %v860, 0
    %v999 = vsel %vm994, %v861, 0
    %v1002 = vsel %vm994, %v862, 0
    %v1005 = vsel %vm994, %v863, 0
    %v1008 = vsel %vm994, %v864, 0
    %v1011 = vsel %vm994, %v865, 0
    %v1014 = vsel %vm994, %v866, 0
    %v1017 = vsel %vm994, %v867, 0
    %v1020 = vsel %vm994, %v868, 0
    %v1023 = vsel %vm994, %v869, 0
    %v1026 = vsel %vm994, %v870, 0
    %v1029 = vsel %vm994, %v871, 0
    %v1032 = vsel %vm994, %v872, 0
    %v1035 = vsel %vm994, %v873, 0
    %v1038 = vsel %vm994, %v874, 0
    %v1041 = vsel %vm994, %v875, 0
    %v1044 = vsel %vm994, %v876, 0
    %v1047 = vsel %vm994, %v877, 0
    %v1050 = vsel %vm994, %v878, 0
    %v1053 = vsel %vm994, %v879, 0
    %v1056 = vsel %vm994, %v880, 0
    %v1059 = vsel %vm994, %v881, 0
    %v1062 = vsel %vm994, %v882, 0
    %v1065 = vsel %vm994, %v883, 0
    %v1068 = vsel %vm994, %v884, 0
    %v1071 = vsel %vm994, %v885, 0
    %v1074 = vsel %vm994, %v886, 0
    %v1077 = vsel %vm994, %v887, 0
    %v1080 = vsel %vm994, %v888, 0
    %v1083 = vsel %vm994, %v889, 0
    %v1086 = vsel %vm994, %v890, 0
    %v1089 = vsel %vm994, %v891, 0
    %v1092 = vsel %vm994, %v892, 0
    %v1095 = vsel %vm994, %v893, 0
    %v1098 = vsel %vm994, %v894, 0
    %v1101 = vsel %vm994, %v895, 0
    %v1104 = vsel %vm994, %v896, 0
    %v1107 = vsel %vm994, %v897, 0
    %v1110 = vsel %vm994, %v898, 0
    %v1113 = vsel %vm994, %v899, 0
    %v1116 = vsel %vm994, %v900, 0
    %v1119 = vsel %vm994, %v901, 0
    %v1122 = vsel %vm994, %v902, 0
    %v1125 = vsel %vm994, %v903, 0
    %v1128 = vsel %vm994, %v904, 0
    %v1131 = vsel %vm994, %v905, 0
    %v1134 = vsel %vm994, %v906, 0
    %v1137 = vsel %vm994, %v907, 0
    %v1140 = vsel %vm994, %v908, 0
    %v1143 = vsel %vm994, %v909, 0
    %v1146 = vsel %vm994, %v910, 0
    %v1149 = vsel %vm994, %v911, 0
    %v1152 = vsel %vm994, %v912, 0
    %v1155 = vsel %vm994, %v913, 0
    %v1158 = vsel %vm994, %v914, 0
    %v1161 = vsel %vm994, %v915, 0
    %v1164 = vsel %vm994, %v916, 0
    %v1167 = vsel %vm994, %v917, 0
    %v1170 = vsel %vm994, %v918, 0
    %v1173 = vsel %vm994, %v919, 0
    %v1176 = vsel %vm994, %v920, 0
    %v1179 = vsel %vm994, %v921, 0
    %v1182 = vsel %vm994, %v922, 0
    %v1185 = vsel %vm994, %v923, 0
    %v1188 = vsel %vm994, %v924, 0
    %v1191 = vsel %vm994, %v925, 0
    %v1194 = vsel %vm994, %v926, 0
    %v1197 = vsel %vm994, %v927, 0
    %v1200 = vsel %vm994, %v928, 0
    %v1203 = vsel %vm994, %v929, 0
    %v1206 = vsel %vm994, %v930, 0
    %v1209 = vsel %vm994, %v931, 0
    %v1212 = vsel %vm994, %v932, 0
    %v1215 = vsel %vm994, %v933, 0
    %v1218 = vsel %vm994, %v934, 0
    %v1221 = vsel %vm994, %v935, 0
    %v1224 = vsel %vm994, %v936, 0
    %v1227 = vsel %vm994, %v937, 0
    %v1230 = vsel %vm994, %v938, 0
    %v1233 = vsel %vm994, %v939, 0
    %v1236 = vsel %vm994, %v940, 0
    %v1239 = vsel %vm994, %v941, 0
    %v1242 = vsel %vm994, %v942, 0
    %v1245 = vsel %vm994, %v943, 0
    %v1248 = vsel %vm994, %v944, 0
    %v1251 = vsel %vm994, %v945, 0
    %v1254 = vsel %vm994, %v946, 0
    %v1257 = vsel %vm994, %v947, 0
    %v1260 = vsel %vm994, %v948, 0
    %v1263 = vsel %vm994, %v949, 0
    %v1266 = vsel %vm994, %v950, 0
    %v1269 = vsel %vm994, %v951, 0
    %v1272 = vsel %vm994, %v952, 0
    %v1275 = vsel %vm994, %v953, 0
    %v1278 = vsel %vm994, %v954, 0
    %v1281 = vsel %vm994, %v955, 0
    %v1284 = vsel %vm994, %v956, 0
    %v1287 = vsel %vm994, %v957, 0
    %v1290 = vsel %vm994, %v958, 0
    %v1293 = vsel %vm994, %v959, 0
    %v1296 = vsel %vm994, %v960, 0
    %v1299 = vsel %vm994, %v961, 0
    %v1302 = vsel %vm994, %v962, 0
    %v1305 = vsel %vm994, %v963, 0
    %v1308 = vsel %vm994, %v964, 0
    %v1311 = vsel %vm994, %v965, 0
    %v1314 = vsel %vm994, %v966, 0
    %v1317 = vsel %vm994, %v967, 0
    %v1320 = vsel %vm994, %v968, 0
    %v1323 = vsel %vm994, %v969, 0
    %v1326 = vsel %vm994, %v970, 0
    %v1329 = vsel %vm994, %v971, 0
    %v1332 = vsel %vm994, %v972, 0
    %v1335 = vsel %vm994, %v973, 0
    %v1338 = vsel %vm994, %v974, 0
    %v1341 = vsel %vm994, %v975, 0
    %v1344 = vsel %vm994, %v976, 0
    %v1347 = vsel %vm994, %v977, 0
    %v1350 = vsel %vm994, %v978, 0
    %v1353 = vsel %vm994, %v979, 0
    %v1356 = vsel %vm994, %v980, 0
    %v1359 = vsel %vm994, %v981, 0
    %v1362 = vsel %vm994, %v982, 0
    %v1365 = vsel %vm994, %v983, 0
    %v1368 = vsel %vm994, %v984, 0
    %v1371 = vsel %vm994, %v985, 0
    %v1374 = vsel %vm994, %v986, 0
    %v1377 = vsel %vm994, %v987, 0
    %1379 = vmatprep.subr.bf16.mxu0 0
    %1380 = vmatpush1.bf16.msra.mxu0 %v992
    %1381 = vmatprep.subr.bf16.mxu0 0
    %1382 = vmatpush1.bf16.msra.mxu0 0
    %1383 = vmatprep.subr.bf16.mxu0 0
    %1384 = vmatpush1.bf16.msra.mxu0 0
    %1385 = vmatprep.subr.bf16.mxu0 0
    %1386 = vmatpush1.bf16.msra.mxu0 0
    %1387 = vmatprep.subr.bf16.mxu0 0
    %1388 = vmatpush1.bf16.msra.mxu0 0
    %1389 = vmatprep.subr.bf16.mxu0 0
    %1390 = vmatpush1.bf16.msra.mxu0 0
    %1391 = vmatprep.subr.bf16.mxu0 0
    %1392 = vmatpush1.bf16.msra.mxu0 0
    %1393 = vmatprep.subr.bf16.mxu0 0
    %1394 = vmatpush1.bf16.msra.mxu0 0
    %1395 = vmatprep.subr.bf16.mxu0 0
    %1396 = vmatpush1.bf16.msra.mxu0 0
    %1397 = vmatprep.subr.bf16.mxu0 0
    %1398 = vmatpush1.bf16.msra.mxu0 0
    %1399 = vmatprep.subr.bf16.mxu0 0
    %1400 = vmatpush1.bf16.msra.mxu0 0
    %1401 = vmatprep.subr.bf16.mxu0 0
    %1402 = vmatpush1.bf16.msra.mxu0 0
    %1403 = vmatprep.subr.bf16.mxu0 0
    %1404 = vmatpush1.bf16.msra.mxu0 0
    %1405 = vmatprep.subr.bf16.mxu0 0
    %1406 = vmatpush1.bf16.msra.mxu0 0
    %1407 = vmatprep.subr.bf16.mxu0 0
    %1408 = vmatpush1.bf16.msra.mxu0 0
    %1409 = vmatprep.subr.bf16.mxu0 0
    %1410 = vmatpush1.bf16.msra.mxu0 0
    %1411 = vmatprep.mubr.bf16.mxu0 0
    %1412 = vmatmul.mubr.bf16.gmra.mrb[0].mxu0 %v996
    %v1413 = vpop.f32.mrb[0].mxu0
    %v1414 = vadd.f32 %v346, %v1413
    %v1415 = vpop.f32.mrb[0].mxu0
    %v1416 = vpop.f32.mrb[0].mxu0
    %v1417 = vadd.f32 %v346, %v1416
    %v1418 = vpop.f32.mrb[0].mxu0
    %1419 = vmatprep.mubr.bf16.mxu0 0
    %1420 = vmatmul.mubr.bf16.gmra.mrb[0].mxu0 %v999
    %v1421 = vpop.f32.mrb[0].mxu0
    %v1422 = vadd.f32 %v346, %v1421
    %v1423 = vpop.f32.mrb[0].mxu0
    %v1424 = vpop.f32.mrb[0].mxu0
    %v1425 = vadd.f32 %v346, %v1424
    %v1426 = vpop.f32.mrb[0].mxu0
    %1427 = vmatprep.mubr.bf16.mxu0 0
    %1428 = vmatmul.mubr.bf16.gmra.mrb[0].mxu0 %v1002
    %v1429 = vpop.f32.mrb[0].mxu0
    %v1430 = vadd.f32 %v346, %v1429
    %v1431 = vpop.f32.mrb[0].mxu0
    %v1432 = vpop.f32.mrb[0].mxu0
    %v1433 = vadd.f32 %v346, %v1432
    %v1434 = vpop.f32.mrb[0].mxu0
    %1435 = vmatprep.mubr.bf16.mxu0 0
    %1436 = vmatmul.mubr.bf16.gmra.mrb[0].mxu0 %v1005
    %v1437 = vpop.f32.mrb[0].mxu0
    %v1438 = vadd.f32 %v346, %v1437
    %v1439 = vpop.f32.mrb[0].mxu0
    %v1440 = vpop.f32.mrb[0].mxu0
    %v1441 = vadd.f32 %v346, %v1440
    %v1442 = vpop.f32.mrb[0].mxu0
    %1443 = vmatprep.mubr.bf16.mxu0 0
    %1444 = vmatmul.mubr.bf16.gmra.mrb[0].mxu0 %v1008
    %v1445 = vpop.f32.mrb[0].mxu0
    %v1446 = vadd.f32 %v346, %v1445
    %v1447 = vpop.f32.mrb[0].mxu0
    %v1448 = vpop.f32.mrb[0].mxu0
    %v1449 = vadd.f32 %v346, %v1448
    %v1450 = vpop.f32.mrb[0].mxu0
    %1451 = vmatprep.mubr.bf16.mxu0 0
    %1452 = vmatmul.mubr.bf16.gmra.mrb[0].mxu0 %v1011
    %v1453 = vpop.f32.mrb[0].mxu0
    %v1454 = vadd.f32 %v346, %v1453
    %v1455 = vpop.f32.mrb[0].mxu0
    %v1456 = vpop.f32.mrb[0].mxu0
    %v1457 = vadd.f32 %v346, %v1456
    %v1458 = vpop.f32.mrb[0].mxu0
    %1459 = vmatprep.mubr.bf16.mxu0 0
    %1460 = vmatmul.mubr.bf16.gmra.mrb[0].mxu0 %v1014
    %v1461 = vpop.f32.mrb[0].mxu0
    %v1462 = vadd.f32 %v346, %v1461
    %v1463 = vpop.f32.mrb[0].mxu0
    %v1464 = vpop.f32.mrb[0].mxu0
    %v1465 = vadd.f32 %v346, %v1464
    %v1466 = vpop.f32.mrb[0].mxu0
    %1467 = vmatprep.mubr.bf16.mxu0 0
    %1468 = vmatmul.mubr.bf16.gmra.mrb[0].mxu0 %v1017
    %v1469 = vpop.f32.mrb[0].mxu0
    %v1470 = vadd.f32 %v346, %v1469
    %v1471 = vpop.f32.mrb[0].mxu0
    %v1472 = vpop.f32.mrb[0].mxu0
    %v1473 = vadd.f32 %v346, %v1472
    %v1474 = vpop.f32.mrb[0].mxu0
    %1475 = vmatprep.mubr.bf16.mxu0 0
    %1476 = vmatmul.mubr.bf16.gmra.mrb[0].mxu0 %v1020
    %v1477 = vpop.f32.mrb[0].mxu0
    %v1478 = vadd.f32 %v346, %v1477
    %v1479 = vpop.f32.mrb[0].mxu0
    %v1480 = vpop.f32.mrb[0].mxu0
    %v1481 = vadd.f32 %v346, %v1480
    %v1482 = vpop.f32.mrb[0].mxu0
    %1483 = vmatprep.mubr.bf16.mxu0 0
    %1484 = vmatmul.mubr.bf16.gmra.mrb[0].mxu0 %v1023
    %v1485 = vpop.f32.mrb[0].mxu0
    %v1486 = vadd.f32 %v346, %v1485
    %v1487 = vpop.f32.mrb[0].mxu0
    %v1488 = vpop.f32.mrb[0].mxu0
    %v1489 = vadd.f32 %v346, %v1488
    %v1490 = vpop.f32.mrb[0].mxu0
    %1491 = vmatprep.mubr.bf16.mxu0 0
    %1492 = vmatmul.mubr.bf16.gmra.mrb[0].mxu0 %v1026
    %v1493 = vpop.f32.mrb[0].mxu0
    %v1494 = vadd.f32 %v346, %v1493
    %v1495 = vpop.f32.mrb[0].mxu0
    %v1496 = vpop.f32.mrb[0].mxu0
    %v1497 = vadd.f32 %v346, %v1496
    %v1498 = vpop.f32.mrb[0].mxu0
    %1499 = vmatprep.mubr.bf16.mxu0 0
    %1500 = vmatmul.mubr.bf16.gmra.mrb[0].mxu0 %v1029
    %v1501 = vpop.f32.mrb[0].mxu0
    %v1502 = vadd.f32 %v346, %v1501
    %v1503 = vpop.f32.mrb[0].mxu0
    %v1504 = vpop.f32.mrb[0].mxu0
    %v1505 = vadd.f32 %v346, %v1504
    %v1506 = vpop.f32.mrb[0].mxu0
    %1507 = vmatprep.mubr.bf16.mxu0 0
    %1508 = vmatmul.mubr.bf16.gmra.mrb[0].mxu0 %v1032
    %v1509 = vpop.f32.mrb[0].mxu0
    %v1510 = vadd.f32 %v346, %v1509
    %v1511 = vpop.f32.mrb[0].mxu0
    %v1512 = vpop.f32.mrb[0].mxu0
    %v1513 = vadd.f32 %v346, %v1512
    %v1514 = vpop.f32.mrb[0].mxu0
    %1515 = vmatprep.mubr.bf16.mxu0 0
    %1516 = vmatmul.mubr.bf16.gmra.mrb[0].mxu0 %v1035
    %v1517 = vpop.f32.mrb[0].mxu0
    %v1518 = vadd.f32 %v346, %v1517
    %v1519 = vpop.f32.mrb[0].mxu0
    %v1520 = vpop.f32.mrb[0].mxu0
    %v1521 = vadd.f32 %v346, %v1520
    %v1522 = vpop.f32.mrb[0].mxu0
    %1523 = vmatprep.mubr.bf16.mxu0 0
    %1524 = vmatmul.mubr.bf16.gmra.mrb[0].mxu0 %v1038
    %v1525 = vpop.f32.mrb[0].mxu0
    %v1526 = vadd.f32 %v346, %v1525
    %v1527 = vpop.f32.mrb[0].mxu0
    %v1528 = vpop.f32.mrb[0].mxu0
    %v1529 = vadd.f32 %v346, %v1528
    %v1530 = vpop.f32.mrb[0].mxu0
    %1531 = vmatprep.mubr.bf16.mxu0 0
    %1532 = vmatmul.mubr.bf16.gmra.mrb[0].mxu0 %v1041
    %v1533 = vpop.f32.mrb[0].mxu0
    %v1534 = vadd.f32 %v346, %v1533
    %v1535 = vpop.f32.mrb[0].mxu0
    %v1536 = vpop.f32.mrb[0].mxu0
    %v1537 = vadd.f32 %v346, %v1536
    %v1538 = vpop.f32.mrb[0].mxu0
    %1539 = vmatprep.mubr.bf16.mxu0 0
    %1540 = vmatmul.mubr.bf16.gmra.mrb[0].mxu0 %v1044
    %v1541 = vpop.f32.mrb[0].mxu0
    %v1542 = vadd.f32 %v346, %v1541
    %v1543 = vpop.f32.mrb[0].mxu0
    %v1544 = vpop.f32.mrb[0].mxu0
    %v1545 = vadd.f32 %v346, %v1544
    %v1546 = vpop.f32.mrb[0].mxu0
    %1547 = vmatprep.mubr.bf16.mxu0 0
    %1548 = vmatmul.mubr.bf16.gmra.mrb[0].mxu0 %v1047
    %v1549 = vpop.f32.mrb[0].mxu0
    %v1550 = vadd.f32 %v346, %v1549
    %v1551 = vpop.f32.mrb[0].mxu0
    %v1552 = vpop.f32.mrb[0].mxu0
    %v1553 = vadd.f32 %v346, %v1552
    %v1554 = vpop.f32.mrb[0].mxu0
    %1555 = vmatprep.mubr.bf16.mxu0 0
    %1556 = vmatmul.mubr.bf16.gmra.mrb[0].mxu0 %v1050
    %v1557 = vpop.f32.mrb[0].mxu0
    %v1558 = vadd.f32 %v346, %v1557
    %v1559 = vpop.f32.mrb[0].mxu0
    %v1560 = vpop.f32.mrb[0].mxu0
    %v1561 = vadd.f32 %v346, %v1560
    %v1562 = vpop.f32.mrb[0].mxu0
    %1563 = vmatprep.mubr.bf16.mxu0 0
    %1564 = vmatmul.mubr.bf16.gmra.mrb[0].mxu0 %v1053
    %v1565 = vpop.f32.mrb[0].mxu0
    %v1566 = vadd.f32 %v346, %v1565
    %v1567 = vpop.f32.mrb[0].mxu0
    %v1568 = vpop.f32.mrb[0].mxu0
    %v1569 = vadd.f32 %v346, %v1568
    %v1570 = vpop.f32.mrb[0].mxu0
    %1571 = vmatprep.mubr.bf16.mxu0 0
    %1572 = vmatmul.mubr.bf16.gmra.mrb[0].mxu0 %v1056
    %v1573 = vpop.f32.mrb[0].mxu0
    %v1574 = vadd.f32 %v346, %v1573
    %v1575 = vpop.f32.mrb[0].mxu0
    %v1576 = vpop.f32.mrb[0].mxu0
    %v1577 = vadd.f32 %v346, %v1576
    %v1578 = vpop.f32.mrb[0].mxu0
    %1579 = vmatprep.mubr.bf16.mxu0 0
    %1580 = vmatmul.mubr.bf16.gmra.mrb[0].mxu0 %v1059
    %v1581 = vpop.f32.mrb[0].mxu0
    %v1582 = vadd.f32 %v346, %v1581
    %v1583 = vpop.f32.mrb[0].mxu0
    %v1584 = vpop.f32.mrb[0].mxu0
    %v1585 = vadd.f32 %v346, %v1584
    %v1586 = vpop.f32.mrb[0].mxu0
    %1587 = vmatprep.mubr.bf16.mxu0 0
    %1588 = vmatmul.mubr.bf16.gmra.mrb[0].mxu0 %v1062
    %v1589 = vpop.f32.mrb[0].mxu0
    %v1590 = vadd.f32 %v346, %v1589
    %v1591 = vpop.f32.mrb[0].mxu0
    %v1592 = vpop.f32.mrb[0].mxu0
    %v1593 = vadd.f32 %v346, %v1592
    %v1594 = vpop.f32.mrb[0].mxu0
    %1595 = vmatprep.mubr.bf16.mxu0 0
    %1596 = vmatmul.mubr.bf16.gmra.mrb[0].mxu0 %v1065
    %v1597 = vpop.f32.mrb[0].mxu0
    %v1598 = vadd.f32 %v346, %v1597
    %v1599 = vpop.f32.mrb[0].mxu0
    %v1600 = vpop.f32.mrb[0].mxu0
    %v1601 = vadd.f32 %v346, %v1600
    %v1602 = vpop.f32.mrb[0].mxu0
    %1603 = vmatprep.mubr.bf16.mxu0 0
    %1604 = vmatmul.mubr.bf16.gmra.mrb[0].mxu0 %v1068
    %v1605 = vpop.f32.mrb[0].mxu0
    %v1606 = vadd.f32 %v346, %v1605
    %v1607 = vpop.f32.mrb[0].mxu0
    %v1608 = vpop.f32.mrb[0].mxu0
    %v1609 = vadd.f32 %v346, %v1608
    %v1610 = vpop.f32.mrb[0].mxu0
    %1611 = vmatprep.mubr.bf16.mxu0 0
    %1612 = vmatmul.mubr.bf16.gmra.mrb[0].mxu0 %v1071
    %v1613 = vpop.f32.mrb[0].mxu0
    %v1614 = vadd.f32 %v346, %v1613
    %v1615 = vpop.f32.mrb[0].mxu0
    %v1616 = vpop.f32.mrb[0].mxu0
    %v1617 = vadd.f32 %v346, %v1616
    %v1618 = vpop.f32.mrb[0].mxu0
    %1619 = vmatprep.mubr.bf16.mxu0 0
    %1620 = vmatmul.mubr.bf16.gmra.mrb[0].mxu0 %v1074
    %v1621 = vpop.f32.mrb[0].mxu0
    %v1622 = vadd.f32 %v346, %v1621
    %v1623 = vpop.f32.mrb[0].mxu0
    %v1624 = vpop.f32.mrb[0].mxu0
    %v1625 = vadd.f32 %v346, %v1624
    %v1626 = vpop.f32.mrb[0].mxu0
    %1627 = vmatprep.mubr.bf16.mxu0 0
    %1628 = vmatmul.mubr.bf16.gmra.mrb[0].mxu0 %v1077
    %v1629 = vpop.f32.mrb[0].mxu0
    %v1630 = vadd.f32 %v346, %v1629
    %v1631 = vpop.f32.mrb[0].mxu0
    %v1632 = vpop.f32.mrb[0].mxu0
    %v1633 = vadd.f32 %v346, %v1632
    %v1634 = vpop.f32.mrb[0].mxu0
    %1635 = vmatprep.mubr.bf16.mxu0 0
    %1636 = vmatmul.mubr.bf16.gmra.mrb[0].mxu0 %v1080
    %v1637 = vpop.f32.mrb[0].mxu0
    %v1638 = vadd.f32 %v346, %v1637
    %v1639 = vpop.f32.mrb[0].mxu0
    %v1640 = vpop.f32.mrb[0].mxu0
    %v1641 = vadd.f32 %v346, %v1640
    %v1642 = vpop.f32.mrb[0].mxu0
    %1643 = vmatprep.mubr.bf16.mxu0 0
    %1644 = vmatmul.mubr.bf16.gmra.mrb[0].mxu0 %v1083
    %v1645 = vpop.f32.mrb[0].mxu0
    %v1646 = vadd.f32 %v346, %v1645
    %v1647 = vpop.f32.mrb[0].mxu0
    %v1648 = vpop.f32.mrb[0].mxu0
    %v1649 = vadd.f32 %v346, %v1648
    %v1650 = vpop.f32.mrb[0].mxu0
    %1651 = vmatprep.mubr.bf16.mxu0 0
    %1652 = vmatmul.mubr.bf16.gmra.mrb[0].mxu0 %v1086
    %v1653 = vpop.f32.mrb[0].mxu0
    %v1654 = vadd.f32 %v346, %v1653
    %v1655 = vpop.f32.mrb[0].mxu0
    %v1656 = vpop.f32.mrb[0].mxu0
    %v1657 = vadd.f32 %v346, %v1656
    %v1658 = vpop.f32.mrb[0].mxu0
    %1659 = vmatprep.mubr.bf16.mxu0 0
    %1660 = vmatmul.mubr.bf16.gmra.mrb[0].mxu0 %v1089
    %v1661 = vpop.f32.mrb[0].mxu0
    %v1662 = vadd.f32 %v346, %v1661
    %v1663 = vpop.f32.mrb[0].mxu0
    %v1664 = vpop.f32.mrb[0].mxu0
    %v1665 = vadd.f32 %v346, %v1664
    %v1666 = vpop.f32.mrb[0].mxu0
    %1667 = vmatprep.mubr.bf16.mxu0 0
    %1668 = vmatmul.mubr.bf16.gmra.mrb[0].mxu0 %v1092
    %v1669 = vpop.f32.mrb[0].mxu0
    %v1670 = vadd.f32 %v346, %v1669
    %v1671 = vpop.f32.mrb[0].mxu0
    %v1672 = vpop.f32.mrb[0].mxu0
    %v1673 = vadd.f32 %v346, %v1672
    %v1674 = vpop.f32.mrb[0].mxu0
    %1675 = vmatprep.mubr.bf16.mxu0 0
    %1676 = vmatmul.mubr.bf16.gmra.mrb[0].mxu0 %v1095
    %v1677 = vpop.f32.mrb[0].mxu0
    %v1678 = vadd.f32 %v346, %v1677
    %v1679 = vpop.f32.mrb[0].mxu0
    %v1680 = vpop.f32.mrb[0].mxu0
    %v1681 = vadd.f32 %v346, %v1680
    %v1682 = vpop.f32.mrb[0].mxu0
    %1683 = vmatprep.mubr.bf16.mxu0 0
    %1684 = vmatmul.mubr.bf16.gmra.mrb[0].mxu0 %v1098
    %v1685 = vpop.f32.mrb[0].mxu0
    %v1686 = vadd.f32 %v346, %v1685
    %v1687 = vpop.f32.mrb[0].mxu0
    %v1688 = vpop.f32.mrb[0].mxu0
    %v1689 = vadd.f32 %v346, %v1688
    %v1690 = vpop.f32.mrb[0].mxu0
    %1691 = vmatprep.mubr.bf16.mxu0 0
    %1692 = vmatmul.mubr.bf16.gmra.mrb[0].mxu0 %v1101
    %v1693 = vpop.f32.mrb[0].mxu0
    %v1694 = vadd.f32 %v346, %v1693
    %v1695 = vpop.f32.mrb[0].mxu0
    %v1696 = vpop.f32.mrb[0].mxu0
    %v1697 = vadd.f32 %v346, %v1696
    %v1698 = vpop.f32.mrb[0].mxu0
    %1699 = vmatprep.mubr.bf16.mxu0 0
    %1700 = vmatmul.mubr.bf16.gmra.mrb[0].mxu0 %v1104
    %v1701 = vpop.f32.mrb[0].mxu0
    %v1702 = vadd.f32 %v346, %v1701
    %v1703 = vpop.f32.mrb[0].mxu0
    %v1704 = vpop.f32.mrb[0].mxu0
    %v1705 = vadd.f32 %v346, %v1704
    %v1706 = vpop.f32.mrb[0].mxu0
    %1707 = vmatprep.mubr.bf16.mxu0 0
    %1708 = vmatmul.mubr.bf16.gmra.mrb[0].mxu0 %v1107
    %v1709 = vpop.f32.mrb[0].mxu0
    %v1710 = vadd.f32 %v346, %v1709
    %v1711 = vpop.f32.mrb[0].mxu0
    %v1712 = vpop.f32.mrb[0].mxu0
    %v1713 = vadd.f32 %v346, %v1712
    %v1714 = vpop.f32.mrb[0].mxu0
    %1715 = vmatprep.mubr.bf16.mxu0 0
    %1716 = vmatmul.mubr.bf16.gmra.mrb[0].mxu0 %v1110
    %v1717 = vpop.f32.mrb[0].mxu0
    %v1718 = vadd.f32 %v346, %v1717
    %v1719 = vpop.f32.mrb[0].mxu0
    %v1720 = vpop.f32.mrb[0].mxu0
    %v1721 = vadd.f32 %v346, %v1720
    %v1722 = vpop.f32.mrb[0].mxu0
    %1723 = vmatprep.mubr.bf16.mxu0 0
    %1724 = vmatmul.mubr.bf16.gmra.mrb[0].mxu0 %v1113
    %v1725 = vpop.f32.mrb[0].mxu0
    %v1726 = vadd.f32 %v346, %v1725
    %v1727 = vpop.f32.mrb[0].mxu0
    %v1728 = vpop.f32.mrb[0].mxu0
    %v1729 = vadd.f32 %v346, %v1728
    %v1730 = vpop.f32.mrb[0].mxu0
    %1731 = vmatprep.mubr.bf16.mxu0 0
    %1732 = vmatmul.mubr.bf16.gmra.mrb[0].mxu0 %v1116
    %v1733 = vpop.f32.mrb[0].mxu0
    %v1734 = vadd.f32 %v346, %v1733
    %v1735 = vpop.f32.mrb[0].mxu0
    %v1736 = vpop.f32.mrb[0].mxu0
    %v1737 = vadd.f32 %v346, %v1736
    %v1738 = vpop.f32.mrb[0].mxu0
    %1739 = vmatprep.mubr.bf16.mxu0 0
    %1740 = vmatmul.mubr.bf16.gmra.mrb[0].mxu0 %v1119
    %v1741 = vpop.f32.mrb[0].mxu0
    %v1742 = vadd.f32 %v346, %v1741
    %v1743 = vpop.f32.mrb[0].mxu0
    %v1744 = vpop.f32.mrb[0].mxu0
    %v1745 = vadd.f32 %v346, %v1744
    %v1746 = vpop.f32.mrb[0].mxu0
    %1747 = vmatprep.mubr.bf16.mxu0 0
    %1748 = vmatmul.mubr.bf16.gmra.mrb[0].mxu0 %v1122
    %v1749 = vpop.f32.mrb[0].mxu0
    %v1750 = vadd.f32 %v346, %v1749
    %v1751 = vpop.f32.mrb[0].mxu0
    %v1752 = vpop.f32.mrb[0].mxu0
    %v1753 = vadd.f32 %v346, %v1752
    %v1754 = vpop.f32.mrb[0].mxu0
    %1755 = vmatprep.mubr.bf16.mxu0 0
    %1756 = vmatmul.mubr.bf16.gmra.mrb[0].mxu0 %v1125
    %v1757 = vpop.f32.mrb[0].mxu0
    %v1758 = vadd.f32 %v346, %v1757
    %v1759 = vpop.f32.mrb[0].mxu0
    %v1760 = vpop.f32.mrb[0].mxu0
    %v1761 = vadd.f32 %v346, %v1760
    %v1762 = vpop.f32.mrb[0].mxu0
    %1763 = vmatprep.mubr.bf16.mxu0 0
    %1764 = vmatmul.mubr.bf16.gmra.mrb[0].mxu0 %v1128
    %v1765 = vpop.f32.mrb[0].mxu0
    %v1766 = vadd.f32 %v346, %v1765
    %v1767 = vpop.f32.mrb[0].mxu0
    %v1768 = vpop.f32.mrb[0].mxu0
    %v1769 = vadd.f32 %v346, %v1768
    %v1770 = vpop.f32.mrb[0].mxu0
    %1771 = vmatprep.mubr.bf16.mxu0 0
    %1772 = vmatmul.mubr.bf16.gmra.mrb[0].mxu0 %v1131
    %v1773 = vpop.f32.mrb[0].mxu0
    %v1774 = vadd.f32 %v346, %v1773
    %v1775 = vpop.f32.mrb[0].mxu0
    %v1776 = vpop.f32.mrb[0].mxu0
    %v1777 = vadd.f32 %v346, %v1776
    %v1778 = vpop.f32.mrb[0].mxu0
    %1779 = vmatprep.mubr.bf16.mxu0 0
    %1780 = vmatmul.mubr.bf16.gmra.mrb[0].mxu0 %v1134
    %v1781 = vpop.f32.mrb[0].mxu0
    %v1782 = vadd.f32 %v346, %v1781
    %v1783 = vpop.f32.mrb[0].mxu0
    %v1784 = vpop.f32.mrb[0].mxu0
    %v1785 = vadd.f32 %v346, %v1784
    %v1786 = vpop.f32.mrb[0].mxu0
    %1787 = vmatprep.mubr.bf16.mxu0 0
    %1788 = vmatmul.mubr.bf16.gmra.mrb[0].mxu0 %v1137
    %v1789 = vpop.f32.mrb[0].mxu0
    %v1790 = vadd.f32 %v346, %v1789
    %v1791 = vpop.f32.mrb[0].mxu0
    %v1792 = vpop.f32.mrb[0].mxu0
    %v1793 = vadd.f32 %v346, %v1792
    %v1794 = vpop.f32.mrb[0].mxu0
    %1795 = vmatprep.mubr.bf16.mxu0 0
    %1796 = vmatmul.mubr.bf16.gmra.mrb[0].mxu0 %v1140
    %v1797 = vpop.f32.mrb[0].mxu0
    %v1798 = vadd.f32 %v346, %v1797
    %v1799 = vpop.f32.mrb[0].mxu0
    %v1800 = vpop.f32.mrb[0].mxu0
    %v1801 = vadd.f32 %v346, %v1800
    %v1802 = vpop.f32.mrb[0].mxu0
    %1803 = vmatprep.mubr.bf16.mxu0 0
    %1804 = vmatmul.mubr.bf16.gmra.mrb[0].mxu0 %v1143
    %v1805 = vpop.f32.mrb[0].mxu0
    %v1806 = vadd.f32 %v346, %v1805
    %v1807 = vpop.f32.mrb[0].mxu0
    %v1808 = vpop.f32.mrb[0].mxu0
    %v1809 = vadd.f32 %v346, %v1808
    %v1810 = vpop.f32.mrb[0].mxu0
    %1811 = vmatprep.mubr.bf16.mxu0 0
    %1812 = vmatmul.mubr.bf16.gmra.mrb[0].mxu0 %v1146
    %v1813 = vpop.f32.mrb[0].mxu0
    %v1814 = vadd.f32 %v346, %v1813
    %v1815 = vpop.f32.mrb[0].mxu0
    %v1816 = vpop.f32.mrb[0].mxu0
    %v1817 = vadd.f32 %v346, %v1816
    %v1818 = vpop.f32.mrb[0].mxu0
    %1819 = vmatprep.mubr.bf16.mxu0 0
    %1820 = vmatmul.mubr.bf16.gmra.mrb[0].mxu0 %v1149
    %v1821 = vpop.f32.mrb[0].mxu0
    %v1822 = vadd.f32 %v346, %v1821
    %v1823 = vpop.f32.mrb[0].mxu0
    %v1824 = vpop.f32.mrb[0].mxu0
    %v1825 = vadd.f32 %v346, %v1824
    %v1826 = vpop.f32.mrb[0].mxu0
    %1827 = vmatprep.mubr.bf16.mxu0 0
    %1828 = vmatmul.mubr.bf16.gmra.mrb[0].mxu0 %v1152
    %v1829 = vpop.f32.mrb[0].mxu0
    %v1830 = vadd.f32 %v346, %v1829
    %v1831 = vpop.f32.mrb[0].mxu0
    %v1832 = vpop.f32.mrb[0].mxu0
    %v1833 = vadd.f32 %v346, %v1832
    %v1834 = vpop.f32.mrb[0].mxu0
    %1835 = vmatprep.mubr.bf16.mxu0 0
    %1836 = vmatmul.mubr.bf16.gmra.mrb[0].mxu0 %v1155
    %v1837 = vpop.f32.mrb[0].mxu0
    %v1838 = vadd.f32 %v346, %v1837
    %v1839 = vpop.f32.mrb[0].mxu0
    %v1840 = vpop.f32.mrb[0].mxu0
    %v1841 = vadd.f32 %v346, %v1840
    %v1842 = vpop.f32.mrb[0].mxu0
    %1843 = vmatprep.mubr.bf16.mxu0 0
    %1844 = vmatmul.mubr.bf16.gmra.mrb[0].mxu0 %v1158
    %v1845 = vpop.f32.mrb[0].mxu0
    %v1846 = vadd.f32 %v346, %v1845
    %v1847 = vpop.f32.mrb[0].mxu0
    %v1848 = vpop.f32.mrb[0].mxu0
    %v1849 = vadd.f32 %v346, %v1848
    %v1850 = vpop.f32.mrb[0].mxu0
    %1851 = vmatprep.mubr.bf16.mxu0 0
    %1852 = vmatmul.mubr.bf16.gmra.mrb[0].mxu0 %v1161
    %v1853 = vpop.f32.mrb[0].mxu0
    %v1854 = vadd.f32 %v346, %v1853
    %v1855 = vpop.f32.mrb[0].mxu0
    %v1856 = vpop.f32.mrb[0].mxu0
    %v1857 = vadd.f32 %v346, %v1856
    %v1858 = vpop.f32.mrb[0].mxu0
    %1859 = vmatprep.mubr.bf16.mxu0 0
    %1860 = vmatmul.mubr.bf16.gmra.mrb[0].mxu0 %v1164
    %v1861 = vpop.f32.mrb[0].mxu0
    %v1862 = vadd.f32 %v346, %v1861
    %v1863 = vpop.f32.mrb[0].mxu0
    %v1864 = vpop.f32.mrb[0].mxu0
    %v1865 = vadd.f32 %v346, %v1864
    %v1866 = vpop.f32.mrb[0].mxu0
    %1867 = vmatprep.mubr.bf16.mxu0 0
    %1868 = vmatmul.mubr.bf16.gmra.mrb[0].mxu0 %v1167
    %v1869 = vpop.f32.mrb[0].mxu0
    %v1870 = vadd.f32 %v346, %v1869
    %v1871 = vpop.f32.mrb[0].mxu0
    %v1872 = vpop.f32.mrb[0].mxu0
    %v1873 = vadd.f32 %v346, %v1872
    %v1874 = vpop.f32.mrb[0].mxu0
    %1875 = vmatprep.mubr.bf16.mxu0 0
    %1876 = vmatmul.mubr.bf16.gmra.mrb[0].mxu0 %v1170
    %v1877 = vpop.f32.mrb[0].mxu0
    %v1878 = vadd.f32 %v346, %v1877
    %v1879 = vpop.f32.mrb[0].mxu0
    %v1880 = vpop.f32.mrb[0].mxu0
    %v1881 = vadd.f32 %v346, %v1880
    %v1882 = vpop.f32.mrb[0].mxu0
    %1883 = vmatprep.mubr.bf16.mxu0 0
    %1884 = vmatmul.mubr.bf16.gmra.mrb[0].mxu0 %v1173
    %v1885 = vpop.f32.mrb[0].mxu0
    %v1886 = vadd.f32 %v346, %v1885
    %v1887 = vpop.f32.mrb[0].mxu0
    %v1888 = vpop.f32.mrb[0].mxu0
    %v1889 = vadd.f32 %v346, %v1888
    %v1890 = vpop.f32.mrb[0].mxu0
    %1891 = vmatprep.mubr.bf16.mxu0 0
    %1892 = vmatmul.mubr.bf16.gmra.mrb[0].mxu0 %v1176
    %v1893 = vpop.f32.mrb[0].mxu0
    %v1894 = vadd.f32 %v346, %v1893
    %v1895 = vpop.f32.mrb[0].mxu0
    %v1896 = vpop.f32.mrb[0].mxu0
    %v1897 = vadd.f32 %v346, %v1896
    %v1898 = vpop.f32.mrb[0].mxu0
    %1899 = vmatprep.mubr.bf16.mxu0 0
    %1900 = vmatmul.mubr.bf16.gmra.mrb[0].mxu0 %v1179
    %v1901 = vpop.f32.mrb[0].mxu0
    %v1902 = vadd.f32 %v346, %v1901
    %v1903 = vpop.f32.mrb[0].mxu0
    %v1904 = vpop.f32.mrb[0].mxu0
    %v1905 = vadd.f32 %v346, %v1904
    %v1906 = vpop.f32.mrb[0].mxu0
    %1907 = vmatprep.mubr.bf16.mxu0 0
    %1908 = vmatmul.mubr.bf16.gmra.mrb[0].mxu0 %v1182
    %v1909 = vpop.f32.mrb[0].mxu0
    %v1910 = vadd.f32 %v346, %v1909
    %v1911 = vpop.f32.mrb[0].mxu0
    %v1912 = vpop.f32.mrb[0].mxu0
    %v1913 = vadd.f32 %v346, %v1912
    %v1914 = vpop.f32.mrb[0].mxu0
    %1915 = vmatprep.mubr.bf16.mxu0 0
    %1916 = vmatmul.mubr.bf16.gmra.mrb[0].mxu0 %v1185
    %v1917 = vpop.f32.mrb[0].mxu0
    %v1918 = vadd.f32 %v346, %v1917
    %v1919 = vpop.f32.mrb[0].mxu0
    %v1920 = vpop.f32.mrb[0].mxu0
    %v1921 = vadd.f32 %v346, %v1920
    %v1922 = vpop.f32.mrb[0].mxu0
    %1923 = vmatprep.mubr.bf16.mxu0 0
    %1924 = vmatmul.mubr.bf16.gmra.mrb[0].mxu0 %v1188
    %v1925 = vpop.f32.mrb[0].mxu0
    %v1926 = vadd.f32 %v346, %v1925
    %v1927 = vpop.f32.mrb[0].mxu0
    %v1928 = vpop.f32.mrb[0].mxu0
    %v1929 = vadd.f32 %v346, %v1928
    %v1930 = vpop.f32.mrb[0].mxu0
    %1931 = vmatprep.mubr.bf16.mxu0 0
    %1932 = vmatmul.mubr.bf16.gmra.mrb[0].mxu0 %v1191
    %v1933 = vpop.f32.mrb[0].mxu0
    %v1934 = vadd.f32 %v346, %v1933
    %v1935 = vpop.f32.mrb[0].mxu0
    %v1936 = vpop.f32.mrb[0].mxu0
    %v1937 = vadd.f32 %v346, %v1936
    %v1938 = vpop.f32.mrb[0].mxu0
    %1939 = vmatprep.mubr.bf16.mxu0 0
    %1940 = vmatmul.mubr.bf16.gmra.mrb[0].mxu0 %v1194
    %v1941 = vpop.f32.mrb[0].mxu0
    %v1942 = vadd.f32 %v346, %v1941
    %v1943 = vpop.f32.mrb[0].mxu0
    %v1944 = vpop.f32.mrb[0].mxu0
    %v1945 = vadd.f32 %v346, %v1944
    %v1946 = vpop.f32.mrb[0].mxu0
    %1947 = vmatprep.mubr.bf16.mxu0 0
    %1948 = vmatmul.mubr.bf16.gmra.mrb[0].mxu0 %v1197
    %v1949 = vpop.f32.mrb[0].mxu0
    %v1950 = vadd.f32 %v346, %v1949
    %v1951 = vpop.f32.mrb[0].mxu0
    %v1952 = vpop.f32.mrb[0].mxu0
    %v1953 = vadd.f32 %v346, %v1952
    %v1954 = vpop.f32.mrb[0].mxu0
    %1955 = vmatprep.mubr.bf16.mxu0 0
    %1956 = vmatmul.mubr.bf16.gmra.mrb[0].mxu0 %v1200
    %v1957 = vpop.f32.mrb[0].mxu0
    %v1958 = vadd.f32 %v346, %v1957
    %v1959 = vpop.f32.mrb[0].mxu0
    %v1960 = vpop.f32.mrb[0].mxu0
    %v1961 = vadd.f32 %v346, %v1960
    %v1962 = vpop.f32.mrb[0].mxu0
    %1963 = vmatprep.mubr.bf16.mxu0 0
    %1964 = vmatmul.mubr.bf16.gmra.mrb[0].mxu0 %v1203
    %v1965 = vpop.f32.mrb[0].mxu0
    %v1966 = vadd.f32 %v346, %v1965
    %v1967 = vpop.f32.mrb[0].mxu0
    %v1968 = vpop.f32.mrb[0].mxu0
    %v1969 = vadd.f32 %v346, %v1968
    %v1970 = vpop.f32.mrb[0].mxu0
    %1971 = vmatprep.mubr.bf16.mxu0 0
    %1972 = vmatmul.mubr.bf16.gmra.mrb[0].mxu0 %v1206
    %v1973 = vpop.f32.mrb[0].mxu0
    %v1974 = vadd.f32 %v346, %v1973
    %v1975 = vpop.f32.mrb[0].mxu0
    %v1976 = vpop.f32.mrb[0].mxu0
    %v1977 = vadd.f32 %v346, %v1976
    %v1978 = vpop.f32.mrb[0].mxu0
    %1979 = vmatprep.mubr.bf16.mxu0 0
    %1980 = vmatmul.mubr.bf16.gmra.mrb[0].mxu0 %v1209
    %v1981 = vpop.f32.mrb[0].mxu0
    %v1982 = vadd.f32 %v346, %v1981
    %v1983 = vpop.f32.mrb[0].mxu0
    %v1984 = vpop.f32.mrb[0].mxu0
    %v1985 = vadd.f32 %v346, %v1984
    %v1986 = vpop.f32.mrb[0].mxu0
    %1987 = vmatprep.mubr.bf16.mxu0 0
    %1988 = vmatmul.mubr.bf16.gmra.mrb[0].mxu0 %v1212
    %v1989 = vpop.f32.mrb[0].mxu0
    %v1990 = vadd.f32 %v346, %v1989
    %v1991 = vpop.f32.mrb[0].mxu0
    %v1992 = vpop.f32.mrb[0].mxu0
    %v1993 = vadd.f32 %v346, %v1992
    %v1994 = vpop.f32.mrb[0].mxu0
    %1995 = vmatprep.mubr.bf16.mxu0 0
    %1996 = vmatmul.mubr.bf16.gmra.mrb[0].mxu0 %v1215
    %v1997 = vpop.f32.mrb[0].mxu0
    %v1998 = vadd.f32 %v346, %v1997
    %v1999 = vpop.f32.mrb[0].mxu0
    %v2000 = vpop.f32.mrb[0].mxu0
    %v2001 = vadd.f32 %v346, %v2000
    %v2002 = vpop.f32.mrb[0].mxu0
    %2003 = vmatprep.mubr.bf16.mxu0 0
    %2004 = vmatmul.mubr.bf16.gmra.mrb[0].mxu0 %v1218
    %v2005 = vpop.f32.mrb[0].mxu0
    %v2006 = vadd.f32 %v346, %v2005
    %v2007 = vpop.f32.mrb[0].mxu0
    %v2008 = vpop.f32.mrb[0].mxu0
    %v2009 = vadd.f32 %v346, %v2008
    %v2010 = vpop.f32.mrb[0].mxu0
    %2011 = vmatprep.mubr.bf16.mxu0 0
    %2012 = vmatmul.mubr.bf16.gmra.mrb[0].mxu0 %v1221
    %v2013 = vpop.f32.mrb[0].mxu0
    %v2014 = vadd.f32 %v346, %v2013
    %v2015 = vpop.f32.mrb[0].mxu0
    %v2016 = vpop.f32.mrb[0].mxu0
    %v2017 = vadd.f32 %v346, %v2016
    %v2018 = vpop.f32.mrb[0].mxu0
    %2019 = vmatprep.mubr.bf16.mxu0 0
    %2020 = vmatmul.mubr.bf16.gmra.mrb[0].mxu0 %v1224
    %v2021 = vpop.f32.mrb[0].mxu0
    %v2022 = vadd.f32 %v346, %v2021
    %v2023 = vpop.f32.mrb[0].mxu0
    %v2024 = vpop.f32.mrb[0].mxu0
    %v2025 = vadd.f32 %v346, %v2024
    %v2026 = vpop.f32.mrb[0].mxu0
    %2027 = vmatprep.mubr.bf16.mxu0 0
    %2028 = vmatmul.mubr.bf16.gmra.mrb[0].mxu0 %v1227
    %v2029 = vpop.f32.mrb[0].mxu0
    %v2030 = vadd.f32 %v346, %v2029
    %v2031 = vpop.f32.mrb[0].mxu0
    %v2032 = vpop.f32.mrb[0].mxu0
    %v2033 = vadd.f32 %v346, %v2032
    %v2034 = vpop.f32.mrb[0].mxu0
    %2035 = vmatprep.mubr.bf16.mxu0 0
    %2036 = vmatmul.mubr.bf16.gmra.mrb[0].mxu0 %v1230
    %v2037 = vpop.f32.mrb[0].mxu0
    %v2038 = vadd.f32 %v346, %v2037
    %v2039 = vpop.f32.mrb[0].mxu0
    %v2040 = vpop.f32.mrb[0].mxu0
    %v2041 = vadd.f32 %v346, %v2040
    %v2042 = vpop.f32.mrb[0].mxu0
    %2043 = vmatprep.mubr.bf16.mxu0 0
    %2044 = vmatmul.mubr.bf16.gmra.mrb[0].mxu0 %v1233
    %v2045 = vpop.f32.mrb[0].mxu0
    %v2046 = vadd.f32 %v346, %v2045
    %v2047 = vpop.f32.mrb[0].mxu0
    %v2048 = vpop.f32.mrb[0].mxu0
    %v2049 = vadd.f32 %v346, %v2048
    %v2050 = vpop.f32.mrb[0].mxu0
    %2051 = vmatprep.mubr.bf16.mxu0 0
    %2052 = vmatmul.mubr.bf16.gmra.mrb[0].mxu0 %v1236
    %v2053 = vpop.f32.mrb[0].mxu0
    %v2054 = vadd.f32 %v346, %v2053
    %v2055 = vpop.f32.mrb[0].mxu0
    %v2056 = vpop.f32.mrb[0].mxu0
    %v2057 = vadd.f32 %v346, %v2056
    %v2058 = vpop.f32.mrb[0].mxu0
    %2059 = vmatprep.mubr.bf16.mxu0 0
    %2060 = vmatmul.mubr.bf16.gmra.mrb[0].mxu0 %v1239
    %v2061 = vpop.f32.mrb[0].mxu0
    %v2062 = vadd.f32 %v346, %v2061
    %v2063 = vpop.f32.mrb[0].mxu0
    %v2064 = vpop.f32.mrb[0].mxu0
    %v2065 = vadd.f32 %v346, %v2064
    %v2066 = vpop.f32.mrb[0].mxu0
    %2067 = vmatprep.mubr.bf16.mxu0 0
    %2068 = vmatmul.mubr.bf16.gmra.mrb[0].mxu0 %v1242
    %v2069 = vpop.f32.mrb[0].mxu0
    %v2070 = vadd.f32 %v346, %v2069
    %v2071 = vpop.f32.mrb[0].mxu0
    %v2072 = vpop.f32.mrb[0].mxu0
    %v2073 = vadd.f32 %v346, %v2072
    %v2074 = vpop.f32.mrb[0].mxu0
    %2075 = vmatprep.mubr.bf16.mxu0 0
    %2076 = vmatmul.mubr.bf16.gmra.mrb[0].mxu0 %v1245
    %v2077 = vpop.f32.mrb[0].mxu0
    %v2078 = vadd.f32 %v346, %v2077
    %v2079 = vpop.f32.mrb[0].mxu0
    %v2080 = vpop.f32.mrb[0].mxu0
    %v2081 = vadd.f32 %v346, %v2080
    %v2082 = vpop.f32.mrb[0].mxu0
    %2083 = vmatprep.mubr.bf16.mxu0 0
    %2084 = vmatmul.mubr.bf16.gmra.mrb[0].mxu0 %v1248
    %v2085 = vpop.f32.mrb[0].mxu0
    %v2086 = vadd.f32 %v346, %v2085
    %v2087 = vpop.f32.mrb[0].mxu0
    %v2088 = vpop.f32.mrb[0].mxu0
    %v2089 = vadd.f32 %v346, %v2088
    %v2090 = vpop.f32.mrb[0].mxu0
    %2091 = vmatprep.mubr.bf16.mxu0 0
    %2092 = vmatmul.mubr.bf16.gmra.mrb[0].mxu0 %v1251
    %v2093 = vpop.f32.mrb[0].mxu0
    %v2094 = vadd.f32 %v346, %v2093
    %v2095 = vpop.f32.mrb[0].mxu0
    %v2096 = vpop.f32.mrb[0].mxu0
    %v2097 = vadd.f32 %v346, %v2096
    %v2098 = vpop.f32.mrb[0].mxu0
    %2099 = vmatprep.mubr.bf16.mxu0 0
    %2100 = vmatmul.mubr.bf16.gmra.mrb[0].mxu0 %v1254
    %v2101 = vpop.f32.mrb[0].mxu0
    %v2102 = vadd.f32 %v346, %v2101
    %v2103 = vpop.f32.mrb[0].mxu0
    %v2104 = vpop.f32.mrb[0].mxu0
    %v2105 = vadd.f32 %v346, %v2104
    %v2106 = vpop.f32.mrb[0].mxu0
    %2107 = vmatprep.mubr.bf16.mxu0 0
    %2108 = vmatmul.mubr.bf16.gmra.mrb[0].mxu0 %v1257
    %v2109 = vpop.f32.mrb[0].mxu0
    %v2110 = vadd.f32 %v346, %v2109
    %v2111 = vpop.f32.mrb[0].mxu0
    %v2112 = vpop.f32.mrb[0].mxu0
    %v2113 = vadd.f32 %v346, %v2112
    %v2114 = vpop.f32.mrb[0].mxu0
    %2115 = vmatprep.mubr.bf16.mxu0 0
    %2116 = vmatmul.mubr.bf16.gmra.mrb[0].mxu0 %v1260
    %v2117 = vpop.f32.mrb[0].mxu0
    %v2118 = vadd.f32 %v346, %v2117
    %v2119 = vpop.f32.mrb[0].mxu0
    %v2120 = vpop.f32.mrb[0].mxu0
    %v2121 = vadd.f32 %v346, %v2120
    %v2122 = vpop.f32.mrb[0].mxu0
    %2123 = vmatprep.mubr.bf16.mxu0 0
    %2124 = vmatmul.mubr.bf16.gmra.mrb[0].mxu0 %v1263
    %v2125 = vpop.f32.mrb[0].mxu0
    %v2126 = vadd.f32 %v346, %v2125
    %v2127 = vpop.f32.mrb[0].mxu0
    %v2128 = vpop.f32.mrb[0].mxu0
    %v2129 = vadd.f32 %v346, %v2128
    %v2130 = vpop.f32.mrb[0].mxu0
    %2131 = vmatprep.mubr.bf16.mxu0 0
    %2132 = vmatmul.mubr.bf16.gmra.mrb[0].mxu0 %v1266
    %v2133 = vpop.f32.mrb[0].mxu0
    %v2134 = vadd.f32 %v346, %v2133
    %v2135 = vpop.f32.mrb[0].mxu0
    %v2136 = vpop.f32.mrb[0].mxu0
    %v2137 = vadd.f32 %v346, %v2136
    %v2138 = vpop.f32.mrb[0].mxu0
    %2139 = vmatprep.mubr.bf16.mxu0 0
    %2140 = vmatmul.mubr.bf16.gmra.mrb[0].mxu0 %v1269
    %v2141 = vpop.f32.mrb[0].mxu0
    %v2142 = vadd.f32 %v346, %v2141
    %v2143 = vpop.f32.mrb[0].mxu0
    %v2144 = vpop.f32.mrb[0].mxu0
    %v2145 = vadd.f32 %v346, %v2144
    %v2146 = vpop.f32.mrb[0].mxu0
    %2147 = vmatprep.mubr.bf16.mxu0 0
    %2148 = vmatmul.mubr.bf16.gmra.mrb[0].mxu0 %v1272
    %v2149 = vpop.f32.mrb[0].mxu0
    %v2150 = vadd.f32 %v346, %v2149
    %v2151 = vpop.f32.mrb[0].mxu0
    %v2152 = vpop.f32.mrb[0].mxu0
    %v2153 = vadd.f32 %v346, %v2152
    %v2154 = vpop.f32.mrb[0].mxu0
    %2155 = vmatprep.mubr.bf16.mxu0 0
    %2156 = vmatmul.mubr.bf16.gmra.mrb[0].mxu0 %v1275
    %v2157 = vpop.f32.mrb[0].mxu0
    %v2158 = vadd.f32 %v346, %v2157
    %v2159 = vpop.f32.mrb[0].mxu0
    %v2160 = vpop.f32.mrb[0].mxu0
    %v2161 = vadd.f32 %v346, %v2160
    %v2162 = vpop.f32.mrb[0].mxu0
    %2163 = vmatprep.mubr.bf16.mxu0 0
    %2164 = vmatmul.mubr.bf16.gmra.mrb[0].mxu0 %v1278
    %v2165 = vpop.f32.mrb[0].mxu0
    %v2166 = vadd.f32 %v346, %v2165
    %v2167 = vpop.f32.mrb[0].mxu0
    %v2168 = vpop.f32.mrb[0].mxu0
    %v2169 = vadd.f32 %v346, %v2168
    %v2170 = vpop.f32.mrb[0].mxu0
    %2171 = vmatprep.mubr.bf16.mxu0 0
    %2172 = vmatmul.mubr.bf16.gmra.mrb[0].mxu0 %v1281
    %v2173 = vpop.f32.mrb[0].mxu0
    %v2174 = vadd.f32 %v346, %v2173
    %v2175 = vpop.f32.mrb[0].mxu0
    %v2176 = vpop.f32.mrb[0].mxu0
    %v2177 = vadd.f32 %v346, %v2176
    %v2178 = vpop.f32.mrb[0].mxu0
    %2179 = vmatprep.mubr.bf16.mxu0 0
    %2180 = vmatmul.mubr.bf16.gmra.mrb[0].mxu0 %v1284
    %v2181 = vpop.f32.mrb[0].mxu0
    %v2182 = vadd.f32 %v346, %v2181
    %v2183 = vpop.f32.mrb[0].mxu0
    %v2184 = vpop.f32.mrb[0].mxu0
    %v2185 = vadd.f32 %v346, %v2184
    %v2186 = vpop.f32.mrb[0].mxu0
    %2187 = vmatprep.mubr.bf16.mxu0 0
    %2188 = vmatmul.mubr.bf16.gmra.mrb[0].mxu0 %v1287
    %v2189 = vpop.f32.mrb[0].mxu0
    %v2190 = vadd.f32 %v346, %v2189
    %v2191 = vpop.f32.mrb[0].mxu0
    %v2192 = vpop.f32.mrb[0].mxu0
    %v2193 = vadd.f32 %v346, %v2192
    %v2194 = vpop.f32.mrb[0].mxu0
    %2195 = vmatprep.mubr.bf16.mxu0 0
    %2196 = vmatmul.mubr.bf16.gmra.mrb[0].mxu0 %v1290
    %v2197 = vpop.f32.mrb[0].mxu0
    %v2198 = vadd.f32 %v346, %v2197
    %v2199 = vpop.f32.mrb[0].mxu0
    %v2200 = vpop.f32.mrb[0].mxu0
    %v2201 = vadd.f32 %v346, %v2200
    %v2202 = vpop.f32.mrb[0].mxu0
    %2203 = vmatprep.mubr.bf16.mxu0 0
    %2204 = vmatmul.mubr.bf16.gmra.mrb[0].mxu0 %v1293
    %v2205 = vpop.f32.mrb[0].mxu0
    %v2206 = vadd.f32 %v346, %v2205
    %v2207 = vpop.f32.mrb[0].mxu0
    %v2208 = vpop.f32.mrb[0].mxu0
    %v2209 = vadd.f32 %v346, %v2208
    %v2210 = vpop.f32.mrb[0].mxu0
    %2211 = vmatprep.mubr.bf16.mxu0 0
    %2212 = vmatmul.mubr.bf16.gmra.mrb[0].mxu0 %v1296
    %v2213 = vpop.f32.mrb[0].mxu0
    %v2214 = vadd.f32 %v346, %v2213
    %v2215 = vpop.f32.mrb[0].mxu0
    %v2216 = vpop.f32.mrb[0].mxu0
    %v2217 = vadd.f32 %v346, %v2216
    %v2218 = vpop.f32.mrb[0].mxu0
    %2219 = vmatprep.mubr.bf16.mxu0 0
    %2220 = vmatmul.mubr.bf16.gmra.mrb[0].mxu0 %v1299
    %v2221 = vpop.f32.mrb[0].mxu0
    %v2222 = vadd.f32 %v346, %v2221
    %v2223 = vpop.f32.mrb[0].mxu0
    %v2224 = vpop.f32.mrb[0].mxu0
    %v2225 = vadd.f32 %v346, %v2224
    %v2226 = vpop.f32.mrb[0].mxu0
    %2227 = vmatprep.mubr.bf16.mxu0 0
    %2228 = vmatmul.mubr.bf16.gmra.mrb[0].mxu0 %v1302
    %v2229 = vpop.f32.mrb[0].mxu0
    %v2230 = vadd.f32 %v346, %v2229
    %v2231 = vpop.f32.mrb[0].mxu0
    %v2232 = vpop.f32.mrb[0].mxu0
    %v2233 = vadd.f32 %v346, %v2232
    %v2234 = vpop.f32.mrb[0].mxu0
    %2235 = vmatprep.mubr.bf16.mxu0 0
    %2236 = vmatmul.mubr.bf16.gmra.mrb[0].mxu0 %v1305
    %v2237 = vpop.f32.mrb[0].mxu0
    %v2238 = vadd.f32 %v346, %v2237
    %v2239 = vpop.f32.mrb[0].mxu0
    %v2240 = vpop.f32.mrb[0].mxu0
    %v2241 = vadd.f32 %v346, %v2240
    %v2242 = vpop.f32.mrb[0].mxu0
    %2243 = vmatprep.mubr.bf16.mxu0 0
    %2244 = vmatmul.mubr.bf16.gmra.mrb[0].mxu0 %v1308
    %v2245 = vpop.f32.mrb[0].mxu0
    %v2246 = vadd.f32 %v346, %v2245
    %v2247 = vpop.f32.mrb[0].mxu0
    %v2248 = vpop.f32.mrb[0].mxu0
    %v2249 = vadd.f32 %v346, %v2248
    %v2250 = vpop.f32.mrb[0].mxu0
    %2251 = vmatprep.mubr.bf16.mxu0 0
    %2252 = vmatmul.mubr.bf16.gmra.mrb[0].mxu0 %v1311
    %v2253 = vpop.f32.mrb[0].mxu0
    %v2254 = vadd.f32 %v346, %v2253
    %v2255 = vpop.f32.mrb[0].mxu0
    %v2256 = vpop.f32.mrb[0].mxu0
    %v2257 = vadd.f32 %v346, %v2256
    %v2258 = vpop.f32.mrb[0].mxu0
    %2259 = vmatprep.mubr.bf16.mxu0 0
    %2260 = vmatmul.mubr.bf16.gmra.mrb[0].mxu0 %v1314
    %v2261 = vpop.f32.mrb[0].mxu0
    %v2262 = vadd.f32 %v346, %v2261
    %v2263 = vpop.f32.mrb[0].mxu0
    %v2264 = vpop.f32.mrb[0].mxu0
    %v2265 = vadd.f32 %v346, %v2264
    %v2266 = vpop.f32.mrb[0].mxu0
    %2267 = vmatprep.mubr.bf16.mxu0 0
    %2268 = vmatmul.mubr.bf16.gmra.mrb[0].mxu0 %v1317
    %v2269 = vpop.f32.mrb[0].mxu0
    %v2270 = vadd.f32 %v346, %v2269
    %v2271 = vpop.f32.mrb[0].mxu0
    %v2272 = vpop.f32.mrb[0].mxu0
    %v2273 = vadd.f32 %v346, %v2272
    %v2274 = vpop.f32.mrb[0].mxu0
    %2275 = vmatprep.mubr.bf16.mxu0 0
    %2276 = vmatmul.mubr.bf16.gmra.mrb[0].mxu0 %v1320
    %v2277 = vpop.f32.mrb[0].mxu0
    %v2278 = vadd.f32 %v346, %v2277
    %v2279 = vpop.f32.mrb[0].mxu0
    %v2280 = vpop.f32.mrb[0].mxu0
    %v2281 = vadd.f32 %v346, %v2280
    %v2282 = vpop.f32.mrb[0].mxu0
    %2283 = vmatprep.mubr.bf16.mxu0 0
    %2284 = vmatmul.mubr.bf16.gmra.mrb[0].mxu0 %v1323
    %v2285 = vpop.f32.mrb[0].mxu0
    %v2286 = vadd.f32 %v346, %v2285
    %v2287 = vpop.f32.mrb[0].mxu0
    %v2288 = vpop.f32.mrb[0].mxu0
    %v2289 = vadd.f32 %v346, %v2288
    %v2290 = vpop.f32.mrb[0].mxu0
    %2291 = vmatprep.mubr.bf16.mxu0 0
    %2292 = vmatmul.mubr.bf16.gmra.mrb[0].mxu0 %v1326
    %v2293 = vpop.f32.mrb[0].mxu0
    %v2294 = vadd.f32 %v346, %v2293
    %v2295 = vpop.f32.mrb[0].mxu0
    %v2296 = vpop.f32.mrb[0].mxu0
    %v2297 = vadd.f32 %v346, %v2296
    %v2298 = vpop.f32.mrb[0].mxu0
    %2299 = vmatprep.mubr.bf16.mxu0 0
    %2300 = vmatmul.mubr.bf16.gmra.mrb[0].mxu0 %v1329
    %v2301 = vpop.f32.mrb[0].mxu0
    %v2302 = vadd.f32 %v346, %v2301
    %v2303 = vpop.f32.mrb[0].mxu0
    %v2304 = vpop.f32.mrb[0].mxu0
    %v2305 = vadd.f32 %v346, %v2304
    %v2306 = vpop.f32.mrb[0].mxu0
    %2307 = vmatprep.mubr.bf16.mxu0 0
    %2308 = vmatmul.mubr.bf16.gmra.mrb[0].mxu0 %v1332
    %v2309 = vpop.f32.mrb[0].mxu0
    %v2310 = vadd.f32 %v346, %v2309
    %v2311 = vpop.f32.mrb[0].mxu0
    %v2312 = vpop.f32.mrb[0].mxu0
    %v2313 = vadd.f32 %v346, %v2312
    %v2314 = vpop.f32.mrb[0].mxu0
    %2315 = vmatprep.mubr.bf16.mxu0 0
    %2316 = vmatmul.mubr.bf16.gmra.mrb[0].mxu0 %v1335
    %v2317 = vpop.f32.mrb[0].mxu0
    %v2318 = vadd.f32 %v346, %v2317
    %v2319 = vpop.f32.mrb[0].mxu0
    %v2320 = vpop.f32.mrb[0].mxu0
    %v2321 = vadd.f32 %v346, %v2320
    %v2322 = vpop.f32.mrb[0].mxu0
    %2323 = vmatprep.mubr.bf16.mxu0 0
    %2324 = vmatmul.mubr.bf16.gmra.mrb[0].mxu0 %v1338
    %v2325 = vpop.f32.mrb[0].mxu0
    %v2326 = vadd.f32 %v346, %v2325
    %v2327 = vpop.f32.mrb[0].mxu0
    %v2328 = vpop.f32.mrb[0].mxu0
    %v2329 = vadd.f32 %v346, %v2328
    %v2330 = vpop.f32.mrb[0].mxu0
    %2331 = vmatprep.mubr.bf16.mxu0 0
    %2332 = vmatmul.mubr.bf16.gmra.mrb[0].mxu0 %v1341
    %v2333 = vpop.f32.mrb[0].mxu0
    %v2334 = vadd.f32 %v346, %v2333
    %v2335 = vpop.f32.mrb[0].mxu0
    %v2336 = vpop.f32.mrb[0].mxu0
    %v2337 = vadd.f32 %v346, %v2336
    %v2338 = vpop.f32.mrb[0].mxu0
    %2339 = vmatprep.mubr.bf16.mxu0 0
    %2340 = vmatmul.mubr.bf16.gmra.mrb[0].mxu0 %v1344
    %v2341 = vpop.f32.mrb[0].mxu0
    %v2342 = vadd.f32 %v346, %v2341
    %v2343 = vpop.f32.mrb[0].mxu0
    %v2344 = vpop.f32.mrb[0].mxu0
    %v2345 = vadd.f32 %v346, %v2344
    %v2346 = vpop.f32.mrb[0].mxu0
    %2347 = vmatprep.mubr.bf16.mxu0 0
    %2348 = vmatmul.mubr.bf16.gmra.mrb[0].mxu0 %v1347
    %v2349 = vpop.f32.mrb[0].mxu0
    %v2350 = vadd.f32 %v346, %v2349
    %v2351 = vpop.f32.mrb[0].mxu0
    %v2352 = vpop.f32.mrb[0].mxu0
    %v2353 = vadd.f32 %v346, %v2352
    %v2354 = vpop.f32.mrb[0].mxu0
    %2355 = vmatprep.mubr.bf16.mxu0 0
    %2356 = vmatmul.mubr.bf16.gmra.mrb[0].mxu0 %v1350
    %v2357 = vpop.f32.mrb[0].mxu0
    %v2358 = vadd.f32 %v346, %v2357
    %v2359 = vpop.f32.mrb[0].mxu0
    %v2360 = vpop.f32.mrb[0].mxu0
    %v2361 = vadd.f32 %v346, %v2360
    %v2362 = vpop.f32.mrb[0].mxu0
    %2363 = vmatprep.mubr.bf16.mxu0 0
    %2364 = vmatmul.mubr.bf16.gmra.mrb[0].mxu0 %v1353
    %v2365 = vpop.f32.mrb[0].mxu0
    %v2366 = vadd.f32 %v346, %v2365
    %v2367 = vpop.f32.mrb[0].mxu0
    %v2368 = vpop.f32.mrb[0].mxu0
    %v2369 = vadd.f32 %v346, %v2368
    %v2370 = vpop.f32.mrb[0].mxu0
    %2371 = vmatprep.mubr.bf16.mxu0 0
    %2372 = vmatmul.mubr.bf16.gmra.mrb[0].mxu0 %v1356
    %v2373 = vpop.f32.mrb[0].mxu0
    %v2374 = vadd.f32 %v346, %v2373
    %v2375 = vpop.f32.mrb[0].mxu0
    %v2376 = vpop.f32.mrb[0].mxu0
    %v2377 = vadd.f32 %v346, %v2376
    %v2378 = vpop.f32.mrb[0].mxu0
    %2379 = vmatprep.mubr.bf16.mxu0 0
    %2380 = vmatmul.mubr.bf16.gmra.mrb[0].mxu0 %v1359
    %v2381 = vpop.f32.mrb[0].mxu0
    %v2382 = vadd.f32 %v346, %v2381
    %v2383 = vpop.f32.mrb[0].mxu0
    %v2384 = vpop.f32.mrb[0].mxu0
    %v2385 = vadd.f32 %v346, %v2384
    %v2386 = vpop.f32.mrb[0].mxu0
    %2387 = vmatprep.mubr.bf16.mxu0 0
    %2388 = vmatmul.mubr.bf16.gmra.mrb[0].mxu0 %v1362
    %v2389 = vpop.f32.mrb[0].mxu0
    %v2390 = vadd.f32 %v346, %v2389
    %v2391 = vpop.f32.mrb[0].mxu0
    %v2392 = vpop.f32.mrb[0].mxu0
    %v2393 = vadd.f32 %v346, %v2392
    %v2394 = vpop.f32.mrb[0].mxu0
    %2395 = vmatprep.mubr.bf16.mxu0 0
    %2396 = vmatmul.mubr.bf16.gmra.mrb[0].mxu0 %v1365
    %v2397 = vpop.f32.mrb[0].mxu0
    %v2398 = vadd.f32 %v346, %v2397
    %v2399 = vpop.f32.mrb[0].mxu0
    %v2400 = vpop.f32.mrb[0].mxu0
    %v2401 = vadd.f32 %v346, %v2400
    %v2402 = vpop.f32.mrb[0].mxu0
    %2403 = vmatprep.mubr.bf16.mxu0 0
    %2404 = vmatmul.mubr.bf16.gmra.mrb[0].mxu0 %v1368
    %v2405 = vpop.f32.mrb[0].mxu0
    %v2406 = vadd.f32 %v346, %v2405
    %v2407 = vpop.f32.mrb[0].mxu0
    %v2408 = vpop.f32.mrb[0].mxu0
    %v2409 = vadd.f32 %v346, %v2408
    %v2410 = vpop.f32.mrb[0].mxu0
    %2411 = vmatprep.mubr.bf16.mxu0 0
    %2412 = vmatmul.mubr.bf16.gmra.mrb[0].mxu0 %v1371
    %v2413 = vpop.f32.mrb[0].mxu0
    %v2414 = vadd.f32 %v346, %v2413
    %v2415 = vpop.f32.mrb[0].mxu0
    %v2416 = vpop.f32.mrb[0].mxu0
    %v2417 = vadd.f32 %v346, %v2416
    %v2418 = vpop.f32.mrb[0].mxu0
    %2419 = vmatprep.mubr.bf16.mxu0 0
    %2420 = vmatmul.mubr.bf16.gmra.mrb[0].mxu0 %v1374
    %v2421 = vpop.f32.mrb[0].mxu0
    %v2422 = vadd.f32 %v346, %v2421
    %v2423 = vpop.f32.mrb[0].mxu0
    %v2424 = vpop.f32.mrb[0].mxu0
    %v2425 = vadd.f32 %v346, %v2424
    %v2426 = vpop.f32.mrb[0].mxu0
    %2427 = vmatprep.mubr.bf16.mxu0 0
    %2428 = vmatmul.mubr.bf16.gmra.mrb[0].mxu0 %v1377
    %v2429 = vpop.f32.mrb[0].mxu0
    %v2430 = vadd.f32 %v346, %v2429
    %v2431 = vpop.f32.mrb[0].mxu0
    %v2432 = vpop.f32.mrb[0].mxu0
    %v2433 = vadd.f32 %v346, %v2432
    %v2434 = vpop.f32.mrb[0].mxu0
    %2435 = vdwg.mxu0
    %v2436 = vmax.f32 %v1414, 0.0
    %v2437 = vmax.f32 %v1417, 0.0
    %v2438 = vmax.f32 %v1422, 0.0
    %v2439 = vmax.f32 %v1425, 0.0
    %v2440 = vmax.f32 %v1430, 0.0
    %v2441 = vmax.f32 %v1433, 0.0
    %v2442 = vmax.f32 %v1438, 0.0
    %v2443 = vmax.f32 %v1441, 0.0
    %v2444 = vmax.f32 %v1446, 0.0
    %v2445 = vmax.f32 %v1449, 0.0
    %v2446 = vmax.f32 %v1454, 0.0
    %v2447 = vmax.f32 %v1457, 0.0
    %v2448 = vmax.f32 %v1462, 0.0
    %v2449 = vmax.f32 %v1465, 0.0
    %v2450 = vmax.f32 %v1470, 0.0
    %v2451 = vmax.f32 %v1473, 0.0
    %v2452 = vmax.f32 %v1478, 0.0
    %v2453 = vmax.f32 %v1481, 0.0
    %v2454 = vmax.f32 %v1486, 0.0
    %v2455 = vmax.f32 %v1489, 0.0
    %v2456 = vmax.f32 %v1494, 0.0
    %v2457 = vmax.f32 %v1497, 0.0
    %v2458 = vmax.f32 %v1502, 0.0
    %v2459 = vmax.f32 %v1505, 0.0
    %v2460 = vmax.f32 %v1510, 0.0
    %v2461 = vmax.f32 %v1513, 0.0
    %v2462 = vmax.f32 %v1518, 0.0
    %v2463 = vmax.f32 %v1521, 0.0
    %v2464 = vmax.f32 %v1526, 0.0
    %v2465 = vmax.f32 %v1529, 0.0
    %v2466 = vmax.f32 %v1534, 0.0
    %v2467 = vmax.f32 %v1537, 0.0
    %v2468 = vmax.f32 %v1542, 0.0
    %v2469 = vmax.f32 %v1545, 0.0
    %v2470 = vmax.f32 %v1550, 0.0
    %v2471 = vmax.f32 %v1553, 0.0
    %v2472 = vmax.f32 %v1558, 0.0
    %v2473 = vmax.f32 %v1561, 0.0
    %v2474 = vmax.f32 %v1566, 0.0
    %v2475 = vmax.f32 %v1569, 0.0
    %v2476 = vmax.f32 %v1574, 0.0
    %v2477 = vmax.f32 %v1577, 0.0
    %v2478 = vmax.f32 %v1582, 0.0
    %v2479 = vmax.f32 %v1585, 0.0
    %v2480 = vmax.f32 %v1590, 0.0
    %v2481 = vmax.f32 %v1593, 0.0
    %v2482 = vmax.f32 %v1598, 0.0
    %v2483 = vmax.f32 %v1601, 0.0
    %v2484 = vmax.f32 %v1606, 0.0
    %v2485 = vmax.f32 %v1609, 0.0
    %v2486 = vmax.f32 %v1614, 0.0
    %v2487 = vmax.f32 %v1617, 0.0
    %v2488 = vmax.f32 %v1622, 0.0
    %v2489 = vmax.f32 %v1625, 0.0
    %v2490 = vmax.f32 %v1630, 0.0
    %v2491 = vmax.f32 %v1633, 0.0
    %v2492 = vmax.f32 %v1638, 0.0
    %v2493 = vmax.f32 %v1641, 0.0
    %v2494 = vmax.f32 %v1646, 0.0
    %v2495 = vmax.f32 %v1649, 0.0
    %v2496 = vmax.f32 %v1654, 0.0
    %v2497 = vmax.f32 %v1657, 0.0
    %v2498 = vmax.f32 %v1662, 0.0
    %v2499 = vmax.f32 %v1665, 0.0
    %v2500 = vmax.f32 %v1670, 0.0
    %v2501 = vmax.f32 %v1673, 0.0
    %v2502 = vmax.f32 %v1678, 0.0
    %v2503 = vmax.f32 %v1681, 0.0
    %v2504 = vmax.f32 %v1686, 0.0
    %v2505 = vmax.f32 %v1689, 0.0
    %v2506 = vmax.f32 %v1694, 0.0
    %v2507 = vmax.f32 %v1697, 0.0
    %v2508 = vmax.f32 %v1702, 0.0
    %v2509 = vmax.f32 %v1705, 0.0
    %v2510 = vmax.f32 %v1710, 0.0
    %v2511 = vmax.f32 %v1713, 0.0
    %v2512 = vmax.f32 %v1718, 0.0
    %v2513 = vmax.f32 %v1721, 0.0
    %v2514 = vmax.f32 %v1726, 0.0
    %v2515 = vmax.f32 %v1729, 0.0
    %v2516 = vmax.f32 %v1734, 0.0
    %v2517 = vmax.f32 %v1737, 0.0
    %v2518 = vmax.f32 %v1742, 0.0
    %v2519 = vmax.f32 %v1745, 0.0
    %v2520 = vmax.f32 %v1750, 0.0
    %v2521 = vmax.f32 %v1753, 0.0
    %v2522 = vmax.f32 %v1758, 0.0
    %v2523 = vmax.f32 %v1761, 0.0
    %v2524 = vmax.f32 %v1766, 0.0
    %v2525 = vmax.f32 %v1769, 0.0
    %v2526 = vmax.f32 %v1774, 0.0
    %v2527 = vmax.f32 %v1777, 0.0
    %v2528 = vmax.f32 %v1782, 0.0
    %v2529 = vmax.f32 %v1785, 0.0
    %v2530 = vmax.f32 %v1790, 0.0
    %v2531 = vmax.f32 %v1793, 0.0
    %v2532 = vmax.f32 %v1798, 0.0
    %v2533 = vmax.f32 %v1801, 0.0
    %v2534 = vmax.f32 %v1806, 0.0
    %v2535 = vmax.f32 %v1809, 0.0
    %v2536 = vmax.f32 %v1814, 0.0
    %v2537 = vmax.f32 %v1817, 0.0
    %v2538 = vmax.f32 %v1822, 0.0
    %v2539 = vmax.f32 %v1825, 0.0
    %v2540 = vmax.f32 %v1830, 0.0
    %v2541 = vmax.f32 %v1833, 0.0
    %v2542 = vmax.f32 %v1838, 0.0
    %v2543 = vmax.f32 %v1841, 0.0
    %v2544 = vmax.f32 %v1846, 0.0
    %v2545 = vmax.f32 %v1849, 0.0
    %v2546 = vmax.f32 %v1854, 0.0
    %v2547 = vmax.f32 %v1857, 0.0
    %v2548 = vmax.f32 %v1862, 0.0
    %v2549 = vmax.f32 %v1865, 0.0
    %v2550 = vmax.f32 %v1870, 0.0
    %v2551 = vmax.f32 %v1873, 0.0
    %v2552 = vmax.f32 %v1878, 0.0
    %v2553 = vmax.f32 %v1881, 0.0
    %v2554 = vmax.f32 %v1886, 0.0
    %v2555 = vmax.f32 %v1889, 0.0
    %v2556 = vmax.f32 %v1894, 0.0
    %v2557 = vmax.f32 %v1897, 0.0
    %v2558 = vmax.f32 %v1902, 0.0
    %v2559 = vmax.f32 %v1905, 0.0
    %v2560 = vmax.f32 %v1910, 0.0
    %v2561 = vmax.f32 %v1913, 0.0
    %v2562 = vmax.f32 %v1918, 0.0
    %v2563 = vmax.f32 %v1921, 0.0
    %v2564 = vmax.f32 %v1926, 0.0
    %v2565 = vmax.f32 %v1929, 0.0
    %v2566 = vmax.f32 %v1934, 0.0
    %v2567 = vmax.f32 %v1937, 0.0
    %v2568 = vmax.f32 %v1942, 0.0
    %v2569 = vmax.f32 %v1945, 0.0
    %v2570 = vmax.f32 %v1950, 0.0
    %v2571 = vmax.f32 %v1953, 0.0
    %v2572 = vmax.f32 %v1958, 0.0
    %v2573 = vmax.f32 %v1961, 0.0
    %v2574 = vmax.f32 %v1966, 0.0
    %v2575 = vmax.f32 %v1969, 0.0
    %v2576 = vmax.f32 %v1974, 0.0
    %v2577 = vmax.f32 %v1977, 0.0
    %v2578 = vmax.f32 %v1982, 0.0
    %v2579 = vmax.f32 %v1985, 0.0
    %v2580 = vmax.f32 %v1990, 0.0
    %v2581 = vmax.f32 %v1993, 0.0
    %v2582 = vmax.f32 %v1998, 0.0
    %v2583 = vmax.f32 %v2001, 0.0
    %v2584 = vmax.f32 %v2006, 0.0
    %v2585 = vmax.f32 %v2009, 0.0
    %v2586 = vmax.f32 %v2014, 0.0
    %v2587 = vmax.f32 %v2017, 0.0
    %v2588 = vmax.f32 %v2022, 0.0
    %v2589 = vmax.f32 %v2025, 0.0
    %v2590 = vmax.f32 %v2030, 0.0
    %v2591 = vmax.f32 %v2033, 0.0
    %v2592 = vmax.f32 %v2038, 0.0
    %v2593 = vmax.f32 %v2041, 0.0
    %v2594 = vmax.f32 %v2046, 0.0
    %v2595 = vmax.f32 %v2049, 0.0
    %v2596 = vmax.f32 %v2054, 0.0
    %v2597 = vmax.f32 %v2057, 0.0
    %v2598 = vmax.f32 %v2062, 0.0
    %v2599 = vmax.f32 %v2065, 0.0
    %v2600 = vmax.f32 %v2070, 0.0
    %v2601 = vmax.f32 %v2073, 0.0
    %v2602 = vmax.f32 %v2078, 0.0
    %v2603 = vmax.f32 %v2081, 0.0
    %v2604 = vmax.f32 %v2086, 0.0
    %v2605 = vmax.f32 %v2089, 0.0
    %v2606 = vmax.f32 %v2094, 0.0
    %v2607 = vmax.f32 %v2097, 0.0
    %v2608 = vmax.f32 %v2102, 0.0
    %v2609 = vmax.f32 %v2105, 0.0
    %v2610 = vmax.f32 %v2110, 0.0
    %v2611 = vmax.f32 %v2113, 0.0
    %v2612 = vmax.f32 %v2118, 0.0
    %v2613 = vmax.f32 %v2121, 0.0
    %v2614 = vmax.f32 %v2126, 0.0
    %v2615 = vmax.f32 %v2129, 0.0
    %v2616 = vmax.f32 %v2134, 0.0
    %v2617 = vmax.f32 %v2137, 0.0
    %v2618 = vmax.f32 %v2142, 0.0
    %v2619 = vmax.f32 %v2145, 0.0
    %v2620 = vmax.f32 %v2150, 0.0
    %v2621 = vmax.f32 %v2153, 0.0
    %v2622 = vmax.f32 %v2158, 0.0
    %v2623 = vmax.f32 %v2161, 0.0
    %v2624 = vmax.f32 %v2166, 0.0
    %v2625 = vmax.f32 %v2169, 0.0
    %v2626 = vmax.f32 %v2174, 0.0
    %v2627 = vmax.f32 %v2177, 0.0
    %v2628 = vmax.f32 %v2182, 0.0
    %v2629 = vmax.f32 %v2185, 0.0
    %v2630 = vmax.f32 %v2190, 0.0
    %v2631 = vmax.f32 %v2193, 0.0
    %v2632 = vmax.f32 %v2198, 0.0
    %v2633 = vmax.f32 %v2201, 0.0
    %v2634 = vmax.f32 %v2206, 0.0
    %v2635 = vmax.f32 %v2209, 0.0
    %v2636 = vmax.f32 %v2214, 0.0
    %v2637 = vmax.f32 %v2217, 0.0
    %v2638 = vmax.f32 %v2222, 0.0
    %v2639 = vmax.f32 %v2225, 0.0
    %v2640 = vmax.f32 %v2230, 0.0
    %v2641 = vmax.f32 %v2233, 0.0
    %v2642 = vmax.f32 %v2238, 0.0
    %v2643 = vmax.f32 %v2241, 0.0
    %v2644 = vmax.f32 %v2246, 0.0
    %v2645 = vmax.f32 %v2249, 0.0
    %v2646 = vmax.f32 %v2254, 0.0
    %v2647 = vmax.f32 %v2257, 0.0
    %v2648 = vmax.f32 %v2262, 0.0
    %v2649 = vmax.f32 %v2265, 0.0
    %v2650 = vmax.f32 %v2270, 0.0
    %v2651 = vmax.f32 %v2273, 0.0
    %v2652 = vmax.f32 %v2278, 0.0
    %v2653 = vmax.f32 %v2281, 0.0
    %v2654 = vmax.f32 %v2286, 0.0
    %v2655 = vmax.f32 %v2289, 0.0
    %v2656 = vmax.f32 %v2294, 0.0
    %v2657 = vmax.f32 %v2297, 0.0
    %v2658 = vmax.f32 %v2302, 0.0
    %v2659 = vmax.f32 %v2305, 0.0
    %v2660 = vmax.f32 %v2310, 0.0
    %v2661 = vmax.f32 %v2313, 0.0
    %v2662 = vmax.f32 %v2318, 0.0
    %v2663 = vmax.f32 %v2321, 0.0
    %v2664 = vmax.f32 %v2326, 0.0
    %v2665 = vmax.f32 %v2329, 0.0
    %v2666 = vmax.f32 %v2334, 0.0
    %v2667 = vmax.f32 %v2337, 0.0
    %v2668 = vmax.f32 %v2342, 0.0
    %v2669 = vmax.f32 %v2345, 0.0
    %v2670 = vmax.f32 %v2350, 0.0
    %v2671 = vmax.f32 %v2353, 0.0
    %v2672 = vmax.f32 %v2358, 0.0
    %v2673 = vmax.f32 %v2361, 0.0
    %v2674 = vmax.f32 %v2366, 0.0
    %v2675 = vmax.f32 %v2369, 0.0
    %v2676 = vmax.f32 %v2374, 0.0
    %v2677 = vmax.f32 %v2377, 0.0
    %v2678 = vmax.f32 %v2382, 0.0
    %v2679 = vmax.f32 %v2385, 0.0
    %v2680 = vmax.f32 %v2390, 0.0
    %v2681 = vmax.f32 %v2393, 0.0
    %v2682 = vmax.f32 %v2398, 0.0
    %v2683 = vmax.f32 %v2401, 0.0
    %v2684 = vmax.f32 %v2406, 0.0
    %v2685 = vmax.f32 %v2409, 0.0
    %v2686 = vmax.f32 %v2414, 0.0
    %v2687 = vmax.f32 %v2417, 0.0
    %v2688 = vmax.f32 %v2422, 0.0
    %v2689 = vmax.f32 %v2425, 0.0
    %v2690 = vmax.f32 %v2430, 0.0
    %v2691 = vmax.f32 %v2433, 0.0
    %v2692 = vpack.c.bf16 %v2437, %v2436
    %v2693 = vpack.c.bf16 %v2439, %v2438
    %v2694 = vpack.c.bf16 %v2441, %v2440
    %v2695 = vpack.c.bf16 %v2443, %v2442
    %v2696 = vpack.c.bf16 %v2445, %v2444
    %v2697 = vpack.c.bf16 %v2447, %v2446
    %v2698 = vpack.c.bf16 %v2449, %v2448
    %v2699 = vpack.c.bf16 %v2451, %v2450
    %v2700 = vpack.c.bf16 %v2453, %v2452
    %v2701 = vpack.c.bf16 %v2455, %v2454
    %v2702 = vpack.c.bf16 %v2457, %v2456
    %v2703 = vpack.c.bf16 %v2459, %v2458
    %v2704 = vpack.c.bf16 %v2461, %v2460
    %v2705 = vpack.c.bf16 %v2463, %v2462
    %v2706 = vpack.c.bf16 %v2465, %v2464
    %v2707 = vpack.c.bf16 %v2467, %v2466
    %v2708 = vpack.c.bf16 %v2469, %v2468
    %v2709 = vpack.c.bf16 %v2471, %v2470
    %v2710 = vpack.c.bf16 %v2473, %v2472
    %v2711 = vpack.c.bf16 %v2475, %v2474
    %v2712 = vpack.c.bf16 %v2477, %v2476
    %v2713 = vpack.c.bf16 %v2479, %v2478
    %v2714 = vpack.c.bf16 %v2481, %v2480
    %v2715 = vpack.c.bf16 %v2483, %v2482
    %v2716 = vpack.c.bf16 %v2485, %v2484
    %v2717 = vpack.c.bf16 %v2487, %v2486
    %v2718 = vpack.c.bf16 %v2489, %v2488
    %v2719 = vpack.c.bf16 %v2491, %v2490
    %v2720 = vpack.c.bf16 %v2493, %v2492
    %v2721 = vpack.c.bf16 %v2495, %v2494
    %v2722 = vpack.c.bf16 %v2497, %v2496
    %v2723 = vpack.c.bf16 %v2499, %v2498
    %v2724 = vpack.c.bf16 %v2501, %v2500
    %v2725 = vpack.c.bf16 %v2503, %v2502
    %v2726 = vpack.c.bf16 %v2505, %v2504
    %v2727 = vpack.c.bf16 %v2507, %v2506
    %v2728 = vpack.c.bf16 %v2509, %v2508
    %v2729 = vpack.c.bf16 %v2511, %v2510
    %v2730 = vpack.c.bf16 %v2513, %v2512
    %v2731 = vpack.c.bf16 %v2515, %v2514
    %v2732 = vpack.c.bf16 %v2517, %v2516
    %v2733 = vpack.c.bf16 %v2519, %v2518
    %v2734 = vpack.c.bf16 %v2521, %v2520
    %v2735 = vpack.c.bf16 %v2523, %v2522
    %v2736 = vpack.c.bf16 %v2525, %v2524
    %v2737 = vpack.c.bf16 %v2527, %v2526
    %v2738 = vpack.c.bf16 %v2529, %v2528
    %v2739 = vpack.c.bf16 %v2531, %v2530
    %v2740 = vpack.c.bf16 %v2533, %v2532
    %v2741 = vpack.c.bf16 %v2535, %v2534
    %v2742 = vpack.c.bf16 %v2537, %v2536
    %v2743 = vpack.c.bf16 %v2539, %v2538
    %v2744 = vpack.c.bf16 %v2541, %v2540
    %v2745 = vpack.c.bf16 %v2543, %v2542
    %v2746 = vpack.c.bf16 %v2545, %v2544
    %v2747 = vpack.c.bf16 %v2547, %v2546
    %v2748 = vpack.c.bf16 %v2549, %v2548
    %v2749 = vpack.c.bf16 %v2551, %v2550
    %v2750 = vpack.c.bf16 %v2553, %v2552
    %v2751 = vpack.c.bf16 %v2555, %v2554
    %v2752 = vpack.c.bf16 %v2557, %v2556
    %v2753 = vpack.c.bf16 %v2559, %v2558
    %v2754 = vpack.c.bf16 %v2561, %v2560
    %v2755 = vpack.c.bf16 %v2563, %v2562
    %v2756 = vpack.c.bf16 %v2565, %v2564
    %v2757 = vpack.c.bf16 %v2567, %v2566
    %v2758 = vpack.c.bf16 %v2569, %v2568
    %v2759 = vpack.c.bf16 %v2571, %v2570
    %v2760 = vpack.c.bf16 %v2573, %v2572
    %v2761 = vpack.c.bf16 %v2575, %v2574
    %v2762 = vpack.c.bf16 %v2577, %v2576
    %v2763 = vpack.c.bf16 %v2579, %v2578
    %v2764 = vpack.c.bf16 %v2581, %v2580
    %v2765 = vpack.c.bf16 %v2583, %v2582
    %v2766 = vpack.c.bf16 %v2585, %v2584
    %v2767 = vpack.c.bf16 %v2587, %v2586
    %v2768 = vpack.c.bf16 %v2589, %v2588
    %v2769 = vpack.c.bf16 %v2591, %v2590
    %v2770 = vpack.c.bf16 %v2593, %v2592
    %v2771 = vpack.c.bf16 %v2595, %v2594
    %v2772 = vpack.c.bf16 %v2597, %v2596
    %v2773 = vpack.c.bf16 %v2599, %v2598
    %v2774 = vpack.c.bf16 %v2601, %v2600
    %v2775 = vpack.c.bf16 %v2603, %v2602
    %v2776 = vpack.c.bf16 %v2605, %v2604
    %v2777 = vpack.c.bf16 %v2607, %v2606
    %v2778 = vpack.c.bf16 %v2609, %v2608
    %v2779 = vpack.c.bf16 %v2611, %v2610
    %v2780 = vpack.c.bf16 %v2613, %v2612
    %v2781 = vpack.c.bf16 %v2615, %v2614
    %v2782 = vpack.c.bf16 %v2617, %v2616
    %v2783 = vpack.c.bf16 %v2619, %v2618
    %v2784 = vpack.c.bf16 %v2621, %v2620
    %v2785 = vpack.c.bf16 %v2623, %v2622
    %v2786 = vpack.c.bf16 %v2625, %v2624
    %v2787 = vpack.c.bf16 %v2627, %v2626
    %v2788 = vpack.c.bf16 %v2629, %v2628
    %v2789 = vpack.c.bf16 %v2631, %v2630
    %v2790 = vpack.c.bf16 %v2633, %v2632
    %v2791 = vpack.c.bf16 %v2635, %v2634
    %v2792 = vpack.c.bf16 %v2637, %v2636
    %v2793 = vpack.c.bf16 %v2639, %v2638
    %v2794 = vpack.c.bf16 %v2641, %v2640
    %v2795 = vpack.c.bf16 %v2643, %v2642
    %v2796 = vpack.c.bf16 %v2645, %v2644
    %v2797 = vpack.c.bf16 %v2647, %v2646
    %v2798 = vpack.c.bf16 %v2649, %v2648
    %v2799 = vpack.c.bf16 %v2651, %v2650
    %v2800 = vpack.c.bf16 %v2653, %v2652
    %v2801 = vpack.c.bf16 %v2655, %v2654
    %v2802 = vpack.c.bf16 %v2657, %v2656
    %v2803 = vpack.c.bf16 %v2659, %v2658
    %v2804 = vpack.c.bf16 %v2661, %v2660
    %v2805 = vpack.c.bf16 %v2663, %v2662
    %v2806 = vpack.c.bf16 %v2665, %v2664
    %v2807 = vpack.c.bf16 %v2667, %v2666
    %v2808 = vpack.c.bf16 %v2669, %v2668
    %v2809 = vpack.c.bf16 %v2671, %v2670
    %v2810 = vpack.c.bf16 %v2673, %v2672
    %v2811 = vpack.c.bf16 %v2675, %v2674
    %v2812 = vpack.c.bf16 %v2677, %v2676
    %v2813 = vpack.c.bf16 %v2679, %v2678
    %v2814 = vpack.c.bf16 %v2681, %v2680
    %v2815 = vpack.c.bf16 %v2683, %v2682
    %v2816 = vpack.c.bf16 %v2685, %v2684
    %v2817 = vpack.c.bf16 %v2687, %v2686
    %v2818 = vpack.c.bf16 %v2689, %v2688
    %v2819 = vpack.c.bf16 %v2691, %v2690
    %v2820 = vld [vmem:[%s5] sm:$0xf]
    %v2821 = vld [vmem:[%s5 + $0x4] sm:$0xf]
    %v2822 = vld [vmem:[%s5 + $0x8] sm:$0xf]
    %v2823 = vld [vmem:[%s5 + $0xc] sm:$0xf]
    %v2824 = vld [vmem:[%s6] sm:$0x1]
    %v2826 = vlaneseq
    %v2827 = vshrl.u32 %v2826, 7
    %v2828 = vsub.s32 0, %v2827
    %v2829 = vrot.slane %v2824, %v2828
    %v2835 = vunpack.c.l.b16 %v2820
    %v2836 = vunpack.c.l.b16 %v2821
    %v2837 = vunpack.c.l.b16 %v2822
    %v2838 = vunpack.c.l.b16 %v2823
    %v2839 = vpack.c.b16 %v2836, %v2835
    %v2840 = vpack.c.b16 %v2838, %v2837
    %vm2843 = vcmask 261120
    %v2845 = vsel %vm2843, %v2692, 0
    %v2848 = vsel %vm2843, %v2693, 0
    %v2851 = vsel %vm2843, %v2694, 0
    %v2854 = vsel %vm2843, %v2695, 0
    %v2857 = vsel %vm2843, %v2696, 0
    %v2860 = vsel %vm2843, %v2697, 0
    %v2863 = vsel %vm2843, %v2698, 0
    %v2866 = vsel %vm2843, %v2699, 0
    %v2869 = vsel %vm2843, %v2700, 0
    %v2872 = vsel %vm2843, %v2701, 0
    %v2875 = vsel %vm2843, %v2702, 0
    %v2878 = vsel %vm2843, %v2703, 0
    %v2881 = vsel %vm2843, %v2704, 0
    %v2884 = vsel %vm2843, %v2705, 0
    %v2887 = vsel %vm2843, %v2706, 0
    %v2890 = vsel %vm2843, %v2707, 0
    %v2893 = vsel %vm2843, %v2708, 0
    %v2896 = vsel %vm2843, %v2709, 0
    %v2899 = vsel %vm2843, %v2710, 0
    %v2902 = vsel %vm2843, %v2711, 0
    %v2905 = vsel %vm2843, %v2712, 0
    %v2908 = vsel %vm2843, %v2713, 0
    %v2911 = vsel %vm2843, %v2714, 0
    %v2914 = vsel %vm2843, %v2715, 0
    %v2917 = vsel %vm2843, %v2716, 0
    %v2920 = vsel %vm2843, %v2717, 0
    %v2923 = vsel %vm2843, %v2718, 0
    %v2926 = vsel %vm2843, %v2719, 0
    %v2929 = vsel %vm2843, %v2720, 0
    %v2932 = vsel %vm2843, %v2721, 0
    %v2935 = vsel %vm2843, %v2722, 0
    %v2938 = vsel %vm2843, %v2723, 0
    %v2941 = vsel %vm2843, %v2724, 0
    %v2944 = vsel %vm2843, %v2725, 0
    %v2947 = vsel %vm2843, %v2726, 0
    %v2950 = vsel %vm2843, %v2727, 0
    %v2953 = vsel %vm2843, %v2728, 0
    %v2956 = vsel %vm2843, %v2729, 0
    %v2959 = vsel %vm2843, %v2730, 0
    %v2962 = vsel %vm2843, %v2731, 0
    %v2965 = vsel %vm2843, %v2732, 0
    %v2968 = vsel %vm2843, %v2733, 0
    %v2971 = vsel %vm2843, %v2734, 0
    %v2974 = vsel %vm2843, %v2735, 0
    %v2977 = vsel %vm2843, %v2736, 0
    %v2980 = vsel %vm2843, %v2737, 0
    %v2983 = vsel %vm2843, %v2738, 0
    %v2986 = vsel %vm2843, %v2739, 0
    %v2989 = vsel %vm2843, %v2740, 0
    %v2992 = vsel %vm2843, %v2741, 0
    %v2995 = vsel %vm2843, %v2742, 0
    %v2998 = vsel %vm2843, %v2743, 0
    %v3001 = vsel %vm2843, %v2744, 0
    %v3004 = vsel %vm2843, %v2745, 0
    %v3007 = vsel %vm2843, %v2746, 0
    %v3010 = vsel %vm2843, %v2747, 0
    %v3013 = vsel %vm2843, %v2748, 0
    %v3016 = vsel %vm2843, %v2749, 0
    %v3019 = vsel %vm2843, %v2750, 0
    %v3022 = vsel %vm2843, %v2751, 0
    %v3025 = vsel %vm2843, %v2752, 0
    %v3028 = vsel %vm2843, %v2753, 0
    %v3031 = vsel %vm2843, %v2754, 0
    %v3034 = vsel %vm2843, %v2755, 0
    %v3037 = vsel %vm2843, %v2756, 0
    %v3040 = vsel %vm2843, %v2757, 0
    %v3043 = vsel %vm2843, %v2758, 0
    %v3046 = vsel %vm2843, %v2759, 0
    %v3049 = vsel %vm2843, %v2760, 0
    %v3052 = vsel %vm2843, %v2761, 0
    %v3055 = vsel %vm2843, %v2762, 0
    %v3058 = vsel %vm2843, %v2763, 0
    %v3061 = vsel %vm2843, %v2764, 0
    %v3064 = vsel %vm2843, %v2765, 0
    %v3067 = vsel %vm2843, %v2766, 0
    %v3070 = vsel %vm2843, %v2767, 0
    %v3073 = vsel %vm2843, %v2768, 0
    %v3076 = vsel %vm2843, %v2769, 0
    %v3079 = vsel %vm2843, %v2770, 0
    %v3082 = vsel %vm2843, %v2771, 0
    %v3085 = vsel %vm2843, %v2772, 0
    %v3088 = vsel %vm2843, %v2773, 0
    %v3091 = vsel %vm2843, %v2774, 0
    %v3094 = vsel %vm2843, %v2775, 0
    %v3097 = vsel %vm2843, %v2776, 0
    %v3100 = vsel %vm2843, %v2777, 0
    %v3103 = vsel %vm2843, %v2778, 0
    %v3106 = vsel %vm2843, %v2779, 0
    %v3109 = vsel %vm2843, %v2780, 0
    %v3112 = vsel %vm2843, %v2781, 0
    %v3115 = vsel %vm2843, %v2782, 0
    %v3118 = vsel %vm2843, %v2783, 0
    %v3121 = vsel %vm2843, %v2784, 0
    %v3124 = vsel %vm2843, %v2785, 0
    %v3127 = vsel %vm2843, %v2786, 0
    %v3130 = vsel %vm2843, %v2787, 0
    %v3133 = vsel %vm2843, %v2788, 0
    %v3136 = vsel %vm2843, %v2789, 0
    %v3139 = vsel %vm2843, %v2790, 0
    %v3142 = vsel %vm2843, %v2791, 0
    %v3145 = vsel %vm2843, %v2792, 0
    %v3148 = vsel %vm2843, %v2793, 0
    %v3151 = vsel %vm2843, %v2794, 0
    %v3154 = vsel %vm2843, %v2795, 0
    %v3157 = vsel %vm2843, %v2796, 0
    %v3160 = vsel %vm2843, %v2797, 0
    %v3163 = vsel %vm2843, %v2798, 0
    %v3166 = vsel %vm2843, %v2799, 0
    %v3169 = vsel %vm2843, %v2800, 0
    %v3172 = vsel %vm2843, %v2801, 0
    %v3175 = vsel %vm2843, %v2802, 0
    %v3178 = vsel %vm2843, %v2803, 0
    %v3181 = vsel %vm2843, %v2804, 0
    %v3184 = vsel %vm2843, %v2805, 0
    %v3187 = vsel %vm2843, %v2806, 0
    %v3190 = vsel %vm2843, %v2807, 0
    %v3193 = vsel %vm2843, %v2808, 0
    %v3196 = vsel %vm2843, %v2809, 0
    %v3199 = vsel %vm2843, %v2810, 0
    %v3202 = vsel %vm2843, %v2811, 0
    %v3205 = vsel %vm2843, %v2812, 0
    %v3208 = vsel %vm2843, %v2813, 0
    %v3211 = vsel %vm2843, %v2814, 0
    %v3214 = vsel %vm2843, %v2815, 0
    %v3217 = vsel %vm2843, %v2816, 0
    %v3220 = vsel %vm2843, %v2817, 0
    %v3223 = vsel %vm2843, %v2818, 0
    %v3226 = vsel %vm2843, %v2819, 0
    %3228 = vmatprep.subr.bf16.mxu0 0
    %3229 = vmatpush1.bf16.msra.mxu0 %v2839
    %3230 = vmatprep.subr.bf16.mxu0 0
    %3231 = vmatpush1.bf16.msra.mxu0 %v2840
    %3232 = vmatprep.subr.bf16.mxu0 0
    %3233 = vmatpush1.bf16.msra.mxu0 0
    %3234 = vmatprep.subr.bf16.mxu0 0
    %3235 = vmatpush1.bf16.msra.mxu0 0
    %3236 = vmatprep.subr.bf16.mxu0 0
    %3237 = vmatpush1.bf16.msra.mxu0 0
    %3238 = vmatprep.subr.bf16.mxu0 0
    %3239 = vmatpush1.bf16.msra.mxu0 0
    %3240 = vmatprep.subr.bf16.mxu0 0
    %3241 = vmatpush1.bf16.msra.mxu0 0
    %3242 = vmatprep.subr.bf16.mxu0 0
    %3243 = vmatpush1.bf16.msra.mxu0 0
    %3244 = vmatprep.subr.bf16.mxu0 0
    %3245 = vmatpush1.bf16.msra.mxu0 0
    %3246 = vmatprep.subr.bf16.mxu0 0
    %3247 = vmatpush1.bf16.msra.mxu0 0
    %3248 = vmatprep.subr.bf16.mxu0 0
    %3249 = vmatpush1.bf16.msra.mxu0 0
    %3250 = vmatprep.subr.bf16.mxu0 0
    %3251 = vmatpush1.bf16.msra.mxu0 0
    %3252 = vmatprep.subr.bf16.mxu0 0
    %3253 = vmatpush1.bf16.msra.mxu0 0
    %3254 = vmatprep.subr.bf16.mxu0 0
    %3255 = vmatpush1.bf16.msra.mxu0 0
    %3256 = vmatprep.subr.bf16.mxu0 0
    %3257 = vmatpush1.bf16.msra.mxu0 0
    %3258 = vmatprep.subr.bf16.mxu0 0
    %3259 = vmatpush1.bf16.msra.mxu0 0
    %3260 = vmatprep.mubr.bf16.mxu0 0
    %3261 = vmatmul.mubr.bf16.gmra.mrb[0].mxu0 %v2845
    %v3262 = vpop.f32.mrb[0].mxu0
    %v3263 = vadd.f32 %v2829, %v3262
    %v3264 = vpop.f32.mrb[0].mxu0
    %v3265 = vpop.f32.mrb[0].mxu0
    %v3266 = vadd.f32 %v2829, %v3265
    %v3267 = vpop.f32.mrb[0].mxu0
    %3268 = vmatprep.mubr.bf16.mxu0 0
    %3269 = vmatmul.mubr.bf16.gmra.mrb[0].mxu0 %v2848
    %v3270 = vpop.f32.mrb[0].mxu0
    %v3271 = vadd.f32 %v2829, %v3270
    %v3272 = vpop.f32.mrb[0].mxu0
    %v3273 = vpop.f32.mrb[0].mxu0
    %v3274 = vadd.f32 %v2829, %v3273
    %v3275 = vpop.f32.mrb[0].mxu0
    %3276 = vmatprep.mubr.bf16.mxu0 0
    %3277 = vmatmul.mubr.bf16.gmra.mrb[0].mxu0 %v2851
    %v3278 = vpop.f32.mrb[0].mxu0
    %v3279 = vadd.f32 %v2829, %v3278
    %v3280 = vpop.f32.mrb[0].mxu0
    %v3281 = vpop.f32.mrb[0].mxu0
    %v3282 = vadd.f32 %v2829, %v3281
    %v3283 = vpop.f32.mrb[0].mxu0
    %3284 = vmatprep.mubr.bf16.mxu0 0
    %3285 = vmatmul.mubr.bf16.gmra.mrb[0].mxu0 %v2854
    %v3286 = vpop.f32.mrb[0].mxu0
    %v3287 = vadd.f32 %v2829, %v3286
    %v3288 = vpop.f32.mrb[0].mxu0
    %v3289 = vpop.f32.mrb[0].mxu0
    %v3290 = vadd.f32 %v2829, %v3289
    %v3291 = vpop.f32.mrb[0].mxu0
    %3292 = vmatprep.mubr.bf16.mxu0 0
    %3293 = vmatmul.mubr.bf16.gmra.mrb[0].mxu0 %v2857
    %v3294 = vpop.f32.mrb[0].mxu0
    %v3295 = vadd.f32 %v2829, %v3294
    %v3296 = vpop.f32.mrb[0].mxu0
    %v3297 = vpop.f32.mrb[0].mxu0
    %v3298 = vadd.f32 %v2829, %v3297
    %v3299 = vpop.f32.mrb[0].mxu0
    %3300 = vmatprep.mubr.bf16.mxu0 0
    %3301 = vmatmul.mubr.bf16.gmra.mrb[0].mxu0 %v2860
    %v3302 = vpop.f32.mrb[0].mxu0
    %v3303 = vadd.f32 %v2829, %v3302
    %v3304 = vpop.f32.mrb[0].mxu0
    %v3305 = vpop.f32.mrb[0].mxu0
    %v3306 = vadd.f32 %v2829, %v3305
    %v3307 = vpop.f32.mrb[0].mxu0
    %3308 = vmatprep.mubr.bf16.mxu0 0
    %3309 = vmatmul.mubr.bf16.gmra.mrb[0].mxu0 %v2863
    %v3310 = vpop.f32.mrb[0].mxu0
    %v3311 = vadd.f32 %v2829, %v3310
    %v3312 = vpop.f32.mrb[0].mxu0
    %v3313 = vpop.f32.mrb[0].mxu0
    %v3314 = vadd.f32 %v2829, %v3313
    %v3315 = vpop.f32.mrb[0].mxu0
    %3316 = vmatprep.mubr.bf16.mxu0 0
    %3317 = vmatmul.mubr.bf16.gmra.mrb[0].mxu0 %v2866
    %v3318 = vpop.f32.mrb[0].mxu0
    %v3319 = vadd.f32 %v2829, %v3318
    %v3320 = vpop.f32.mrb[0].mxu0
    %v3321 = vpop.f32.mrb[0].mxu0
    %v3322 = vadd.f32 %v2829, %v3321
    %v3323 = vpop.f32.mrb[0].mxu0
    %3324 = vmatprep.mubr.bf16.mxu0 0
    %3325 = vmatmul.mubr.bf16.gmra.mrb[0].mxu0 %v2869
    %v3326 = vpop.f32.mrb[0].mxu0
    %v3327 = vadd.f32 %v2829, %v3326
    %v3328 = vpop.f32.mrb[0].mxu0
    %v3329 = vpop.f32.mrb[0].mxu0
    %v3330 = vadd.f32 %v2829, %v3329
    %v3331 = vpop.f32.mrb[0].mxu0
    %3332 = vmatprep.mubr.bf16.mxu0 0
    %3333 = vmatmul.mubr.bf16.gmra.mrb[0].mxu0 %v2872
    %v3334 = vpop.f32.mrb[0].mxu0
    %v3335 = vadd.f32 %v2829, %v3334
    %v3336 = vpop.f32.mrb[0].mxu0
    %v3337 = vpop.f32.mrb[0].mxu0
    %v3338 = vadd.f32 %v2829, %v3337
    %v3339 = vpop.f32.mrb[0].mxu0
    %3340 = vmatprep.mubr.bf16.mxu0 0
    %3341 = vmatmul.mubr.bf16.gmra.mrb[0].mxu0 %v2875
    %v3342 = vpop.f32.mrb[0].mxu0
    %v3343 = vadd.f32 %v2829, %v3342
    %v3344 = vpop.f32.mrb[0].mxu0
    %v3345 = vpop.f32.mrb[0].mxu0
    %v3346 = vadd.f32 %v2829, %v3345
    %v3347 = vpop.f32.mrb[0].mxu0
    %3348 = vmatprep.mubr.bf16.mxu0 0
    %3349 = vmatmul.mubr.bf16.gmra.mrb[0].mxu0 %v2878
    %v3350 = vpop.f32.mrb[0].mxu0
    %v3351 = vadd.f32 %v2829, %v3350
    %v3352 = vpop.f32.mrb[0].mxu0
    %v3353 = vpop.f32.mrb[0].mxu0
    %v3354 = vadd.f32 %v2829, %v3353
    %v3355 = vpop.f32.mrb[0].mxu0
    %3356 = vmatprep.mubr.bf16.mxu0 0
    %3357 = vmatmul.mubr.bf16.gmra.mrb[0].mxu0 %v2881
    %v3358 = vpop.f32.mrb[0].mxu0
    %v3359 = vadd.f32 %v2829, %v3358
    %v3360 = vpop.f32.mrb[0].mxu0
    %v3361 = vpop.f32.mrb[0].mxu0
    %v3362 = vadd.f32 %v2829, %v3361
    %v3363 = vpop.f32.mrb[0].mxu0
    %3364 = vmatprep.mubr.bf16.mxu0 0
    %3365 = vmatmul.mubr.bf16.gmra.mrb[0].mxu0 %v2884
    %v3366 = vpop.f32.mrb[0].mxu0
    %v3367 = vadd.f32 %v2829, %v3366
    %v3368 = vpop.f32.mrb[0].mxu0
    %v3369 = vpop.f32.mrb[0].mxu0
    %v3370 = vadd.f32 %v2829, %v3369
    %v3371 = vpop.f32.mrb[0].mxu0
    %3372 = vmatprep.mubr.bf16.mxu0 0
    %3373 = vmatmul.mubr.bf16.gmra.mrb[0].mxu0 %v2887
    %v3374 = vpop.f32.mrb[0].mxu0
    %v3375 = vadd.f32 %v2829, %v3374
    %v3376 = vpop.f32.mrb[0].mxu0
    %v3377 = vpop.f32.mrb[0].mxu0
    %v3378 = vadd.f32 %v2829, %v3377
    %v3379 = vpop.f32.mrb[0].mxu0
    %3380 = vmatprep.mubr.bf16.mxu0 0
    %3381 = vmatmul.mubr.bf16.gmra.mrb[0].mxu0 %v2890
    %v3382 = vpop.f32.mrb[0].mxu0
    %v3383 = vadd.f32 %v2829, %v3382
    %v3384 = vpop.f32.mrb[0].mxu0
    %v3385 = vpop.f32.mrb[0].mxu0
    %v3386 = vadd.f32 %v2829, %v3385
    %v3387 = vpop.f32.mrb[0].mxu0
    %3388 = vmatprep.mubr.bf16.mxu0 0
    %3389 = vmatmul.mubr.bf16.gmra.mrb[0].mxu0 %v2893
    %v3390 = vpop.f32.mrb[0].mxu0
    %v3391 = vadd.f32 %v2829, %v3390
    %v3392 = vpop.f32.mrb[0].mxu0
    %v3393 = vpop.f32.mrb[0].mxu0
    %v3394 = vadd.f32 %v2829, %v3393
    %v3395 = vpop.f32.mrb[0].mxu0
    %3396 = vmatprep.mubr.bf16.mxu0 0
    %3397 = vmatmul.mubr.bf16.gmra.mrb[0].mxu0 %v2896
    %v3398 = vpop.f32.mrb[0].mxu0
    %v3399 = vadd.f32 %v2829, %v3398
    %v3400 = vpop.f32.mrb[0].mxu0
    %v3401 = vpop.f32.mrb[0].mxu0
    %v3402 = vadd.f32 %v2829, %v3401
    %v3403 = vpop.f32.mrb[0].mxu0
    %3404 = vmatprep.mubr.bf16.mxu0 0
    %3405 = vmatmul.mubr.bf16.gmra.mrb[0].mxu0 %v2899
    %v3406 = vpop.f32.mrb[0].mxu0
    %v3407 = vadd.f32 %v2829, %v3406
    %v3408 = vpop.f32.mrb[0].mxu0
    %v3409 = vpop.f32.mrb[0].mxu0
    %v3410 = vadd.f32 %v2829, %v3409
    %v3411 = vpop.f32.mrb[0].mxu0
    %3412 = vmatprep.mubr.bf16.mxu0 0
    %3413 = vmatmul.mubr.bf16.gmra.mrb[0].mxu0 %v2902
    %v3414 = vpop.f32.mrb[0].mxu0
    %v3415 = vadd.f32 %v2829, %v3414
    %v3416 = vpop.f32.mrb[0].mxu0
    %v3417 = vpop.f32.mrb[0].mxu0
    %v3418 = vadd.f32 %v2829, %v3417
    %v3419 = vpop.f32.mrb[0].mxu0
    %3420 = vmatprep.mubr.bf16.mxu0 0
    %3421 = vmatmul.mubr.bf16.gmra.mrb[0].mxu0 %v2905
    %v3422 = vpop.f32.mrb[0].mxu0
    %v3423 = vadd.f32 %v2829, %v3422
    %v3424 = vpop.f32.mrb[0].mxu0
    %v3425 = vpop.f32.mrb[0].mxu0
    %v3426 = vadd.f32 %v2829, %v3425
    %v3427 = vpop.f32.mrb[0].mxu0
    %3428 = vmatprep.mubr.bf16.mxu0 0
    %3429 = vmatmul.mubr.bf16.gmra.mrb[0].mxu0 %v2908
    %v3430 = vpop.f32.mrb[0].mxu0
    %v3431 = vadd.f32 %v2829, %v3430
    %v3432 = vpop.f32.mrb[0].mxu0
    %v3433 = vpop.f32.mrb[0].mxu0
    %v3434 = vadd.f32 %v2829, %v3433
    %v3435 = vpop.f32.mrb[0].mxu0
    %3436 = vmatprep.mubr.bf16.mxu0 0
    %3437 = vmatmul.mubr.bf16.gmra.mrb[0].mxu0 %v2911
    %v3438 = vpop.f32.mrb[0].mxu0
    %v3439 = vadd.f32 %v2829, %v3438
    %v3440 = vpop.f32.mrb[0].mxu0
    %v3441 = vpop.f32.mrb[0].mxu0
    %v3442 = vadd.f32 %v2829, %v3441
    %v3443 = vpop.f32.mrb[0].mxu0
    %3444 = vmatprep.mubr.bf16.mxu0 0
    %3445 = vmatmul.mubr.bf16.gmra.mrb[0].mxu0 %v2914
    %v3446 = vpop.f32.mrb[0].mxu0
    %v3447 = vadd.f32 %v2829, %v3446
    %v3448 = vpop.f32.mrb[0].mxu0
    %v3449 = vpop.f32.mrb[0].mxu0
    %v3450 = vadd.f32 %v2829, %v3449
    %v3451 = vpop.f32.mrb[0].mxu0
    %3452 = vmatprep.mubr.bf16.mxu0 0
    %3453 = vmatmul.mubr.bf16.gmra.mrb[0].mxu0 %v2917
    %v3454 = vpop.f32.mrb[0].mxu0
    %v3455 = vadd.f32 %v2829, %v3454
    %v3456 = vpop.f32.mrb[0].mxu0
    %v3457 = vpop.f32.mrb[0].mxu0
    %v3458 = vadd.f32 %v2829, %v3457
    %v3459 = vpop.f32.mrb[0].mxu0
    %3460 = vmatprep.mubr.bf16.mxu0 0
    %3461 = vmatmul.mubr.bf16.gmra.mrb[0].mxu0 %v2920
    %v3462 = vpop.f32.mrb[0].mxu0
    %v3463 = vadd.f32 %v2829, %v3462
    %v3464 = vpop.f32.mrb[0].mxu0
    %v3465 = vpop.f32.mrb[0].mxu0
    %v3466 = vadd.f32 %v2829, %v3465
    %v3467 = vpop.f32.mrb[0].mxu0
    %3468 = vmatprep.mubr.bf16.mxu0 0
    %3469 = vmatmul.mubr.bf16.gmra.mrb[0].mxu0 %v2923
    %v3470 = vpop.f32.mrb[0].mxu0
    %v3471 = vadd.f32 %v2829, %v3470
    %v3472 = vpop.f32.mrb[0].mxu0
    %v3473 = vpop.f32.mrb[0].mxu0
    %v3474 = vadd.f32 %v2829, %v3473
    %v3475 = vpop.f32.mrb[0].mxu0
    %3476 = vmatprep.mubr.bf16.mxu0 0
    %3477 = vmatmul.mubr.bf16.gmra.mrb[0].mxu0 %v2926
    %v3478 = vpop.f32.mrb[0].mxu0
    %v3479 = vadd.f32 %v2829, %v3478
    %v3480 = vpop.f32.mrb[0].mxu0
    %v3481 = vpop.f32.mrb[0].mxu0
    %v3482 = vadd.f32 %v2829, %v3481
    %v3483 = vpop.f32.mrb[0].mxu0
    %3484 = vmatprep.mubr.bf16.mxu0 0
    %3485 = vmatmul.mubr.bf16.gmra.mrb[0].mxu0 %v2929
    %v3486 = vpop.f32.mrb[0].mxu0
    %v3487 = vadd.f32 %v2829, %v3486
    %v3488 = vpop.f32.mrb[0].mxu0
    %v3489 = vpop.f32.mrb[0].mxu0
    %v3490 = vadd.f32 %v2829, %v3489
    %v3491 = vpop.f32.mrb[0].mxu0
    %3492 = vmatprep.mubr.bf16.mxu0 0
    %3493 = vmatmul.mubr.bf16.gmra.mrb[0].mxu0 %v2932
    %v3494 = vpop.f32.mrb[0].mxu0
    %v3495 = vadd.f32 %v2829, %v3494
    %v3496 = vpop.f32.mrb[0].mxu0
    %v3497 = vpop.f32.mrb[0].mxu0
    %v3498 = vadd.f32 %v2829, %v3497
    %v3499 = vpop.f32.mrb[0].mxu0
    %3500 = vmatprep.mubr.bf16.mxu0 0
    %3501 = vmatmul.mubr.bf16.gmra.mrb[0].mxu0 %v2935
    %v3502 = vpop.f32.mrb[0].mxu0
    %v3503 = vadd.f32 %v2829, %v3502
    %v3504 = vpop.f32.mrb[0].mxu0
    %v3505 = vpop.f32.mrb[0].mxu0
    %v3506 = vadd.f32 %v2829, %v3505
    %v3507 = vpop.f32.mrb[0].mxu0
    %3508 = vmatprep.mubr.bf16.mxu0 0
    %3509 = vmatmul.mubr.bf16.gmra.mrb[0].mxu0 %v2938
    %v3510 = vpop.f32.mrb[0].mxu0
    %v3511 = vadd.f32 %v2829, %v3510
    %v3512 = vpop.f32.mrb[0].mxu0
    %v3513 = vpop.f32.mrb[0].mxu0
    %v3514 = vadd.f32 %v2829, %v3513
    %v3515 = vpop.f32.mrb[0].mxu0
    %3516 = vmatprep.mubr.bf16.mxu0 0
    %3517 = vmatmul.mubr.bf16.gmra.mrb[0].mxu0 %v2941
    %v3518 = vpop.f32.mrb[0].mxu0
    %v3519 = vadd.f32 %v2829, %v3518
    %v3520 = vpop.f32.mrb[0].mxu0
    %v3521 = vpop.f32.mrb[0].mxu0
    %v3522 = vadd.f32 %v2829, %v3521
    %v3523 = vpop.f32.mrb[0].mxu0
    %3524 = vmatprep.mubr.bf16.mxu0 0
    %3525 = vmatmul.mubr.bf16.gmra.mrb[0].mxu0 %v2944
    %v3526 = vpop.f32.mrb[0].mxu0
    %v3527 = vadd.f32 %v2829, %v3526
    %v3528 = vpop.f32.mrb[0].mxu0
    %v3529 = vpop.f32.mrb[0].mxu0
    %v3530 = vadd.f32 %v2829, %v3529
    %v3531 = vpop.f32.mrb[0].mxu0
    %3532 = vmatprep.mubr.bf16.mxu0 0
    %3533 = vmatmul.mubr.bf16.gmra.mrb[0].mxu0 %v2947
    %v3534 = vpop.f32.mrb[0].mxu0
    %v3535 = vadd.f32 %v2829, %v3534
    %v3536 = vpop.f32.mrb[0].mxu0
    %v3537 = vpop.f32.mrb[0].mxu0
    %v3538 = vadd.f32 %v2829, %v3537
    %v3539 = vpop.f32.mrb[0].mxu0
    %3540 = vmatprep.mubr.bf16.mxu0 0
    %3541 = vmatmul.mubr.bf16.gmra.mrb[0].mxu0 %v2950
    %v3542 = vpop.f32.mrb[0].mxu0
    %v3543 = vadd.f32 %v2829, %v3542
    %v3544 = vpop.f32.mrb[0].mxu0
    %v3545 = vpop.f32.mrb[0].mxu0
    %v3546 = vadd.f32 %v2829, %v3545
    %v3547 = vpop.f32.mrb[0].mxu0
    %3548 = vmatprep.mubr.bf16.mxu0 0
    %3549 = vmatmul.mubr.bf16.gmra.mrb[0].mxu0 %v2953
    %v3550 = vpop.f32.mrb[0].mxu0
    %v3551 = vadd.f32 %v2829, %v3550
    %v3552 = vpop.f32.mrb[0].mxu0
    %v3553 = vpop.f32.mrb[0].mxu0
    %v3554 = vadd.f32 %v2829, %v3553
    %v3555 = vpop.f32.mrb[0].mxu0
    %3556 = vmatprep.mubr.bf16.mxu0 0
    %3557 = vmatmul.mubr.bf16.gmra.mrb[0].mxu0 %v2956
    %v3558 = vpop.f32.mrb[0].mxu0
    %v3559 = vadd.f32 %v2829, %v3558
    %v3560 = vpop.f32.mrb[0].mxu0
    %v3561 = vpop.f32.mrb[0].mxu0
    %v3562 = vadd.f32 %v2829, %v3561
    %v3563 = vpop.f32.mrb[0].mxu0
    %3564 = vmatprep.mubr.bf16.mxu0 0
    %3565 = vmatmul.mubr.bf16.gmra.mrb[0].mxu0 %v2959
    %v3566 = vpop.f32.mrb[0].mxu0
    %v3567 = vadd.f32 %v2829, %v3566
    %v3568 = vpop.f32.mrb[0].mxu0
    %v3569 = vpop.f32.mrb[0].mxu0
    %v3570 = vadd.f32 %v2829, %v3569
    %v3571 = vpop.f32.mrb[0].mxu0
    %3572 = vmatprep.mubr.bf16.mxu0 0
    %3573 = vmatmul.mubr.bf16.gmra.mrb[0].mxu0 %v2962
    %v3574 = vpop.f32.mrb[0].mxu0
    %v3575 = vadd.f32 %v2829, %v3574
    %v3576 = vpop.f32.mrb[0].mxu0
    %v3577 = vpop.f32.mrb[0].mxu0
    %v3578 = vadd.f32 %v2829, %v3577
    %v3579 = vpop.f32.mrb[0].mxu0
    %3580 = vmatprep.mubr.bf16.mxu0 0
    %3581 = vmatmul.mubr.bf16.gmra.mrb[0].mxu0 %v2965
    %v3582 = vpop.f32.mrb[0].mxu0
    %v3583 = vadd.f32 %v2829, %v3582
    %v3584 = vpop.f32.mrb[0].mxu0
    %v3585 = vpop.f32.mrb[0].mxu0
    %v3586 = vadd.f32 %v2829, %v3585
    %v3587 = vpop.f32.mrb[0].mxu0
    %3588 = vmatprep.mubr.bf16.mxu0 0
    %3589 = vmatmul.mubr.bf16.gmra.mrb[0].mxu0 %v2968
    %v3590 = vpop.f32.mrb[0].mxu0
    %v3591 = vadd.f32 %v2829, %v3590
    %v3592 = vpop.f32.mrb[0].mxu0
    %v3593 = vpop.f32.mrb[0].mxu0
    %v3594 = vadd.f32 %v2829, %v3593
    %v3595 = vpop.f32.mrb[0].mxu0
    %3596 = vmatprep.mubr.bf16.mxu0 0
    %3597 = vmatmul.mubr.bf16.gmra.mrb[0].mxu0 %v2971
    %v3598 = vpop.f32.mrb[0].mxu0
    %v3599 = vadd.f32 %v2829, %v3598
    %v3600 = vpop.f32.mrb[0].mxu0
    %v3601 = vpop.f32.mrb[0].mxu0
    %v3602 = vadd.f32 %v2829, %v3601
    %v3603 = vpop.f32.mrb[0].mxu0
    %3604 = vmatprep.mubr.bf16.mxu0 0
    %3605 = vmatmul.mubr.bf16.gmra.mrb[0].mxu0 %v2974
    %v3606 = vpop.f32.mrb[0].mxu0
    %v3607 = vadd.f32 %v2829, %v3606
    %v3608 = vpop.f32.mrb[0].mxu0
    %v3609 = vpop.f32.mrb[0].mxu0
    %v3610 = vadd.f32 %v2829, %v3609
    %v3611 = vpop.f32.mrb[0].mxu0
    %3612 = vmatprep.mubr.bf16.mxu0 0
    %3613 = vmatmul.mubr.bf16.gmra.mrb[0].mxu0 %v2977
    %v3614 = vpop.f32.mrb[0].mxu0
    %v3615 = vadd.f32 %v2829, %v3614
    %v3616 = vpop.f32.mrb[0].mxu0
    %v3617 = vpop.f32.mrb[0].mxu0
    %v3618 = vadd.f32 %v2829, %v3617
    %v3619 = vpop.f32.mrb[0].mxu0
    %3620 = vmatprep.mubr.bf16.mxu0 0
    %3621 = vmatmul.mubr.bf16.gmra.mrb[0].mxu0 %v2980
    %v3622 = vpop.f32.mrb[0].mxu0
    %v3623 = vadd.f32 %v2829, %v3622
    %v3624 = vpop.f32.mrb[0].mxu0
    %v3625 = vpop.f32.mrb[0].mxu0
    %v3626 = vadd.f32 %v2829, %v3625
    %v3627 = vpop.f32.mrb[0].mxu0
    %3628 = vmatprep.mubr.bf16.mxu0 0
    %3629 = vmatmul.mubr.bf16.gmra.mrb[0].mxu0 %v2983
    %v3630 = vpop.f32.mrb[0].mxu0
    %v3631 = vadd.f32 %v2829, %v3630
    %v3632 = vpop.f32.mrb[0].mxu0
    %v3633 = vpop.f32.mrb[0].mxu0
    %v3634 = vadd.f32 %v2829, %v3633
    %v3635 = vpop.f32.mrb[0].mxu0
    %3636 = vmatprep.mubr.bf16.mxu0 0
    %3637 = vmatmul.mubr.bf16.gmra.mrb[0].mxu0 %v2986
    %v3638 = vpop.f32.mrb[0].mxu0
    %v3639 = vadd.f32 %v2829, %v3638
    %v3640 = vpop.f32.mrb[0].mxu0
    %v3641 = vpop.f32.mrb[0].mxu0
    %v3642 = vadd.f32 %v2829, %v3641
    %v3643 = vpop.f32.mrb[0].mxu0
    %3644 = vmatprep.mubr.bf16.mxu0 0
    %3645 = vmatmul.mubr.bf16.gmra.mrb[0].mxu0 %v2989
    %v3646 = vpop.f32.mrb[0].mxu0
    %v3647 = vadd.f32 %v2829, %v3646
    %v3648 = vpop.f32.mrb[0].mxu0
    %v3649 = vpop.f32.mrb[0].mxu0
    %v3650 = vadd.f32 %v2829, %v3649
    %v3651 = vpop.f32.mrb[0].mxu0
    %3652 = vmatprep.mubr.bf16.mxu0 0
    %3653 = vmatmul.mubr.bf16.gmra.mrb[0].mxu0 %v2992
    %v3654 = vpop.f32.mrb[0].mxu0
    %v3655 = vadd.f32 %v2829, %v3654
    %v3656 = vpop.f32.mrb[0].mxu0
    %v3657 = vpop.f32.mrb[0].mxu0
    %v3658 = vadd.f32 %v2829, %v3657
    %v3659 = vpop.f32.mrb[0].mxu0
    %3660 = vmatprep.mubr.bf16.mxu0 0
    %3661 = vmatmul.mubr.bf16.gmra.mrb[0].mxu0 %v2995
    %v3662 = vpop.f32.mrb[0].mxu0
    %v3663 = vadd.f32 %v2829, %v3662
    %v3664 = vpop.f32.mrb[0].mxu0
    %v3665 = vpop.f32.mrb[0].mxu0
    %v3666 = vadd.f32 %v2829, %v3665
    %v3667 = vpop.f32.mrb[0].mxu0
    %3668 = vmatprep.mubr.bf16.mxu0 0
    %3669 = vmatmul.mubr.bf16.gmra.mrb[0].mxu0 %v2998
    %v3670 = vpop.f32.mrb[0].mxu0
    %v3671 = vadd.f32 %v2829, %v3670
    %v3672 = vpop.f32.mrb[0].mxu0
    %v3673 = vpop.f32.mrb[0].mxu0
    %v3674 = vadd.f32 %v2829, %v3673
    %v3675 = vpop.f32.mrb[0].mxu0
    %3676 = vmatprep.mubr.bf16.mxu0 0
    %3677 = vmatmul.mubr.bf16.gmra.mrb[0].mxu0 %v3001
    %v3678 = vpop.f32.mrb[0].mxu0
    %v3679 = vadd.f32 %v2829, %v3678
    %v3680 = vpop.f32.mrb[0].mxu0
    %v3681 = vpop.f32.mrb[0].mxu0
    %v3682 = vadd.f32 %v2829, %v3681
    %v3683 = vpop.f32.mrb[0].mxu0
    %3684 = vmatprep.mubr.bf16.mxu0 0
    %3685 = vmatmul.mubr.bf16.gmra.mrb[0].mxu0 %v3004
    %v3686 = vpop.f32.mrb[0].mxu0
    %v3687 = vadd.f32 %v2829, %v3686
    %v3688 = vpop.f32.mrb[0].mxu0
    %v3689 = vpop.f32.mrb[0].mxu0
    %v3690 = vadd.f32 %v2829, %v3689
    %v3691 = vpop.f32.mrb[0].mxu0
    %3692 = vmatprep.mubr.bf16.mxu0 0
    %3693 = vmatmul.mubr.bf16.gmra.mrb[0].mxu0 %v3007
    %v3694 = vpop.f32.mrb[0].mxu0
    %v3695 = vadd.f32 %v2829, %v3694
    %v3696 = vpop.f32.mrb[0].mxu0
    %v3697 = vpop.f32.mrb[0].mxu0
    %v3698 = vadd.f32 %v2829, %v3697
    %v3699 = vpop.f32.mrb[0].mxu0
    %3700 = vmatprep.mubr.bf16.mxu0 0
    %3701 = vmatmul.mubr.bf16.gmra.mrb[0].mxu0 %v3010
    %v3702 = vpop.f32.mrb[0].mxu0
    %v3703 = vadd.f32 %v2829, %v3702
    %v3704 = vpop.f32.mrb[0].mxu0
    %v3705 = vpop.f32.mrb[0].mxu0
    %v3706 = vadd.f32 %v2829, %v3705
    %v3707 = vpop.f32.mrb[0].mxu0
    %3708 = vmatprep.mubr.bf16.mxu0 0
    %3709 = vmatmul.mubr.bf16.gmra.mrb[0].mxu0 %v3013
    %v3710 = vpop.f32.mrb[0].mxu0
    %v3711 = vadd.f32 %v2829, %v3710
    %v3712 = vpop.f32.mrb[0].mxu0
    %v3713 = vpop.f32.mrb[0].mxu0
    %v3714 = vadd.f32 %v2829, %v3713
    %v3715 = vpop.f32.mrb[0].mxu0
    %3716 = vmatprep.mubr.bf16.mxu0 0
    %3717 = vmatmul.mubr.bf16.gmra.mrb[0].mxu0 %v3016
    %v3718 = vpop.f32.mrb[0].mxu0
    %v3719 = vadd.f32 %v2829, %v3718
    %v3720 = vpop.f32.mrb[0].mxu0
    %v3721 = vpop.f32.mrb[0].mxu0
    %v3722 = vadd.f32 %v2829, %v3721
    %v3723 = vpop.f32.mrb[0].mxu0
    %3724 = vmatprep.mubr.bf16.mxu0 0
    %3725 = vmatmul.mubr.bf16.gmra.mrb[0].mxu0 %v3019
    %v3726 = vpop.f32.mrb[0].mxu0
    %v3727 = vadd.f32 %v2829, %v3726
    %v3728 = vpop.f32.mrb[0].mxu0
    %v3729 = vpop.f32.mrb[0].mxu0
    %v3730 = vadd.f32 %v2829, %v3729
    %v3731 = vpop.f32.mrb[0].mxu0
    %3732 = vmatprep.mubr.bf16.mxu0 0
    %3733 = vmatmul.mubr.bf16.gmra.mrb[0].mxu0 %v3022
    %v3734 = vpop.f32.mrb[0].mxu0
    %v3735 = vadd.f32 %v2829, %v3734
    %v3736 = vpop.f32.mrb[0].mxu0
    %v3737 = vpop.f32.mrb[0].mxu0
    %v3738 = vadd.f32 %v2829, %v3737
    %v3739 = vpop.f32.mrb[0].mxu0
    %3740 = vmatprep.mubr.bf16.mxu0 0
    %3741 = vmatmul.mubr.bf16.gmra.mrb[0].mxu0 %v3025
    %v3742 = vpop.f32.mrb[0].mxu0
    %v3743 = vadd.f32 %v2829, %v3742
    %v3744 = vpop.f32.mrb[0].mxu0
    %v3745 = vpop.f32.mrb[0].mxu0
    %v3746 = vadd.f32 %v2829, %v3745
    %v3747 = vpop.f32.mrb[0].mxu0
    %3748 = vmatprep.mubr.bf16.mxu0 0
    %3749 = vmatmul.mubr.bf16.gmra.mrb[0].mxu0 %v3028
    %v3750 = vpop.f32.mrb[0].mxu0
    %v3751 = vadd.f32 %v2829, %v3750
    %v3752 = vpop.f32.mrb[0].mxu0
    %v3753 = vpop.f32.mrb[0].mxu0
    %v3754 = vadd.f32 %v2829, %v3753
    %v3755 = vpop.f32.mrb[0].mxu0
    %3756 = vmatprep.mubr.bf16.mxu0 0
    %3757 = vmatmul.mubr.bf16.gmra.mrb[0].mxu0 %v3031
    %v3758 = vpop.f32.mrb[0].mxu0
    %v3759 = vadd.f32 %v2829, %v3758
    %v3760 = vpop.f32.mrb[0].mxu0
    %v3761 = vpop.f32.mrb[0].mxu0
    %v3762 = vadd.f32 %v2829, %v3761
    %v3763 = vpop.f32.mrb[0].mxu0
    %3764 = vmatprep.mubr.bf16.mxu0 0
    %3765 = vmatmul.mubr.bf16.gmra.mrb[0].mxu0 %v3034
    %v3766 = vpop.f32.mrb[0].mxu0
    %v3767 = vadd.f32 %v2829, %v3766
    %v3768 = vpop.f32.mrb[0].mxu0
    %v3769 = vpop.f32.mrb[0].mxu0
    %v3770 = vadd.f32 %v2829, %v3769
    %v3771 = vpop.f32.mrb[0].mxu0
    %3772 = vmatprep.mubr.bf16.mxu0 0
    %3773 = vmatmul.mubr.bf16.gmra.mrb[0].mxu0 %v3037
    %v3774 = vpop.f32.mrb[0].mxu0
    %v3775 = vadd.f32 %v2829, %v3774
    %v3776 = vpop.f32.mrb[0].mxu0
    %v3777 = vpop.f32.mrb[0].mxu0
    %v3778 = vadd.f32 %v2829, %v3777
    %v3779 = vpop.f32.mrb[0].mxu0
    %3780 = vmatprep.mubr.bf16.mxu0 0
    %3781 = vmatmul.mubr.bf16.gmra.mrb[0].mxu0 %v3040
    %v3782 = vpop.f32.mrb[0].mxu0
    %v3783 = vadd.f32 %v2829, %v3782
    %v3784 = vpop.f32.mrb[0].mxu0
    %v3785 = vpop.f32.mrb[0].mxu0
    %v3786 = vadd.f32 %v2829, %v3785
    %v3787 = vpop.f32.mrb[0].mxu0
    %3788 = vmatprep.mubr.bf16.mxu0 0
    %3789 = vmatmul.mubr.bf16.gmra.mrb[0].mxu0 %v3043
    %v3790 = vpop.f32.mrb[0].mxu0
    %v3791 = vadd.f32 %v2829, %v3790
    %v3792 = vpop.f32.mrb[0].mxu0
    %v3793 = vpop.f32.mrb[0].mxu0
    %v3794 = vadd.f32 %v2829, %v3793
    %v3795 = vpop.f32.mrb[0].mxu0
    %3796 = vmatprep.mubr.bf16.mxu0 0
    %3797 = vmatmul.mubr.bf16.gmra.mrb[0].mxu0 %v3046
    %v3798 = vpop.f32.mrb[0].mxu0
    %v3799 = vadd.f32 %v2829, %v3798
    %v3800 = vpop.f32.mrb[0].mxu0
    %v3801 = vpop.f32.mrb[0].mxu0
    %v3802 = vadd.f32 %v2829, %v3801
    %v3803 = vpop.f32.mrb[0].mxu0
    %3804 = vmatprep.mubr.bf16.mxu0 0
    %3805 = vmatmul.mubr.bf16.gmra.mrb[0].mxu0 %v3049
    %v3806 = vpop.f32.mrb[0].mxu0
    %v3807 = vadd.f32 %v2829, %v3806
    %v3808 = vpop.f32.mrb[0].mxu0
    %v3809 = vpop.f32.mrb[0].mxu0
    %v3810 = vadd.f32 %v2829, %v3809
    %v3811 = vpop.f32.mrb[0].mxu0
    %3812 = vmatprep.mubr.bf16.mxu0 0
    %3813 = vmatmul.mubr.bf16.gmra.mrb[0].mxu0 %v3052
    %v3814 = vpop.f32.mrb[0].mxu0
    %v3815 = vadd.f32 %v2829, %v3814
    %v3816 = vpop.f32.mrb[0].mxu0
    %v3817 = vpop.f32.mrb[0].mxu0
    %v3818 = vadd.f32 %v2829, %v3817
    %v3819 = vpop.f32.mrb[0].mxu0
    %3820 = vmatprep.mubr.bf16.mxu0 0
    %3821 = vmatmul.mubr.bf16.gmra.mrb[0].mxu0 %v3055
    %v3822 = vpop.f32.mrb[0].mxu0
    %v3823 = vadd.f32 %v2829, %v3822
    %v3824 = vpop.f32.mrb[0].mxu0
    %v3825 = vpop.f32.mrb[0].mxu0
    %v3826 = vadd.f32 %v2829, %v3825
    %v3827 = vpop.f32.mrb[0].mxu0
    %3828 = vmatprep.mubr.bf16.mxu0 0
    %3829 = vmatmul.mubr.bf16.gmra.mrb[0].mxu0 %v3058
    %v3830 = vpop.f32.mrb[0].mxu0
    %v3831 = vadd.f32 %v2829, %v3830
    %v3832 = vpop.f32.mrb[0].mxu0
    %v3833 = vpop.f32.mrb[0].mxu0
    %v3834 = vadd.f32 %v2829, %v3833
    %v3835 = vpop.f32.mrb[0].mxu0
    %3836 = vmatprep.mubr.bf16.mxu0 0
    %3837 = vmatmul.mubr.bf16.gmra.mrb[0].mxu0 %v3061
    %v3838 = vpop.f32.mrb[0].mxu0
    %v3839 = vadd.f32 %v2829, %v3838
    %v3840 = vpop.f32.mrb[0].mxu0
    %v3841 = vpop.f32.mrb[0].mxu0
    %v3842 = vadd.f32 %v2829, %v3841
    %v3843 = vpop.f32.mrb[0].mxu0
    %3844 = vmatprep.mubr.bf16.mxu0 0
    %3845 = vmatmul.mubr.bf16.gmra.mrb[0].mxu0 %v3064
    %v3846 = vpop.f32.mrb[0].mxu0
    %v3847 = vadd.f32 %v2829, %v3846
    %v3848 = vpop.f32.mrb[0].mxu0
    %v3849 = vpop.f32.mrb[0].mxu0
    %v3850 = vadd.f32 %v2829, %v3849
    %v3851 = vpop.f32.mrb[0].mxu0
    %3852 = vmatprep.mubr.bf16.mxu0 0
    %3853 = vmatmul.mubr.bf16.gmra.mrb[0].mxu0 %v3067
    %v3854 = vpop.f32.mrb[0].mxu0
    %v3855 = vadd.f32 %v2829, %v3854
    %v3856 = vpop.f32.mrb[0].mxu0
    %v3857 = vpop.f32.mrb[0].mxu0
    %v3858 = vadd.f32 %v2829, %v3857
    %v3859 = vpop.f32.mrb[0].mxu0
    %3860 = vmatprep.mubr.bf16.mxu0 0
    %3861 = vmatmul.mubr.bf16.gmra.mrb[0].mxu0 %v3070
    %v3862 = vpop.f32.mrb[0].mxu0
    %v3863 = vadd.f32 %v2829, %v3862
    %v3864 = vpop.f32.mrb[0].mxu0
    %v3865 = vpop.f32.mrb[0].mxu0
    %v3866 = vadd.f32 %v2829, %v3865
    %v3867 = vpop.f32.mrb[0].mxu0
    %3868 = vmatprep.mubr.bf16.mxu0 0
    %3869 = vmatmul.mubr.bf16.gmra.mrb[0].mxu0 %v3073
    %v3870 = vpop.f32.mrb[0].mxu0
    %v3871 = vadd.f32 %v2829, %v3870
    %v3872 = vpop.f32.mrb[0].mxu0
    %v3873 = vpop.f32.mrb[0].mxu0
    %v3874 = vadd.f32 %v2829, %v3873
    %v3875 = vpop.f32.mrb[0].mxu0
    %3876 = vmatprep.mubr.bf16.mxu0 0
    %3877 = vmatmul.mubr.bf16.gmra.mrb[0].mxu0 %v3076
    %v3878 = vpop.f32.mrb[0].mxu0
    %v3879 = vadd.f32 %v2829, %v3878
    %v3880 = vpop.f32.mrb[0].mxu0
    %v3881 = vpop.f32.mrb[0].mxu0
    %v3882 = vadd.f32 %v2829, %v3881
    %v3883 = vpop.f32.mrb[0].mxu0
    %3884 = vmatprep.mubr.bf16.mxu0 0
    %3885 = vmatmul.mubr.bf16.gmra.mrb[0].mxu0 %v3079
    %v3886 = vpop.f32.mrb[0].mxu0
    %v3887 = vadd.f32 %v2829, %v3886
    %v3888 = vpop.f32.mrb[0].mxu0
    %v3889 = vpop.f32.mrb[0].mxu0
    %v3890 = vadd.f32 %v2829, %v3889
    %v3891 = vpop.f32.mrb[0].mxu0
    %3892 = vmatprep.mubr.bf16.mxu0 0
    %3893 = vmatmul.mubr.bf16.gmra.mrb[0].mxu0 %v3082
    %v3894 = vpop.f32.mrb[0].mxu0
    %v3895 = vadd.f32 %v2829, %v3894
    %v3896 = vpop.f32.mrb[0].mxu0
    %v3897 = vpop.f32.mrb[0].mxu0
    %v3898 = vadd.f32 %v2829, %v3897
    %v3899 = vpop.f32.mrb[0].mxu0
    %3900 = vmatprep.mubr.bf16.mxu0 0
    %3901 = vmatmul.mubr.bf16.gmra.mrb[0].mxu0 %v3085
    %v3902 = vpop.f32.mrb[0].mxu0
    %v3903 = vadd.f32 %v2829, %v3902
    %v3904 = vpop.f32.mrb[0].mxu0
    %v3905 = vpop.f32.mrb[0].mxu0
    %v3906 = vadd.f32 %v2829, %v3905
    %v3907 = vpop.f32.mrb[0].mxu0
    %3908 = vmatprep.mubr.bf16.mxu0 0
    %3909 = vmatmul.mubr.bf16.gmra.mrb[0].mxu0 %v3088
    %v3910 = vpop.f32.mrb[0].mxu0
    %v3911 = vadd.f32 %v2829, %v3910
    %v3912 = vpop.f32.mrb[0].mxu0
    %v3913 = vpop.f32.mrb[0].mxu0
    %v3914 = vadd.f32 %v2829, %v3913
    %v3915 = vpop.f32.mrb[0].mxu0
    %3916 = vmatprep.mubr.bf16.mxu0 0
    %3917 = vmatmul.mubr.bf16.gmra.mrb[0].mxu0 %v3091
    %v3918 = vpop.f32.mrb[0].mxu0
    %v3919 = vadd.f32 %v2829, %v3918
    %v3920 = vpop.f32.mrb[0].mxu0
    %v3921 = vpop.f32.mrb[0].mxu0
    %v3922 = vadd.f32 %v2829, %v3921
    %v3923 = vpop.f32.mrb[0].mxu0
    %3924 = vmatprep.mubr.bf16.mxu0 0
    %3925 = vmatmul.mubr.bf16.gmra.mrb[0].mxu0 %v3094
    %v3926 = vpop.f32.mrb[0].mxu0
    %v3927 = vadd.f32 %v2829, %v3926
    %v3928 = vpop.f32.mrb[0].mxu0
    %v3929 = vpop.f32.mrb[0].mxu0
    %v3930 = vadd.f32 %v2829, %v3929
    %v3931 = vpop.f32.mrb[0].mxu0
    %3932 = vmatprep.mubr.bf16.mxu0 0
    %3933 = vmatmul.mubr.bf16.gmra.mrb[0].mxu0 %v3097
    %v3934 = vpop.f32.mrb[0].mxu0
    %v3935 = vadd.f32 %v2829, %v3934
    %v3936 = vpop.f32.mrb[0].mxu0
    %v3937 = vpop.f32.mrb[0].mxu0
    %v3938 = vadd.f32 %v2829, %v3937
    %v3939 = vpop.f32.mrb[0].mxu0
    %3940 = vmatprep.mubr.bf16.mxu0 0
    %3941 = vmatmul.mubr.bf16.gmra.mrb[0].mxu0 %v3100
    %v3942 = vpop.f32.mrb[0].mxu0
    %v3943 = vadd.f32 %v2829, %v3942
    %v3944 = vpop.f32.mrb[0].mxu0
    %v3945 = vpop.f32.mrb[0].mxu0
    %v3946 = vadd.f32 %v2829, %v3945
    %v3947 = vpop.f32.mrb[0].mxu0
    %3948 = vmatprep.mubr.bf16.mxu0 0
    %3949 = vmatmul.mubr.bf16.gmra.mrb[0].mxu0 %v3103
    %v3950 = vpop.f32.mrb[0].mxu0
    %v3951 = vadd.f32 %v2829, %v3950
    %v3952 = vpop.f32.mrb[0].mxu0
    %v3953 = vpop.f32.mrb[0].mxu0
    %v3954 = vadd.f32 %v2829, %v3953
    %v3955 = vpop.f32.mrb[0].mxu0
    %3956 = vmatprep.mubr.bf16.mxu0 0
    %3957 = vmatmul.mubr.bf16.gmra.mrb[0].mxu0 %v3106
    %v3958 = vpop.f32.mrb[0].mxu0
    %v3959 = vadd.f32 %v2829, %v3958
    %v3960 = vpop.f32.mrb[0].mxu0
    %v3961 = vpop.f32.mrb[0].mxu0
    %v3962 = vadd.f32 %v2829, %v3961
    %v3963 = vpop.f32.mrb[0].mxu0
    %3964 = vmatprep.mubr.bf16.mxu0 0
    %3965 = vmatmul.mubr.bf16.gmra.mrb[0].mxu0 %v3109
    %v3966 = vpop.f32.mrb[0].mxu0
    %v3967 = vadd.f32 %v2829, %v3966
    %v3968 = vpop.f32.mrb[0].mxu0
    %v3969 = vpop.f32.mrb[0].mxu0
    %v3970 = vadd.f32 %v2829, %v3969
    %v3971 = vpop.f32.mrb[0].mxu0
    %3972 = vmatprep.mubr.bf16.mxu0 0
    %3973 = vmatmul.mubr.bf16.gmra.mrb[0].mxu0 %v3112
    %v3974 = vpop.f32.mrb[0].mxu0
    %v3975 = vadd.f32 %v2829, %v3974
    %v3976 = vpop.f32.mrb[0].mxu0
    %v3977 = vpop.f32.mrb[0].mxu0
    %v3978 = vadd.f32 %v2829, %v3977
    %v3979 = vpop.f32.mrb[0].mxu0
    %3980 = vmatprep.mubr.bf16.mxu0 0
    %3981 = vmatmul.mubr.bf16.gmra.mrb[0].mxu0 %v3115
    %v3982 = vpop.f32.mrb[0].mxu0
    %v3983 = vadd.f32 %v2829, %v3982
    %v3984 = vpop.f32.mrb[0].mxu0
    %v3985 = vpop.f32.mrb[0].mxu0
    %v3986 = vadd.f32 %v2829, %v3985
    %v3987 = vpop.f32.mrb[0].mxu0
    %3988 = vmatprep.mubr.bf16.mxu0 0
    %3989 = vmatmul.mubr.bf16.gmra.mrb[0].mxu0 %v3118
    %v3990 = vpop.f32.mrb[0].mxu0
    %v3991 = vadd.f32 %v2829, %v3990
    %v3992 = vpop.f32.mrb[0].mxu0
    %v3993 = vpop.f32.mrb[0].mxu0
    %v3994 = vadd.f32 %v2829, %v3993
    %v3995 = vpop.f32.mrb[0].mxu0
    %3996 = vmatprep.mubr.bf16.mxu0 0
    %3997 = vmatmul.mubr.bf16.gmra.mrb[0].mxu0 %v3121
    %v3998 = vpop.f32.mrb[0].mxu0
    %v3999 = vadd.f32 %v2829, %v3998
    %v4000 = vpop.f32.mrb[0].mxu0
    %v4001 = vpop.f32.mrb[0].mxu0
    %v4002 = vadd.f32 %v2829, %v4001
    %v4003 = vpop.f32.mrb[0].mxu0
    %4004 = vmatprep.mubr.bf16.mxu0 0
    %4005 = vmatmul.mubr.bf16.gmra.mrb[0].mxu0 %v3124
    %v4006 = vpop.f32.mrb[0].mxu0
    %v4007 = vadd.f32 %v2829, %v4006
    %v4008 = vpop.f32.mrb[0].mxu0
    %v4009 = vpop.f32.mrb[0].mxu0
    %v4010 = vadd.f32 %v2829, %v4009
    %v4011 = vpop.f32.mrb[0].mxu0
    %4012 = vmatprep.mubr.bf16.mxu0 0
    %4013 = vmatmul.mubr.bf16.gmra.mrb[0].mxu0 %v3127
    %v4014 = vpop.f32.mrb[0].mxu0
    %v4015 = vadd.f32 %v2829, %v4014
    %v4016 = vpop.f32.mrb[0].mxu0
    %v4017 = vpop.f32.mrb[0].mxu0
    %v4018 = vadd.f32 %v2829, %v4017
    %v4019 = vpop.f32.mrb[0].mxu0
    %4020 = vmatprep.mubr.bf16.mxu0 0
    %4021 = vmatmul.mubr.bf16.gmra.mrb[0].mxu0 %v3130
    %v4022 = vpop.f32.mrb[0].mxu0
    %v4023 = vadd.f32 %v2829, %v4022
    %v4024 = vpop.f32.mrb[0].mxu0
    %v4025 = vpop.f32.mrb[0].mxu0
    %v4026 = vadd.f32 %v2829, %v4025
    %v4027 = vpop.f32.mrb[0].mxu0
    %4028 = vmatprep.mubr.bf16.mxu0 0
    %4029 = vmatmul.mubr.bf16.gmra.mrb[0].mxu0 %v3133
    %v4030 = vpop.f32.mrb[0].mxu0
    %v4031 = vadd.f32 %v2829, %v4030
    %v4032 = vpop.f32.mrb[0].mxu0
    %v4033 = vpop.f32.mrb[0].mxu0
    %v4034 = vadd.f32 %v2829, %v4033
    %v4035 = vpop.f32.mrb[0].mxu0
    %4036 = vmatprep.mubr.bf16.mxu0 0
    %4037 = vmatmul.mubr.bf16.gmra.mrb[0].mxu0 %v3136
    %v4038 = vpop.f32.mrb[0].mxu0
    %v4039 = vadd.f32 %v2829, %v4038
    %v4040 = vpop.f32.mrb[0].mxu0
    %v4041 = vpop.f32.mrb[0].mxu0
    %v4042 = vadd.f32 %v2829, %v4041
    %v4043 = vpop.f32.mrb[0].mxu0
    %4044 = vmatprep.mubr.bf16.mxu0 0
    %4045 = vmatmul.mubr.bf16.gmra.mrb[0].mxu0 %v3139
    %v4046 = vpop.f32.mrb[0].mxu0
    %v4047 = vadd.f32 %v2829, %v4046
    %v4048 = vpop.f32.mrb[0].mxu0
    %v4049 = vpop.f32.mrb[0].mxu0
    %v4050 = vadd.f32 %v2829, %v4049
    %v4051 = vpop.f32.mrb[0].mxu0
    %4052 = vmatprep.mubr.bf16.mxu0 0
    %4053 = vmatmul.mubr.bf16.gmra.mrb[0].mxu0 %v3142
    %v4054 = vpop.f32.mrb[0].mxu0
    %v4055 = vadd.f32 %v2829, %v4054
    %v4056 = vpop.f32.mrb[0].mxu0
    %v4057 = vpop.f32.mrb[0].mxu0
    %v4058 = vadd.f32 %v2829, %v4057
    %v4059 = vpop.f32.mrb[0].mxu0
    %4060 = vmatprep.mubr.bf16.mxu0 0
    %4061 = vmatmul.mubr.bf16.gmra.mrb[0].mxu0 %v3145
    %v4062 = vpop.f32.mrb[0].mxu0
    %v4063 = vadd.f32 %v2829, %v4062
    %v4064 = vpop.f32.mrb[0].mxu0
    %v4065 = vpop.f32.mrb[0].mxu0
    %v4066 = vadd.f32 %v2829, %v4065
    %v4067 = vpop.f32.mrb[0].mxu0
    %4068 = vmatprep.mubr.bf16.mxu0 0
    %4069 = vmatmul.mubr.bf16.gmra.mrb[0].mxu0 %v3148
    %v4070 = vpop.f32.mrb[0].mxu0
    %v4071 = vadd.f32 %v2829, %v4070
    %v4072 = vpop.f32.mrb[0].mxu0
    %v4073 = vpop.f32.mrb[0].mxu0
    %v4074 = vadd.f32 %v2829, %v4073
    %v4075 = vpop.f32.mrb[0].mxu0
    %4076 = vmatprep.mubr.bf16.mxu0 0
    %4077 = vmatmul.mubr.bf16.gmra.mrb[0].mxu0 %v3151
    %v4078 = vpop.f32.mrb[0].mxu0
    %v4079 = vadd.f32 %v2829, %v4078
    %v4080 = vpop.f32.mrb[0].mxu0
    %v4081 = vpop.f32.mrb[0].mxu0
    %v4082 = vadd.f32 %v2829, %v4081
    %v4083 = vpop.f32.mrb[0].mxu0
    %4084 = vmatprep.mubr.bf16.mxu0 0
    %4085 = vmatmul.mubr.bf16.gmra.mrb[0].mxu0 %v3154
    %v4086 = vpop.f32.mrb[0].mxu0
    %v4087 = vadd.f32 %v2829, %v4086
    %v4088 = vpop.f32.mrb[0].mxu0
    %v4089 = vpop.f32.mrb[0].mxu0
    %v4090 = vadd.f32 %v2829, %v4089
    %v4091 = vpop.f32.mrb[0].mxu0
    %4092 = vmatprep.mubr.bf16.mxu0 0
    %4093 = vmatmul.mubr.bf16.gmra.mrb[0].mxu0 %v3157
    %v4094 = vpop.f32.mrb[0].mxu0
    %v4095 = vadd.f32 %v2829, %v4094
    %v4096 = vpop.f32.mrb[0].mxu0
    %v4097 = vpop.f32.mrb[0].mxu0
    %v4098 = vadd.f32 %v2829, %v4097
    %v4099 = vpop.f32.mrb[0].mxu0
    %4100 = vmatprep.mubr.bf16.mxu0 0
    %4101 = vmatmul.mubr.bf16.gmra.mrb[0].mxu0 %v3160
    %v4102 = vpop.f32.mrb[0].mxu0
    %v4103 = vadd.f32 %v2829, %v4102
    %v4104 = vpop.f32.mrb[0].mxu0
    %v4105 = vpop.f32.mrb[0].mxu0
    %v4106 = vadd.f32 %v2829, %v4105
    %v4107 = vpop.f32.mrb[0].mxu0
    %4108 = vmatprep.mubr.bf16.mxu0 0
    %4109 = vmatmul.mubr.bf16.gmra.mrb[0].mxu0 %v3163
    %v4110 = vpop.f32.mrb[0].mxu0
    %v4111 = vadd.f32 %v2829, %v4110
    %v4112 = vpop.f32.mrb[0].mxu0
    %v4113 = vpop.f32.mrb[0].mxu0
    %v4114 = vadd.f32 %v2829, %v4113
    %v4115 = vpop.f32.mrb[0].mxu0
    %4116 = vmatprep.mubr.bf16.mxu0 0
    %4117 = vmatmul.mubr.bf16.gmra.mrb[0].mxu0 %v3166
    %v4118 = vpop.f32.mrb[0].mxu0
    %v4119 = vadd.f32 %v2829, %v4118
    %v4120 = vpop.f32.mrb[0].mxu0
    %v4121 = vpop.f32.mrb[0].mxu0
    %v4122 = vadd.f32 %v2829, %v4121
    %v4123 = vpop.f32.mrb[0].mxu0
    %4124 = vmatprep.mubr.bf16.mxu0 0
    %4125 = vmatmul.mubr.bf16.gmra.mrb[0].mxu0 %v3169
    %v4126 = vpop.f32.mrb[0].mxu0
    %v4127 = vadd.f32 %v2829, %v4126
    %v4128 = vpop.f32.mrb[0].mxu0
    %v4129 = vpop.f32.mrb[0].mxu0
    %v4130 = vadd.f32 %v2829, %v4129
    %v4131 = vpop.f32.mrb[0].mxu0
    %4132 = vmatprep.mubr.bf16.mxu0 0
    %4133 = vmatmul.mubr.bf16.gmra.mrb[0].mxu0 %v3172
    %v4134 = vpop.f32.mrb[0].mxu0
    %v4135 = vadd.f32 %v2829, %v4134
    %v4136 = vpop.f32.mrb[0].mxu0
    %v4137 = vpop.f32.mrb[0].mxu0
    %v4138 = vadd.f32 %v2829, %v4137
    %v4139 = vpop.f32.mrb[0].mxu0
    %4140 = vmatprep.mubr.bf16.mxu0 0
    %4141 = vmatmul.mubr.bf16.gmra.mrb[0].mxu0 %v3175
    %v4142 = vpop.f32.mrb[0].mxu0
    %v4143 = vadd.f32 %v2829, %v4142
    %v4144 = vpop.f32.mrb[0].mxu0
    %v4145 = vpop.f32.mrb[0].mxu0
    %v4146 = vadd.f32 %v2829, %v4145
    %v4147 = vpop.f32.mrb[0].mxu0
    %4148 = vmatprep.mubr.bf16.mxu0 0
    %4149 = vmatmul.mubr.bf16.gmra.mrb[0].mxu0 %v3178
    %v4150 = vpop.f32.mrb[0].mxu0
    %v4151 = vadd.f32 %v2829, %v4150
    %v4152 = vpop.f32.mrb[0].mxu0
    %v4153 = vpop.f32.mrb[0].mxu0
    %v4154 = vadd.f32 %v2829, %v4153
    %v4155 = vpop.f32.mrb[0].mxu0
    %4156 = vmatprep.mubr.bf16.mxu0 0
    %4157 = vmatmul.mubr.bf16.gmra.mrb[0].mxu0 %v3181
    %v4158 = vpop.f32.mrb[0].mxu0
    %v4159 = vadd.f32 %v2829, %v4158
    %v4160 = vpop.f32.mrb[0].mxu0
    %v4161 = vpop.f32.mrb[0].mxu0
    %v4162 = vadd.f32 %v2829, %v4161
    %v4163 = vpop.f32.mrb[0].mxu0
    %4164 = vmatprep.mubr.bf16.mxu0 0
    %4165 = vmatmul.mubr.bf16.gmra.mrb[0].mxu0 %v3184
    %v4166 = vpop.f32.mrb[0].mxu0
    %v4167 = vadd.f32 %v2829, %v4166
    %v4168 = vpop.f32.mrb[0].mxu0
    %v4169 = vpop.f32.mrb[0].mxu0
    %v4170 = vadd.f32 %v2829, %v4169
    %v4171 = vpop.f32.mrb[0].mxu0
    %4172 = vmatprep.mubr.bf16.mxu0 0
    %4173 = vmatmul.mubr.bf16.gmra.mrb[0].mxu0 %v3187
    %v4174 = vpop.f32.mrb[0].mxu0
    %v4175 = vadd.f32 %v2829, %v4174
    %v4176 = vpop.f32.mrb[0].mxu0
    %v4177 = vpop.f32.mrb[0].mxu0
    %v4178 = vadd.f32 %v2829, %v4177
    %v4179 = vpop.f32.mrb[0].mxu0
    %4180 = vmatprep.mubr.bf16.mxu0 0
    %4181 = vmatmul.mubr.bf16.gmra.mrb[0].mxu0 %v3190
    %v4182 = vpop.f32.mrb[0].mxu0
    %v4183 = vadd.f32 %v2829, %v4182
    %v4184 = vpop.f32.mrb[0].mxu0
    %v4185 = vpop.f32.mrb[0].mxu0
    %v4186 = vadd.f32 %v2829, %v4185
    %v4187 = vpop.f32.mrb[0].mxu0
    %4188 = vmatprep.mubr.bf16.mxu0 0
    %4189 = vmatmul.mubr.bf16.gmra.mrb[0].mxu0 %v3193
    %v4190 = vpop.f32.mrb[0].mxu0
    %v4191 = vadd.f32 %v2829, %v4190
    %v4192 = vpop.f32.mrb[0].mxu0
    %v4193 = vpop.f32.mrb[0].mxu0
    %v4194 = vadd.f32 %v2829, %v4193
    %v4195 = vpop.f32.mrb[0].mxu0
    %4196 = vmatprep.mubr.bf16.mxu0 0
    %4197 = vmatmul.mubr.bf16.gmra.mrb[0].mxu0 %v3196
    %v4198 = vpop.f32.mrb[0].mxu0
    %v4199 = vadd.f32 %v2829, %v4198
    %v4200 = vpop.f32.mrb[0].mxu0
    %v4201 = vpop.f32.mrb[0].mxu0
    %v4202 = vadd.f32 %v2829, %v4201
    %v4203 = vpop.f32.mrb[0].mxu0
    %4204 = vmatprep.mubr.bf16.mxu0 0
    %4205 = vmatmul.mubr.bf16.gmra.mrb[0].mxu0 %v3199
    %v4206 = vpop.f32.mrb[0].mxu0
    %v4207 = vadd.f32 %v2829, %v4206
    %v4208 = vpop.f32.mrb[0].mxu0
    %v4209 = vpop.f32.mrb[0].mxu0
    %v4210 = vadd.f32 %v2829, %v4209
    %v4211 = vpop.f32.mrb[0].mxu0
    %4212 = vmatprep.mubr.bf16.mxu0 0
    %4213 = vmatmul.mubr.bf16.gmra.mrb[0].mxu0 %v3202
    %v4214 = vpop.f32.mrb[0].mxu0
    %v4215 = vadd.f32 %v2829, %v4214
    %v4216 = vpop.f32.mrb[0].mxu0
    %v4217 = vpop.f32.mrb[0].mxu0
    %v4218 = vadd.f32 %v2829, %v4217
    %v4219 = vpop.f32.mrb[0].mxu0
    %4220 = vmatprep.mubr.bf16.mxu0 0
    %4221 = vmatmul.mubr.bf16.gmra.mrb[0].mxu0 %v3205
    %v4222 = vpop.f32.mrb[0].mxu0
    %v4223 = vadd.f32 %v2829, %v4222
    %v4224 = vpop.f32.mrb[0].mxu0
    %v4225 = vpop.f32.mrb[0].mxu0
    %v4226 = vadd.f32 %v2829, %v4225
    %v4227 = vpop.f32.mrb[0].mxu0
    %4228 = vmatprep.mubr.bf16.mxu0 0
    %4229 = vmatmul.mubr.bf16.gmra.mrb[0].mxu0 %v3208
    %v4230 = vpop.f32.mrb[0].mxu0
    %v4231 = vadd.f32 %v2829, %v4230
    %v4232 = vpop.f32.mrb[0].mxu0
    %v4233 = vpop.f32.mrb[0].mxu0
    %v4234 = vadd.f32 %v2829, %v4233
    %v4235 = vpop.f32.mrb[0].mxu0
    %4236 = vmatprep.mubr.bf16.mxu0 0
    %4237 = vmatmul.mubr.bf16.gmra.mrb[0].mxu0 %v3211
    %v4238 = vpop.f32.mrb[0].mxu0
    %v4239 = vadd.f32 %v2829, %v4238
    %v4240 = vpop.f32.mrb[0].mxu0
    %v4241 = vpop.f32.mrb[0].mxu0
    %v4242 = vadd.f32 %v2829, %v4241
    %v4243 = vpop.f32.mrb[0].mxu0
    %4244 = vmatprep.mubr.bf16.mxu0 0
    %4245 = vmatmul.mubr.bf16.gmra.mrb[0].mxu0 %v3214
    %v4246 = vpop.f32.mrb[0].mxu0
    %v4247 = vadd.f32 %v2829, %v4246
    %v4248 = vpop.f32.mrb[0].mxu0
    %v4249 = vpop.f32.mrb[0].mxu0
    %v4250 = vadd.f32 %v2829, %v4249
    %v4251 = vpop.f32.mrb[0].mxu0
    %4252 = vmatprep.mubr.bf16.mxu0 0
    %4253 = vmatmul.mubr.bf16.gmra.mrb[0].mxu0 %v3217
    %v4254 = vpop.f32.mrb[0].mxu0
    %v4255 = vadd.f32 %v2829, %v4254
    %v4256 = vpop.f32.mrb[0].mxu0
    %v4257 = vpop.f32.mrb[0].mxu0
    %v4258 = vadd.f32 %v2829, %v4257
    %v4259 = vpop.f32.mrb[0].mxu0
    %4260 = vmatprep.mubr.bf16.mxu0 0
    %4261 = vmatmul.mubr.bf16.gmra.mrb[0].mxu0 %v3220
    %v4262 = vpop.f32.mrb[0].mxu0
    %v4263 = vadd.f32 %v2829, %v4262
    %v4264 = vpop.f32.mrb[0].mxu0
    %v4265 = vpop.f32.mrb[0].mxu0
    %v4266 = vadd.f32 %v2829, %v4265
    %v4267 = vpop.f32.mrb[0].mxu0
    %4268 = vmatprep.mubr.bf16.mxu0 0
    %4269 = vmatmul.mubr.bf16.gmra.mrb[0].mxu0 %v3223
    %v4270 = vpop.f32.mrb[0].mxu0
    %v4271 = vadd.f32 %v2829, %v4270
    %v4272 = vpop.f32.mrb[0].mxu0
    %v4273 = vpop.f32.mrb[0].mxu0
    %v4274 = vadd.f32 %v2829, %v4273
    %v4275 = vpop.f32.mrb[0].mxu0
    %4276 = vmatprep.mubr.bf16.mxu0 0
    %4277 = vmatmul.mubr.bf16.gmra.mrb[0].mxu0 %v3226
    %v4278 = vpop.f32.mrb[0].mxu0
    %v4279 = vadd.f32 %v2829, %v4278
    %v4280 = vpop.f32.mrb[0].mxu0
    %v4281 = vpop.f32.mrb[0].mxu0
    %v4282 = vadd.f32 %v2829, %v4281
    %v4283 = vpop.f32.mrb[0].mxu0
    %4284 = vdwg.mxu0
    %v4285 = vmax.f32 %v3263, 0.0
    %v4286 = vmax.f32 %v3266, 0.0
    %v4287 = vmax.f32 %v3271, 0.0
    %v4288 = vmax.f32 %v3274, 0.0
    %v4289 = vmax.f32 %v3279, 0.0
    %v4290 = vmax.f32 %v3282, 0.0
    %v4291 = vmax.f32 %v3287, 0.0
    %v4292 = vmax.f32 %v3290, 0.0
    %v4293 = vmax.f32 %v3295, 0.0
    %v4294 = vmax.f32 %v3298, 0.0
    %v4295 = vmax.f32 %v3303, 0.0
    %v4296 = vmax.f32 %v3306, 0.0
    %v4297 = vmax.f32 %v3311, 0.0
    %v4298 = vmax.f32 %v3314, 0.0
    %v4299 = vmax.f32 %v3319, 0.0
    %v4300 = vmax.f32 %v3322, 0.0
    %v4301 = vmax.f32 %v3327, 0.0
    %v4302 = vmax.f32 %v3330, 0.0
    %v4303 = vmax.f32 %v3335, 0.0
    %v4304 = vmax.f32 %v3338, 0.0
    %v4305 = vmax.f32 %v3343, 0.0
    %v4306 = vmax.f32 %v3346, 0.0
    %v4307 = vmax.f32 %v3351, 0.0
    %v4308 = vmax.f32 %v3354, 0.0
    %v4309 = vmax.f32 %v3359, 0.0
    %v4310 = vmax.f32 %v3362, 0.0
    %v4311 = vmax.f32 %v3367, 0.0
    %v4312 = vmax.f32 %v3370, 0.0
    %v4313 = vmax.f32 %v3375, 0.0
    %v4314 = vmax.f32 %v3378, 0.0
    %v4315 = vmax.f32 %v3383, 0.0
    %v4316 = vmax.f32 %v3386, 0.0
    %v4317 = vmax.f32 %v3391, 0.0
    %v4318 = vmax.f32 %v3394, 0.0
    %v4319 = vmax.f32 %v3399, 0.0
    %v4320 = vmax.f32 %v3402, 0.0
    %v4321 = vmax.f32 %v3407, 0.0
    %v4322 = vmax.f32 %v3410, 0.0
    %v4323 = vmax.f32 %v3415, 0.0
    %v4324 = vmax.f32 %v3418, 0.0
    %v4325 = vmax.f32 %v3423, 0.0
    %v4326 = vmax.f32 %v3426, 0.0
    %v4327 = vmax.f32 %v3431, 0.0
    %v4328 = vmax.f32 %v3434, 0.0
    %v4329 = vmax.f32 %v3439, 0.0
    %v4330 = vmax.f32 %v3442, 0.0
    %v4331 = vmax.f32 %v3447, 0.0
    %v4332 = vmax.f32 %v3450, 0.0
    %v4333 = vmax.f32 %v3455, 0.0
    %v4334 = vmax.f32 %v3458, 0.0
    %v4335 = vmax.f32 %v3463, 0.0
    %v4336 = vmax.f32 %v3466, 0.0
    %v4337 = vmax.f32 %v3471, 0.0
    %v4338 = vmax.f32 %v3474, 0.0
    %v4339 = vmax.f32 %v3479, 0.0
    %v4340 = vmax.f32 %v3482, 0.0
    %v4341 = vmax.f32 %v3487, 0.0
    %v4342 = vmax.f32 %v3490, 0.0
    %v4343 = vmax.f32 %v3495, 0.0
    %v4344 = vmax.f32 %v3498, 0.0
    %v4345 = vmax.f32 %v3503, 0.0
    %v4346 = vmax.f32 %v3506, 0.0
    %v4347 = vmax.f32 %v3511, 0.0
    %v4348 = vmax.f32 %v3514, 0.0
    %v4349 = vmax.f32 %v3519, 0.0
    %v4350 = vmax.f32 %v3522, 0.0
    %v4351 = vmax.f32 %v3527, 0.0
    %v4352 = vmax.f32 %v3530, 0.0
    %v4353 = vmax.f32 %v3535, 0.0
    %v4354 = vmax.f32 %v3538, 0.0
    %v4355 = vmax.f32 %v3543, 0.0
    %v4356 = vmax.f32 %v3546, 0.0
    %v4357 = vmax.f32 %v3551, 0.0
    %v4358 = vmax.f32 %v3554, 0.0
    %v4359 = vmax.f32 %v3559, 0.0
    %v4360 = vmax.f32 %v3562, 0.0
    %v4361 = vmax.f32 %v3567, 0.0
    %v4362 = vmax.f32 %v3570, 0.0
    %v4363 = vmax.f32 %v3575, 0.0
    %v4364 = vmax.f32 %v3578, 0.0
    %v4365 = vmax.f32 %v3583, 0.0
    %v4366 = vmax.f32 %v3586, 0.0
    %v4367 = vmax.f32 %v3591, 0.0
    %v4368 = vmax.f32 %v3594, 0.0
    %v4369 = vmax.f32 %v3599, 0.0
    %v4370 = vmax.f32 %v3602, 0.0
    %v4371 = vmax.f32 %v3607, 0.0
    %v4372 = vmax.f32 %v3610, 0.0
    %v4373 = vmax.f32 %v3615, 0.0
    %v4374 = vmax.f32 %v3618, 0.0
    %v4375 = vmax.f32 %v3623, 0.0
    %v4376 = vmax.f32 %v3626, 0.0
    %v4377 = vmax.f32 %v3631, 0.0
    %v4378 = vmax.f32 %v3634, 0.0
    %v4379 = vmax.f32 %v3639, 0.0
    %v4380 = vmax.f32 %v3642, 0.0
    %v4381 = vmax.f32 %v3647, 0.0
    %v4382 = vmax.f32 %v3650, 0.0
    %v4383 = vmax.f32 %v3655, 0.0
    %v4384 = vmax.f32 %v3658, 0.0
    %v4385 = vmax.f32 %v3663, 0.0
    %v4386 = vmax.f32 %v3666, 0.0
    %v4387 = vmax.f32 %v3671, 0.0
    %v4388 = vmax.f32 %v3674, 0.0
    %v4389 = vmax.f32 %v3679, 0.0
    %v4390 = vmax.f32 %v3682, 0.0
    %v4391 = vmax.f32 %v3687, 0.0
    %v4392 = vmax.f32 %v3690, 0.0
    %v4393 = vmax.f32 %v3695, 0.0
    %v4394 = vmax.f32 %v3698, 0.0
    %v4395 = vmax.f32 %v3703, 0.0
    %v4396 = vmax.f32 %v3706, 0.0
    %v4397 = vmax.f32 %v3711, 0.0
    %v4398 = vmax.f32 %v3714, 0.0
    %v4399 = vmax.f32 %v3719, 0.0
    %v4400 = vmax.f32 %v3722, 0.0
    %v4401 = vmax.f32 %v3727, 0.0
    %v4402 = vmax.f32 %v3730, 0.0
    %v4403 = vmax.f32 %v3735, 0.0
    %v4404 = vmax.f32 %v3738, 0.0
    %v4405 = vmax.f32 %v3743, 0.0
    %v4406 = vmax.f32 %v3746, 0.0
    %v4407 = vmax.f32 %v3751, 0.0
    %v4408 = vmax.f32 %v3754, 0.0
    %v4409 = vmax.f32 %v3759, 0.0
    %v4410 = vmax.f32 %v3762, 0.0
    %v4411 = vmax.f32 %v3767, 0.0
    %v4412 = vmax.f32 %v3770, 0.0
    %v4413 = vmax.f32 %v3775, 0.0
    %v4414 = vmax.f32 %v3778, 0.0
    %v4415 = vmax.f32 %v3783, 0.0
    %v4416 = vmax.f32 %v3786, 0.0
    %v4417 = vmax.f32 %v3791, 0.0
    %v4418 = vmax.f32 %v3794, 0.0
    %v4419 = vmax.f32 %v3799, 0.0
    %v4420 = vmax.f32 %v3802, 0.0
    %v4421 = vmax.f32 %v3807, 0.0
    %v4422 = vmax.f32 %v3810, 0.0
    %v4423 = vmax.f32 %v3815, 0.0
    %v4424 = vmax.f32 %v3818, 0.0
    %v4425 = vmax.f32 %v3823, 0.0
    %v4426 = vmax.f32 %v3826, 0.0
    %v4427 = vmax.f32 %v3831, 0.0
    %v4428 = vmax.f32 %v3834, 0.0
    %v4429 = vmax.f32 %v3839, 0.0
    %v4430 = vmax.f32 %v3842, 0.0
    %v4431 = vmax.f32 %v3847, 0.0
    %v4432 = vmax.f32 %v3850, 0.0
    %v4433 = vmax.f32 %v3855, 0.0
    %v4434 = vmax.f32 %v3858, 0.0
    %v4435 = vmax.f32 %v3863, 0.0
    %v4436 = vmax.f32 %v3866, 0.0
    %v4437 = vmax.f32 %v3871, 0.0
    %v4438 = vmax.f32 %v3874, 0.0
    %v4439 = vmax.f32 %v3879, 0.0
    %v4440 = vmax.f32 %v3882, 0.0
    %v4441 = vmax.f32 %v3887, 0.0
    %v4442 = vmax.f32 %v3890, 0.0
    %v4443 = vmax.f32 %v3895, 0.0
    %v4444 = vmax.f32 %v3898, 0.0
    %v4445 = vmax.f32 %v3903, 0.0
    %v4446 = vmax.f32 %v3906, 0.0
    %v4447 = vmax.f32 %v3911, 0.0
    %v4448 = vmax.f32 %v3914, 0.0
    %v4449 = vmax.f32 %v3919, 0.0
    %v4450 = vmax.f32 %v3922, 0.0
    %v4451 = vmax.f32 %v3927, 0.0
    %v4452 = vmax.f32 %v3930, 0.0
    %v4453 = vmax.f32 %v3935, 0.0
    %v4454 = vmax.f32 %v3938, 0.0
    %v4455 = vmax.f32 %v3943, 0.0
    %v4456 = vmax.f32 %v3946, 0.0
    %v4457 = vmax.f32 %v3951, 0.0
    %v4458 = vmax.f32 %v3954, 0.0
    %v4459 = vmax.f32 %v3959, 0.0
    %v4460 = vmax.f32 %v3962, 0.0
    %v4461 = vmax.f32 %v3967, 0.0
    %v4462 = vmax.f32 %v3970, 0.0
    %v4463 = vmax.f32 %v3975, 0.0
    %v4464 = vmax.f32 %v3978, 0.0
    %v4465 = vmax.f32 %v3983, 0.0
    %v4466 = vmax.f32 %v3986, 0.0
    %v4467 = vmax.f32 %v3991, 0.0
    %v4468 = vmax.f32 %v3994, 0.0
    %v4469 = vmax.f32 %v3999, 0.0
    %v4470 = vmax.f32 %v4002, 0.0
    %v4471 = vmax.f32 %v4007, 0.0
    %v4472 = vmax.f32 %v4010, 0.0
    %v4473 = vmax.f32 %v4015, 0.0
    %v4474 = vmax.f32 %v4018, 0.0
    %v4475 = vmax.f32 %v4023, 0.0
    %v4476 = vmax.f32 %v4026, 0.0
    %v4477 = vmax.f32 %v4031, 0.0
    %v4478 = vmax.f32 %v4034, 0.0
    %v4479 = vmax.f32 %v4039, 0.0
    %v4480 = vmax.f32 %v4042, 0.0
    %v4481 = vmax.f32 %v4047, 0.0
    %v4482 = vmax.f32 %v4050, 0.0
    %v4483 = vmax.f32 %v4055, 0.0
    %v4484 = vmax.f32 %v4058, 0.0
    %v4485 = vmax.f32 %v4063, 0.0
    %v4486 = vmax.f32 %v4066, 0.0
    %v4487 = vmax.f32 %v4071, 0.0
    %v4488 = vmax.f32 %v4074, 0.0
    %v4489 = vmax.f32 %v4079, 0.0
    %v4490 = vmax.f32 %v4082, 0.0
    %v4491 = vmax.f32 %v4087, 0.0
    %v4492 = vmax.f32 %v4090, 0.0
    %v4493 = vmax.f32 %v4095, 0.0
    %v4494 = vmax.f32 %v4098, 0.0
    %v4495 = vmax.f32 %v4103, 0.0
    %v4496 = vmax.f32 %v4106, 0.0
    %v4497 = vmax.f32 %v4111, 0.0
    %v4498 = vmax.f32 %v4114, 0.0
    %v4499 = vmax.f32 %v4119, 0.0
    %v4500 = vmax.f32 %v4122, 0.0
    %v4501 = vmax.f32 %v4127, 0.0
    %v4502 = vmax.f32 %v4130, 0.0
    %v4503 = vmax.f32 %v4135, 0.0
    %v4504 = vmax.f32 %v4138, 0.0
    %v4505 = vmax.f32 %v4143, 0.0
    %v4506 = vmax.f32 %v4146, 0.0
    %v4507 = vmax.f32 %v4151, 0.0
    %v4508 = vmax.f32 %v4154, 0.0
    %v4509 = vmax.f32 %v4159, 0.0
    %v4510 = vmax.f32 %v4162, 0.0
    %v4511 = vmax.f32 %v4167, 0.0
    %v4512 = vmax.f32 %v4170, 0.0
    %v4513 = vmax.f32 %v4175, 0.0
    %v4514 = vmax.f32 %v4178, 0.0
    %v4515 = vmax.f32 %v4183, 0.0
    %v4516 = vmax.f32 %v4186, 0.0
    %v4517 = vmax.f32 %v4191, 0.0
    %v4518 = vmax.f32 %v4194, 0.0
    %v4519 = vmax.f32 %v4199, 0.0
    %v4520 = vmax.f32 %v4202, 0.0
    %v4521 = vmax.f32 %v4207, 0.0
    %v4522 = vmax.f32 %v4210, 0.0
    %v4523 = vmax.f32 %v4215, 0.0
    %v4524 = vmax.f32 %v4218, 0.0
    %v4525 = vmax.f32 %v4223, 0.0
    %v4526 = vmax.f32 %v4226, 0.0
    %v4527 = vmax.f32 %v4231, 0.0
    %v4528 = vmax.f32 %v4234, 0.0
    %v4529 = vmax.f32 %v4239, 0.0
    %v4530 = vmax.f32 %v4242, 0.0
    %v4531 = vmax.f32 %v4247, 0.0
    %v4532 = vmax.f32 %v4250, 0.0
    %v4533 = vmax.f32 %v4255, 0.0
    %v4534 = vmax.f32 %v4258, 0.0
    %v4535 = vmax.f32 %v4263, 0.0
    %v4536 = vmax.f32 %v4266, 0.0
    %v4537 = vmax.f32 %v4271, 0.0
    %v4538 = vmax.f32 %v4274, 0.0
    %v4539 = vmax.f32 %v4279, 0.0
    %v4540 = vmax.f32 %v4282, 0.0
    %v4541 = vlaneseq
    %v4542 = vshrl.u32 %v4541, 7
    %v4543 = vld [vmem:[%s71] sm:$0xff]
    %v4544 = vld [vmem:[%s71 + $0x8] sm:$0xff]
    %v4545 = vlaneseq
    %v4546 = vshrl.u32 %v4545, 7
    %v4547 = vsub.s32 0, %v4546
    %v4548 = vrot.slane %v4543, %v4547
    %v4549 = vlaneseq
    %v4550 = vshrl.u32 %v4549, 7
    %v4551 = vsub.s32 1, %v4550
    %v4552 = vrot.slane %v4543, %v4551
    %v4553 = vlaneseq
    %v4554 = vshrl.u32 %v4553, 7
    %v4555 = vsub.s32 2, %v4554
    %v4556 = vrot.slane %v4543, %v4555
    %v4557 = vlaneseq
    %v4558 = vshrl.u32 %v4557, 7
    %v4559 = vsub.s32 3, %v4558
    %v4560 = vrot.slane %v4543, %v4559
    %v4561 = vlaneseq
    %v4562 = vshrl.u32 %v4561, 7
    %v4563 = vsub.s32 4, %v4562
    %v4564 = vrot.slane %v4543, %v4563
    %v4565 = vlaneseq
    %v4566 = vshrl.u32 %v4565, 7
    %v4567 = vsub.s32 5, %v4566
    %v4568 = vrot.slane %v4543, %v4567
    %v4569 = vlaneseq
    %v4570 = vshrl.u32 %v4569, 7
    %v4571 = vsub.s32 6, %v4570
    %v4572 = vrot.slane %v4543, %v4571
    %v4573 = vlaneseq
    %v4574 = vshrl.u32 %v4573, 7
    %v4575 = vsub.s32 7, %v4574
    %v4576 = vrot.slane %v4543, %v4575
    %v4577 = vlaneseq
    %v4578 = vshrl.u32 %v4577, 7
    %v4579 = vsub.s32 0, %v4578
    %v4580 = vrot.slane %v4544, %v4579
    %v4581 = vlaneseq
    %v4582 = vshrl.u32 %v4581, 7
    %v4583 = vsub.s32 1, %v4582
    %v4584 = vrot.slane %v4544, %v4583
    %v4585 = vlaneseq
    %v4586 = vshrl.u32 %v4585, 7
    %v4587 = vsub.s32 2, %v4586
    %v4588 = vrot.slane %v4544, %v4587
    %v4589 = vlaneseq
    %v4590 = vshrl.u32 %v4589, 7
    %v4591 = vsub.s32 3, %v4590
    %v4592 = vrot.slane %v4544, %v4591
    %v4593 = vlaneseq
    %v4594 = vshrl.u32 %v4593, 7
    %v4595 = vsub.s32 4, %v4594
    %v4596 = vrot.slane %v4544, %v4595
    %v4597 = vlaneseq
    %v4598 = vshrl.u32 %v4597, 7
    %v4599 = vsub.s32 5, %v4598
    %v4600 = vrot.slane %v4544, %v4599
    %v4601 = vlaneseq
    %v4602 = vshrl.u32 %v4601, 7
    %v4603 = vsub.s32 6, %v4602
    %v4604 = vrot.slane %v4544, %v4603
    %v4605 = vlaneseq
    %v4606 = vshrl.u32 %v4605, 7
    %v4607 = vsub.s32 7, %v4606
    %v4608 = vrot.slane %v4544, %v4607
    %vm4609 = vcmp.eq.s32.totalorder %v4542, %v4548
    %vm4610 = vcmp.eq.s32.totalorder %v4542, %v4552
    %vm4611 = vcmp.eq.s32.totalorder %v4542, %v4556
    %vm4612 = vcmp.eq.s32.totalorder %v4542, %v4560
    %vm4613 = vcmp.eq.s32.totalorder %v4542, %v4564
    %vm4614 = vcmp.eq.s32.totalorder %v4542, %v4568
    %vm4615 = vcmp.eq.s32.totalorder %v4542, %v4572
    %vm4616 = vcmp.eq.s32.totalorder %v4542, %v4576
    %vm4617 = vcmp.eq.s32.totalorder %v4542, %v4580
    %vm4618 = vcmp.eq.s32.totalorder %v4542, %v4584
    %vm4619 = vcmp.eq.s32.totalorder %v4542, %v4588
    %vm4620 = vcmp.eq.s32.totalorder %v4542, %v4592
    %vm4621 = vcmp.eq.s32.totalorder %v4542, %v4596
    %vm4622 = vcmp.eq.s32.totalorder %v4542, %v4600
    %vm4623 = vcmp.eq.s32.totalorder %v4542, %v4604
    %vm4624 = vcmp.eq.s32.totalorder %v4542, %v4608
    %v4625 = vsel %vm4609, 1, 0
    %v4626 = vsel %vm4610, 1, 0
    %v4627 = vsel %vm4611, 1, 0
    %v4628 = vsel %vm4612, 1, 0
    %v4629 = vsel %vm4613, 1, 0
    %v4630 = vsel %vm4614, 1, 0
    %v4631 = vsel %vm4615, 1, 0
    %v4632 = vsel %vm4616, 1, 0
    %v4633 = vsel %vm4617, 1, 0
    %v4634 = vsel %vm4618, 1, 0
    %v4635 = vsel %vm4619, 1, 0
    %v4636 = vsel %vm4620, 1, 0
    %v4637 = vsel %vm4621, 1, 0
    %v4638 = vsel %vm4622, 1, 0
    %v4639 = vsel %vm4623, 1, 0
    %v4640 = vsel %vm4624, 1, 0
    %v4641 = vcvt.s32.f32 %v4625
    %v4642 = vcvt.s32.f32 %v4626
    %v4643 = vcvt.s32.f32 %v4627
    %v4644 = vcvt.s32.f32 %v4628
    %v4645 = vcvt.s32.f32 %v4629
    %v4646 = vcvt.s32.f32 %v4630
    %v4647 = vcvt.s32.f32 %v4631
    %v4648 = vcvt.s32.f32 %v4632
    %v4649 = vcvt.s32.f32 %v4633
    %v4650 = vcvt.s32.f32 %v4634
    %v4651 = vcvt.s32.f32 %v4635
    %v4652 = vcvt.s32.f32 %v4636
    %v4653 = vcvt.s32.f32 %v4637
    %v4654 = vcvt.s32.f32 %v4638
    %v4655 = vcvt.s32.f32 %v4639
    %v4656 = vcvt.s32.f32 %v4640
    %v4657 = vpack.c.bf16 %v4641, %v4641
    %v4658 = vpack.c.bf16 %v4642, %v4642
    %v4659 = vpack.c.bf16 %v4643, %v4643
    %v4660 = vpack.c.bf16 %v4644, %v4644
    %v4661 = vpack.c.bf16 %v4645, %v4645
    %v4662 = vpack.c.bf16 %v4646, %v4646
    %v4663 = vpack.c.bf16 %v4647, %v4647
    %v4664 = vpack.c.bf16 %v4648, %v4648
    %v4665 = vpack.c.bf16 %v4649, %v4649
    %v4666 = vpack.c.bf16 %v4650, %v4650
    %v4667 = vpack.c.bf16 %v4651, %v4651
    %v4668 = vpack.c.bf16 %v4652, %v4652
    %v4669 = vpack.c.bf16 %v4653, %v4653
    %v4670 = vpack.c.bf16 %v4654, %v4654
    %v4671 = vpack.c.bf16 %v4655, %v4655
    %v4672 = vpack.c.bf16 %v4656, %v4656
    %v4673 = vld [vmem:[#allocation2] sm:$0xff]
    %v4674 = vpack.c.bf16 %v4286, %v4285
    %v4675 = vpack.c.bf16 %v4288, %v4287
    %v4676 = vpack.c.bf16 %v4290, %v4289
    %v4677 = vpack.c.bf16 %v4292, %v4291
    %v4678 = vpack.c.bf16 %v4294, %v4293
    %v4679 = vpack.c.bf16 %v4296, %v4295
    %v4680 = vpack.c.bf16 %v4298, %v4297
    %v4681 = vpack.c.bf16 %v4300, %v4299
    %v4682 = vpack.c.bf16 %v4302, %v4301
    %v4683 = vpack.c.bf16 %v4304, %v4303
    %v4684 = vpack.c.bf16 %v4306, %v4305
    %v4685 = vpack.c.bf16 %v4308, %v4307
    %v4686 = vpack.c.bf16 %v4310, %v4309
    %v4687 = vpack.c.bf16 %v4312, %v4311
    %v4688 = vpack.c.bf16 %v4314, %v4313
    %v4689 = vpack.c.bf16 %v4316, %v4315
    %v4690 = vpack.c.bf16 %v4318, %v4317
    %v4691 = vpack.c.bf16 %v4320, %v4319
    %v4692 = vpack.c.bf16 %v4322, %v4321
    %v4693 = vpack.c.bf16 %v4324, %v4323
    %v4694 = vpack.c.bf16 %v4326, %v4325
    %v4695 = vpack.c.bf16 %v4328, %v4327
    %v4696 = vpack.c.bf16 %v4330, %v4329
    %v4697 = vpack.c.bf16 %v4332, %v4331
    %v4698 = vpack.c.bf16 %v4334, %v4333
    %v4699 = vpack.c.bf16 %v4336, %v4335
    %v4700 = vpack.c.bf16 %v4338, %v4337
    %v4701 = vpack.c.bf16 %v4340, %v4339
    %v4702 = vpack.c.bf16 %v4342, %v4341
    %v4703 = vpack.c.bf16 %v4344, %v4343
    %v4704 = vpack.c.bf16 %v4346, %v4345
    %v4705 = vpack.c.bf16 %v4348, %v4347
    %v4706 = vpack.c.bf16 %v4350, %v4349
    %v4707 = vpack.c.bf16 %v4352, %v4351
    %v4708 = vpack.c.bf16 %v4354, %v4353
    %v4709 = vpack.c.bf16 %v4356, %v4355
    %v4710 = vpack.c.bf16 %v4358, %v4357
    %v4711 = vpack.c.bf16 %v4360, %v4359
    %v4712 = vpack.c.bf16 %v4362, %v4361
    %v4713 = vpack.c.bf16 %v4364, %v4363
    %v4714 = vpack.c.bf16 %v4366, %v4365
    %v4715 = vpack.c.bf16 %v4368, %v4367
    %v4716 = vpack.c.bf16 %v4370, %v4369
    %v4717 = vpack.c.bf16 %v4372, %v4371
    %v4718 = vpack.c.bf16 %v4374, %v4373
    %v4719 = vpack.c.bf16 %v4376, %v4375
    %v4720 = vpack.c.bf16 %v4378, %v4377
    %v4721 = vpack.c.bf16 %v4380, %v4379
    %v4722 = vpack.c.bf16 %v4382, %v4381
    %v4723 = vpack.c.bf16 %v4384, %v4383
    %v4724 = vpack.c.bf16 %v4386, %v4385
    %v4725 = vpack.c.bf16 %v4388, %v4387
    %v4726 = vpack.c.bf16 %v4390, %v4389
    %v4727 = vpack.c.bf16 %v4392, %v4391
    %v4728 = vpack.c.bf16 %v4394, %v4393
    %v4729 = vpack.c.bf16 %v4396, %v4395
    %v4730 = vpack.c.bf16 %v4398, %v4397
    %v4731 = vpack.c.bf16 %v4400, %v4399
    %v4732 = vpack.c.bf16 %v4402, %v4401
    %v4733 = vpack.c.bf16 %v4404, %v4403
    %v4734 = vpack.c.bf16 %v4406, %v4405
    %v4735 = vpack.c.bf16 %v4408, %v4407
    %v4736 = vpack.c.bf16 %v4410, %v4409
    %v4737 = vpack.c.bf16 %v4412, %v4411
    %v4738 = vpack.c.bf16 %v4414, %v4413
    %v4739 = vpack.c.bf16 %v4416, %v4415
    %v4740 = vpack.c.bf16 %v4418, %v4417
    %v4741 = vpack.c.bf16 %v4420, %v4419
    %v4742 = vpack.c.bf16 %v4422, %v4421
    %v4743 = vpack.c.bf16 %v4424, %v4423
    %v4744 = vpack.c.bf16 %v4426, %v4425
    %v4745 = vpack.c.bf16 %v4428, %v4427
    %v4746 = vpack.c.bf16 %v4430, %v4429
    %v4747 = vpack.c.bf16 %v4432, %v4431
    %v4748 = vpack.c.bf16 %v4434, %v4433
    %v4749 = vpack.c.bf16 %v4436, %v4435
    %v4750 = vpack.c.bf16 %v4438, %v4437
    %v4751 = vpack.c.bf16 %v4440, %v4439
    %v4752 = vpack.c.bf16 %v4442, %v4441
    %v4753 = vpack.c.bf16 %v4444, %v4443
    %v4754 = vpack.c.bf16 %v4446, %v4445
    %v4755 = vpack.c.bf16 %v4448, %v4447
    %v4756 = vpack.c.bf16 %v4450, %v4449
    %v4757 = vpack.c.bf16 %v4452, %v4451
    %v4758 = vpack.c.bf16 %v4454, %v4453
    %v4759 = vpack.c.bf16 %v4456, %v4455
    %v4760 = vpack.c.bf16 %v4458, %v4457
    %v4761 = vpack.c.bf16 %v4460, %v4459
    %v4762 = vpack.c.bf16 %v4462, %v4461
    %v4763 = vpack.c.bf16 %v4464, %v4463
    %v4764 = vpack.c.bf16 %v4466, %v4465
    %v4765 = vpack.c.bf16 %v4468, %v4467
    %v4766 = vpack.c.bf16 %v4470, %v4469
    %v4767 = vpack.c.bf16 %v4472, %v4471
    %v4768 = vpack.c.bf16 %v4474, %v4473
    %v4769 = vpack.c.bf16 %v4476, %v4475
    %v4770 = vpack.c.bf16 %v4478, %v4477
    %v4771 = vpack.c.bf16 %v4480, %v4479
    %v4772 = vpack.c.bf16 %v4482, %v4481
    %v4773 = vpack.c.bf16 %v4484, %v4483
    %v4774 = vpack.c.bf16 %v4486, %v4485
    %v4775 = vpack.c.bf16 %v4488, %v4487
    %v4776 = vpack.c.bf16 %v4490, %v4489
    %v4777 = vpack.c.bf16 %v4492, %v4491
    %v4778 = vpack.c.bf16 %v4494, %v4493
    %v4779 = vpack.c.bf16 %v4496, %v4495
    %v4780 = vpack.c.bf16 %v4498, %v4497
    %v4781 = vpack.c.bf16 %v4500, %v4499
    %v4782 = vpack.c.bf16 %v4502, %v4501
    %v4783 = vpack.c.bf16 %v4504, %v4503
    %v4784 = vpack.c.bf16 %v4506, %v4505
    %v4785 = vpack.c.bf16 %v4508, %v4507
    %v4786 = vpack.c.bf16 %v4510, %v4509
    %v4787 = vpack.c.bf16 %v4512, %v4511
    %v4788 = vpack.c.bf16 %v4514, %v4513
    %v4789 = vpack.c.bf16 %v4516, %v4515
    %v4790 = vpack.c.bf16 %v4518, %v4517
    %v4791 = vpack.c.bf16 %v4520, %v4519
    %v4792 = vpack.c.bf16 %v4522, %v4521
    %v4793 = vpack.c.bf16 %v4524, %v4523
    %v4794 = vpack.c.bf16 %v4526, %v4525
    %v4795 = vpack.c.bf16 %v4528, %v4527
    %v4796 = vpack.c.bf16 %v4530, %v4529
    %v4797 = vpack.c.bf16 %v4532, %v4531
    %v4798 = vpack.c.bf16 %v4534, %v4533
    %v4799 = vpack.c.bf16 %v4536, %v4535
    %v4800 = vpack.c.bf16 %v4538, %v4537
    %v4801 = vpack.c.bf16 %v4540, %v4539
    %4802 = vmatprep.subr.bf16.mxu0 0
    %4803 = vmatpush1.bf16.msra.mxu0 %v4674
    %4804 = vmatprep.subr.bf16.mxu0 0
    %4805 = vmatpush1.bf16.msra.mxu0 %v4675
    %4806 = vmatprep.subr.bf16.mxu0 0
    %4807 = vmatpush1.bf16.msra.mxu0 %v4676
    %4808 = vmatprep.subr.bf16.mxu0 0
    %4809 = vmatpush1.bf16.msra.mxu0 %v4677
    %4810 = vmatprep.subr.bf16.mxu0 0
    %4811 = vmatpush1.bf16.msra.mxu0 %v4678
    %4812 = vmatprep.subr.bf16.mxu0 0
    %4813 = vmatpush1.bf16.msra.mxu0 %v4679
    %4814 = vmatprep.subr.bf16.mxu0 0
    %4815 = vmatpush1.bf16.msra.mxu0 %v4680
    %4816 = vmatprep.subr.bf16.mxu0 0
    %4817 = vmatpush1.bf16.msra.mxu0 %v4681
    %4818 = vmatprep.subr.bf16.mxu0 0
    %4819 = vmatpush1.bf16.msra.mxu0 %v4682
    %4820 = vmatprep.subr.bf16.mxu0 0
    %4821 = vmatpush1.bf16.msra.mxu0 %v4683
    %4822 = vmatprep.subr.bf16.mxu0 0
    %4823 = vmatpush1.bf16.msra.mxu0 %v4684
    %4824 = vmatprep.subr.bf16.mxu0 0
    %4825 = vmatpush1.bf16.msra.mxu0 %v4685
    %4826 = vmatprep.subr.bf16.mxu0 0
    %4827 = vmatpush1.bf16.msra.mxu0 %v4686
    %4828 = vmatprep.subr.bf16.mxu0 0
    %4829 = vmatpush1.bf16.msra.mxu0 %v4687
    %4830 = vmatprep.subr.bf16.mxu0 0
    %4831 = vmatpush1.bf16.msra.mxu0 %v4688
    %4832 = vmatprep.subr.bf16.mxu0 0
    %4833 = vmatpush1.bf16.msra.mxu0 %v4689
    %4834 = vmatprep.mubr.bf16.mxu0 %v4658
    %4835 = vmatmul.mubr.bf16.gmra.mrb[0].mxu0 %v4657
    %v4836 = vpop.f32.mrb[0].mxu0
    %v4837 = vadd.f32 0.0, %v4836
    %v4838 = vpop.f32.mrb[0].mxu0
    %v4839 = vpop.f32.mrb[0].mxu0
    %v4840 = vpop.f32.mrb[0].mxu0
    %4841 = vdwg.mxu0
    %4842 = vmatprep.subr.bf16.mxu0 0
    %4843 = vmatpush1.bf16.msra.mxu0 %v4690
    %4844 = vmatprep.subr.bf16.mxu0 0
    %4845 = vmatpush1.bf16.msra.mxu0 %v4691
    %4846 = vmatprep.subr.bf16.mxu0 0
    %4847 = vmatpush1.bf16.msra.mxu0 %v4692
    %4848 = vmatprep.subr.bf16.mxu0 0
    %4849 = vmatpush1.bf16.msra.mxu0 %v4693
    %4850 = vmatprep.subr.bf16.mxu0 0
    %4851 = vmatpush1.bf16.msra.mxu0 %v4694
    %4852 = vmatprep.subr.bf16.mxu0 0
    %4853 = vmatpush1.bf16.msra.mxu0 %v4695
    %4854 = vmatprep.subr.bf16.mxu0 0
    %4855 = vmatpush1.bf16.msra.mxu0 %v4696
    %4856 = vmatprep.subr.bf16.mxu0 0
    %4857 = vmatpush1.bf16.msra.mxu0 %v4697
    %4858 = vmatprep.subr.bf16.mxu0 0
    %4859 = vmatpush1.bf16.msra.mxu0 %v4698
    %4860 = vmatprep.subr.bf16.mxu0 0
    %4861 = vmatpush1.bf16.msra.mxu0 %v4699
    %4862 = vmatprep.subr.bf16.mxu0 0
    %4863 = vmatpush1.bf16.msra.mxu0 %v4700
    %4864 = vmatprep.subr.bf16.mxu0 0
    %4865 = vmatpush1.bf16.msra.mxu0 %v4701
    %4866 = vmatprep.subr.bf16.mxu0 0
    %4867 = vmatpush1.bf16.msra.mxu0 %v4702
    %4868 = vmatprep.subr.bf16.mxu0 0
    %4869 = vmatpush1.bf16.msra.mxu0 %v4703
    %4870 = vmatprep.subr.bf16.mxu0 0
    %4871 = vmatpush1.bf16.msra.mxu0 %v4704
    %4872 = vmatprep.subr.bf16.mxu0 0
    %4873 = vmatpush1.bf16.msra.mxu0 %v4705
    %4874 = vmatprep.mubr.bf16.mxu0 %v4660
    %4875 = vmatmul.mubr.bf16.gmra.mrb[0].mxu0 %v4659
    %v4876 = vpop.f32.mrb[0].mxu0
    %v4877 = vadd.f32 %v4837, %v4876
    %v4878 = vpop.f32.mrb[0].mxu0
    %v4879 = vpop.f32.mrb[0].mxu0
    %v4880 = vpop.f32.mrb[0].mxu0
    %4881 = vdwg.mxu0
    %4882 = vmatprep.subr.bf16.mxu0 0
    %4883 = vmatpush1.bf16.msra.mxu0 %v4706
    %4884 = vmatprep.subr.bf16.mxu0 0
    %4885 = vmatpush1.bf16.msra.mxu0 %v4707
    %4886 = vmatprep.subr.bf16.mxu0 0
    %4887 = vmatpush1.bf16.msra.mxu0 %v4708
    %4888 = vmatprep.subr.bf16.mxu0 0
    %4889 = vmatpush1.bf16.msra.mxu0 %v4709
    %4890 = vmatprep.subr.bf16.mxu0 0
    %4891 = vmatpush1.bf16.msra.mxu0 %v4710
    %4892 = vmatprep.subr.bf16.mxu0 0
    %4893 = vmatpush1.bf16.msra.mxu0 %v4711
    %4894 = vmatprep.subr.bf16.mxu0 0
    %4895 = vmatpush1.bf16.msra.mxu0 %v4712
    %4896 = vmatprep.subr.bf16.mxu0 0
    %4897 = vmatpush1.bf16.msra.mxu0 %v4713
    %4898 = vmatprep.subr.bf16.mxu0 0
    %4899 = vmatpush1.bf16.msra.mxu0 %v4714
    %4900 = vmatprep.subr.bf16.mxu0 0
    %4901 = vmatpush1.bf16.msra.mxu0 %v4715
    %4902 = vmatprep.subr.bf16.mxu0 0
    %4903 = vmatpush1.bf16.msra.mxu0 %v4716
    %4904 = vmatprep.subr.bf16.mxu0 0
    %4905 = vmatpush1.bf16.msra.mxu0 %v4717
    %4906 = vmatprep.subr.bf16.mxu0 0
    %4907 = vmatpush1.bf16.msra.mxu0 %v4718
    %4908 = vmatprep.subr.bf16.mxu0 0
    %4909 = vmatpush1.bf16.msra.mxu0 %v4719
    %4910 = vmatprep.subr.bf16.mxu0 0
    %4911 = vmatpush1.bf16.msra.mxu0 %v4720
    %4912 = vmatprep.subr.bf16.mxu0 0
    %4913 = vmatpush1.bf16.msra.mxu0 %v4721
    %4914 = vmatprep.mubr.bf16.mxu0 %v4662
    %4915 = vmatmul.mubr.bf16.gmra.mrb[0].mxu0 %v4661
    %v4916 = vpop.f32.mrb[0].mxu0
    %v4917 = vadd.f32 %v4877, %v4916
    %v4918 = vpop.f32.mrb[0].mxu0
    %v4919 = vpop.f32.mrb[0].mxu0
    %v4920 = vpop.f32.mrb[0].mxu0
    %4921 = vdwg.mxu0
    %4922 = vmatprep.subr.bf16.mxu0 0
    %4923 = vmatpush1.bf16.msra.mxu0 %v4722
    %4924 = vmatprep.subr.bf16.mxu0 0
    %4925 = vmatpush1.bf16.msra.mxu0 %v4723
    %4926 = vmatprep.subr.bf16.mxu0 0
    %4927 = vmatpush1.bf16.msra.mxu0 %v4724
    %4928 = vmatprep.subr.bf16.mxu0 0
    %4929 = vmatpush1.bf16.msra.mxu0 %v4725
    %4930 = vmatprep.subr.bf16.mxu0 0
    %4931 = vmatpush1.bf16.msra.mxu0 %v4726
    %4932 = vmatprep.subr.bf16.mxu0 0
    %4933 = vmatpush1.bf16.msra.mxu0 %v4727
    %4934 = vmatprep.subr.bf16.mxu0 0
    %4935 = vmatpush1.bf16.msra.mxu0 %v4728
    %4936 = vmatprep.subr.bf16.mxu0 0
    %4937 = vmatpush1.bf16.msra.mxu0 %v4729
    %4938 = vmatprep.subr.bf16.mxu0 0
    %4939 = vmatpush1.bf16.msra.mxu0 %v4730
    %4940 = vmatprep.subr.bf16.mxu0 0
    %4941 = vmatpush1.bf16.msra.mxu0 %v4731
    %4942 = vmatprep.subr.bf16.mxu0 0
    %4943 = vmatpush1.bf16.msra.mxu0 %v4732
    %4944 = vmatprep.subr.bf16.mxu0 0
    %4945 = vmatpush1.bf16.msra.mxu0 %v4733
    %4946 = vmatprep.subr.bf16.mxu0 0
    %4947 = vmatpush1.bf16.msra.mxu0 %v4734
    %4948 = vmatprep.subr.bf16.mxu0 0
    %4949 = vmatpush1.bf16.msra.mxu0 %v4735
    %4950 = vmatprep.subr.bf16.mxu0 0
    %4951 = vmatpush1.bf16.msra.mxu0 %v4736
    %4952 = vmatprep.subr.bf16.mxu0 0
    %4953 = vmatpush1.bf16.msra.mxu0 %v4737
    %4954 = vmatprep.mubr.bf16.mxu0 %v4664
    %4955 = vmatmul.mubr.bf16.gmra.mrb[0].mxu0 %v4663
    %v4956 = vpop.f32.mrb[0].mxu0
    %v4957 = vadd.f32 %v4917, %v4956
    %v4958 = vpop.f32.mrb[0].mxu0
    %v4959 = vpop.f32.mrb[0].mxu0
    %v4960 = vpop.f32.mrb[0].mxu0
    %4961 = vdwg.mxu0
    %4962 = vmatprep.subr.bf16.mxu0 0
    %4963 = vmatpush1.bf16.msra.mxu0 %v4738
    %4964 = vmatprep.subr.bf16.mxu0 0
    %4965 = vmatpush1.bf16.msra.mxu0 %v4739
    %4966 = vmatprep.subr.bf16.mxu0 0
    %4967 = vmatpush1.bf16.msra.mxu0 %v4740
    %4968 = vmatprep.subr.bf16.mxu0 0
    %4969 = vmatpush1.bf16.msra.mxu0 %v4741
    %4970 = vmatprep.subr.bf16.mxu0 0
    %4971 = vmatpush1.bf16.msra.mxu0 %v4742
    %4972 = vmatprep.subr.bf16.mxu0 0
    %4973 = vmatpush1.bf16.msra.mxu0 %v4743
    %4974 = vmatprep.subr.bf16.mxu0 0
    %4975 = vmatpush1.bf16.msra.mxu0 %v4744
    %4976 = vmatprep.subr.bf16.mxu0 0
    %4977 = vmatpush1.bf16.msra.mxu0 %v4745
    %4978 = vmatprep.subr.bf16.mxu0 0
    %4979 = vmatpush1.bf16.msra.mxu0 %v4746
    %4980 = vmatprep.subr.bf16.mxu0 0
    %4981 = vmatpush1.bf16.msra.mxu0 %v4747
    %4982 = vmatprep.subr.bf16.mxu0 0
    %4983 = vmatpush1.bf16.msra.mxu0 %v4748
    %4984 = vmatprep.subr.bf16.mxu0 0
    %4985 = vmatpush1.bf16.msra.mxu0 %v4749
    %4986 = vmatprep.subr.bf16.mxu0 0
    %4987 = vmatpush1.bf16.msra.mxu0 %v4750
    %4988 = vmatprep.subr.bf16.mxu0 0
    %4989 = vmatpush1.bf16.msra.mxu0 %v4751
    %4990 = vmatprep.subr.bf16.mxu0 0
    %4991 = vmatpush1.bf16.msra.mxu0 %v4752
    %4992 = vmatprep.subr.bf16.mxu0 0
    %4993 = vmatpush1.bf16.msra.mxu0 %v4753
    %4994 = vmatprep.mubr.bf16.mxu0 %v4666
    %4995 = vmatmul.mubr.bf16.gmra.mrb[0].mxu0 %v4665
    %v4996 = vpop.f32.mrb[0].mxu0
    %v4997 = vadd.f32 %v4957, %v4996
    %v4998 = vpop.f32.mrb[0].mxu0
    %v4999 = vpop.f32.mrb[0].mxu0
    %v5000 = vpop.f32.mrb[0].mxu0
    %5001 = vdwg.mxu0
    %5002 = vmatprep.subr.bf16.mxu0 0
    %5003 = vmatpush1.bf16.msra.mxu0 %v4754
    %5004 = vmatprep.subr.bf16.mxu0 0
    %5005 = vmatpush1.bf16.msra.mxu0 %v4755
    %5006 = vmatprep.subr.bf16.mxu0 0
    %5007 = vmatpush1.bf16.msra.mxu0 %v4756
    %5008 = vmatprep.subr.bf16.mxu0 0
    %5009 = vmatpush1.bf16.msra.mxu0 %v4757
    %5010 = vmatprep.subr.bf16.mxu0 0
    %5011 = vmatpush1.bf16.msra.mxu0 %v4758
    %5012 = vmatprep.subr.bf16.mxu0 0
    %5013 = vmatpush1.bf16.msra.mxu0 %v4759
    %5014 = vmatprep.subr.bf16.mxu0 0
    %5015 = vmatpush1.bf16.msra.mxu0 %v4760
    %5016 = vmatprep.subr.bf16.mxu0 0
    %5017 = vmatpush1.bf16.msra.mxu0 %v4761
    %5018 = vmatprep.subr.bf16.mxu0 0
    %5019 = vmatpush1.bf16.msra.mxu0 %v4762
    %5020 = vmatprep.subr.bf16.mxu0 0
    %5021 = vmatpush1.bf16.msra.mxu0 %v4763
    %5022 = vmatprep.subr.bf16.mxu0 0
    %5023 = vmatpush1.bf16.msra.mxu0 %v4764
    %5024 = vmatprep.subr.bf16.mxu0 0
    %5025 = vmatpush1.bf16.msra.mxu0 %v4765
    %5026 = vmatprep.subr.bf16.mxu0 0
    %5027 = vmatpush1.bf16.msra.mxu0 %v4766
    %5028 = vmatprep.subr.bf16.mxu0 0
    %5029 = vmatpush1.bf16.msra.mxu0 %v4767
    %5030 = vmatprep.subr.bf16.mxu0 0
    %5031 = vmatpush1.bf16.msra.mxu0 %v4768
    %5032 = vmatprep.subr.bf16.mxu0 0
    %5033 = vmatpush1.bf16.msra.mxu0 %v4769
    %5034 = vmatprep.mubr.bf16.mxu0 %v4668
    %5035 = vmatmul.mubr.bf16.gmra.mrb[0].mxu0 %v4667
    %v5036 = vpop.f32.mrb[0].mxu0
    %v5037 = vadd.f32 %v4997, %v5036
    %v5038 = vpop.f32.mrb[0].mxu0
    %v5039 = vpop.f32.mrb[0].mxu0
    %v5040 = vpop.f32.mrb[0].mxu0
    %5041 = vdwg.mxu0
    %5042 = vmatprep.subr.bf16.mxu0 0
    %5043 = vmatpush1.bf16.msra.mxu0 %v4770
    %5044 = vmatprep.subr.bf16.mxu0 0
    %5045 = vmatpush1.bf16.msra.mxu0 %v4771
    %5046 = vmatprep.subr.bf16.mxu0 0
    %5047 = vmatpush1.bf16.msra.mxu0 %v4772
    %5048 = vmatprep.subr.bf16.mxu0 0
    %5049 = vmatpush1.bf16.msra.mxu0 %v4773
    %5050 = vmatprep.subr.bf16.mxu0 0
    %5051 = vmatpush1.bf16.msra.mxu0 %v4774
    %5052 = vmatprep.subr.bf16.mxu0 0
    %5053 = vmatpush1.bf16.msra.mxu0 %v4775
    %5054 = vmatprep.subr.bf16.mxu0 0
    %5055 = vmatpush1.bf16.msra.mxu0 %v4776
    %5056 = vmatprep.subr.bf16.mxu0 0
    %5057 = vmatpush1.bf16.msra.mxu0 %v4777
    %5058 = vmatprep.subr.bf16.mxu0 0
    %5059 = vmatpush1.bf16.msra.mxu0 %v4778
    %5060 = vmatprep.subr.bf16.mxu0 0
    %5061 = vmatpush1.bf16.msra.mxu0 %v4779
    %5062 = vmatprep.subr.bf16.mxu0 0
    %5063 = vmatpush1.bf16.msra.mxu0 %v4780
    %5064 = vmatprep.subr.bf16.mxu0 0
    %5065 = vmatpush1.bf16.msra.mxu0 %v4781
    %5066 = vmatprep.subr.bf16.mxu0 0
    %5067 = vmatpush1.bf16.msra.mxu0 %v4782
    %5068 = vmatprep.subr.bf16.mxu0 0
    %5069 = vmatpush1.bf16.msra.mxu0 %v4783
    %5070 = vmatprep.subr.bf16.mxu0 0
    %5071 = vmatpush1.bf16.msra.mxu0 %v4784
    %5072 = vmatprep.subr.bf16.mxu0 0
    %5073 = vmatpush1.bf16.msra.mxu0 %v4785
    %5074 = vmatprep.mubr.bf16.mxu0 %v4670
    %5075 = vmatmul.mubr.bf16.gmra.mrb[0].mxu0 %v4669
    %v5076 = vpop.f32.mrb[0].mxu0
    %v5077 = vadd.f32 %v5037, %v5076
    %v5078 = vpop.f32.mrb[0].mxu0
    %v5079 = vpop.f32.mrb[0].mxu0
    %v5080 = vpop.f32.mrb[0].mxu0
    %5081 = vdwg.mxu0
    %5082 = vmatprep.subr.bf16.mxu0 0
    %5083 = vmatpush1.bf16.msra.mxu0 %v4786
    %5084 = vmatprep.subr.bf16.mxu0 0
    %5085 = vmatpush1.bf16.msra.mxu0 %v4787
    %5086 = vmatprep.subr.bf16.mxu0 0
    %5087 = vmatpush1.bf16.msra.mxu0 %v4788
    %5088 = vmatprep.subr.bf16.mxu0 0
    %5089 = vmatpush1.bf16.msra.mxu0 %v4789
    %5090 = vmatprep.subr.bf16.mxu0 0
    %5091 = vmatpush1.bf16.msra.mxu0 %v4790
    %5092 = vmatprep.subr.bf16.mxu0 0
    %5093 = vmatpush1.bf16.msra.mxu0 %v4791
    %5094 = vmatprep.subr.bf16.mxu0 0
    %5095 = vmatpush1.bf16.msra.mxu0 %v4792
    %5096 = vmatprep.subr.bf16.mxu0 0
    %5097 = vmatpush1.bf16.msra.mxu0 %v4793
    %5098 = vmatprep.subr.bf16.mxu0 0
    %5099 = vmatpush1.bf16.msra.mxu0 %v4794
    %5100 = vmatprep.subr.bf16.mxu0 0
    %5101 = vmatpush1.bf16.msra.mxu0 %v4795
    %5102 = vmatprep.subr.bf16.mxu0 0
    %5103 = vmatpush1.bf16.msra.mxu0 %v4796
    %5104 = vmatprep.subr.bf16.mxu0 0
    %5105 = vmatpush1.bf16.msra.mxu0 %v4797
    %5106 = vmatprep.subr.bf16.mxu0 0
    %5107 = vmatpush1.bf16.msra.mxu0 %v4798
    %5108 = vmatprep.subr.bf16.mxu0 0
    %5109 = vmatpush1.bf16.msra.mxu0 %v4799
    %5110 = vmatprep.subr.bf16.mxu0 0
    %5111 = vmatpush1.bf16.msra.mxu0 %v4800
    %5112 = vmatprep.subr.bf16.mxu0 0
    %5113 = vmatpush1.bf16.msra.mxu0 %v4801
    %5114 = vmatprep.mubr.bf16.mxu0 %v4672
    %5115 = vmatmul.mubr.bf16.gmra.mrb[0].mxu0 %v4671
    %v5116 = vpop.f32.mrb[0].mxu0
    %v5117 = vadd.f32 %v5077, %v5116
    %v5118 = vpop.f32.mrb[0].mxu0
    %v5119 = vpop.f32.mrb[0].mxu0
    %v5120 = vpop.f32.mrb[0].mxu0
    %5121 = vdwg.mxu0
    %v5122 = vadd.f32 %v4673, %v5117
    %5123 = vst.msk [vmem:[#allocation2] sm:$0xff] %vm2843, %v5122
    %v5124 = vld [vmem:[#allocation3] sm:$0xff]
    %v5125 = vadd.f32 %v4641, %v4642
    %v5126 = vadd.f32 %v5125, %v4643
    %v5127 = vadd.f32 %v5126, %v4644
    %v5128 = vadd.f32 %v5127, %v4645
    %v5129 = vadd.f32 %v5128, %v4646
    %v5130 = vadd.f32 %v5129, %v4647
    %v5131 = vadd.f32 %v5130, %v4648
    %v5132 = vadd.f32 %v5131, %v4649
    %v5133 = vadd.f32 %v5132, %v4650
    %v5134 = vadd.f32 %v5133, %v4651
    %v5135 = vadd.f32 %v5134, %v4652
    %v5136 = vadd.f32 %v5135, %v4653
    %v5137 = vadd.f32 %v5136, %v4654
    %v5138 = vadd.f32 %v5137, %v4655
    %v5139 = vadd.f32 %v5138, %v4656
    %5140 = vadd.xlane.f32.xlu0 %v5139
    %v5141 = vpop.xlane.xlu0 %5140
    %v5142 = vadd.f32 %v5124, %v5141
    %vm5143 = vcmask 7168
    %5144 = vst.msk [vmem:[#allocation3] sm:$0xff] %vm5143, %v5142
    // Predicated region
    $region42: #{_pallas_mlp_encode.1} parent=1 // pred_check
      %p5145 = pneg %p75
    $region43: #{_pallas_mlp_encode.1} parent=1 // pred_check_branch
      %5147 = sbr.rel (%p5145) target = $region45
    $region44: #{_pallas_mlp_encode.1} parent=1 // pred_region
      %v5148 = vld [vmem:[#allocation2] sm:$0xff]
      %v5149 = vld [vmem:[%s7] sm:$0xff]
      %v5150 = vld [vmem:[%s7 + $0x8] sm:$0xff]
      %v5151 = vld [vmem:[%s7 + $0x10] sm:$0xff]
      %v5152 = vld [vmem:[%s7 + $0x18] sm:$0xff]
      %v5153 = vld [vmem:[%s2] sm:$0xff]
      %v5154 = vld [vmem:[#allocation3] sm:$0xff]
      %v5155 = vld [vmem:[%s8] sm:$0x1]
      %5157 = vset.pattern.permute.xlu0 0
      %5158 = vperm.xlu0 %5157, %v5154
      %v5159 = vpop.permute.xlu0 %5158
      %v5162 = vlaneseq
      %v5163 = vshrl.u32 %v5162, 7
      %v5164 = vsub.s32 0, %v5163
      %v5165 = vrot.slane %v5155, %v5164
      %v5167 = vmul.f32 %v5159, %v5165
      %v5169 = vsel %vm2843, %v5148, 0
      %5171 = vmatprep.subr.mxu0 0.0
      %5172 = vmatpush1.msra.mxu0 %v5149
      %5173 = vmatprep.subr.mxu0 0.0
      %5174 = vmatpush1.msra.mxu0 %v5150
      %5175 = vmatprep.subr.mxu0 0.0
      %5176 = vmatpush1.msra.mxu0 %v5151
      %5177 = vmatprep.subr.mxu0 0.0
      %5178 = vmatpush1.msra.mxu0 %v5152
      %5179 = vmatprep.subr.mxu0 0.0
      %5180 = vmatpush1.msra.mxu0 0.0
      %5181 = vmatprep.subr.mxu0 0.0
      %5182 = vmatpush1.msra.mxu0 0.0
      %5183 = vmatprep.subr.mxu0 0.0
      %5184 = vmatpush1.msra.mxu0 0.0
      %5185 = vmatprep.subr.mxu0 0.0
      %5186 = vmatpush1.msra.mxu0 0.0
      %5187 = vmatprep.subr.mxu0 0.0
      %5188 = vmatpush1.msra.mxu0 0.0
      %5189 = vmatprep.subr.mxu0 0.0
      %5190 = vmatpush1.msra.mxu0 0.0
      %5191 = vmatprep.subr.mxu0 0.0
      %5192 = vmatpush1.msra.mxu0 0.0
      %5193 = vmatprep.subr.mxu0 0.0
      %5194 = vmatpush1.msra.mxu0 0.0
      %5195 = vmatprep.subr.mxu0 0.0
      %5196 = vmatpush1.msra.mxu0 0.0
      %5197 = vmatprep.subr.mxu0 0.0
      %5198 = vmatpush1.msra.mxu0 0.0
      %5199 = vmatprep.subr.mxu0 0.0
      %5200 = vmatpush1.msra.mxu0 0.0
      %5201 = vmatprep.subr.mxu0 0.0
      %5202 = vmatpush1.msra.mxu0 0.0
      %5203 = vmatprep.subr.mxu0 0.0
      %5204 = vmatpush1.msra.mxu0 0.0
      %5205 = vmatprep.subr.mxu0 0.0
      %5206 = vmatpush1.msra.mxu0 0.0
      %5207 = vmatprep.subr.mxu0 0.0
      %5208 = vmatpush1.msra.mxu0 0.0
      %5209 = vmatprep.subr.mxu0 0.0
      %5210 = vmatpush1.msra.mxu0 0.0
      %5211 = vmatprep.subr.mxu0 0.0
      %5212 = vmatpush1.msra.mxu0 0.0
      %5213 = vmatprep.subr.mxu0 0.0
      %5214 = vmatpush1.msra.mxu0 0.0
      %5215 = vmatprep.subr.mxu0 0.0
      %5216 = vmatpush1.msra.mxu0 0.0
      %5217 = vmatprep.subr.mxu0 0.0
      %5218 = vmatpush1.msra.mxu0 0.0
      %5219 = vmatprep.subr.mxu0 0.0
      %5220 = vmatpush1.msra.mxu0 0.0
      %5221 = vmatprep.subr.mxu0 0.0
      %5222 = vmatpush1.msra.mxu0 0.0
      %5223 = vmatprep.subr.mxu0 0.0
      %5224 = vmatpush1.msra.mxu0 0.0
      %5225 = vmatprep.subr.mxu0 0.0
      %5226 = vmatpush1.msra.mxu0 0.0
      %5227 = vmatprep.subr.mxu0 0.0
      %5228 = vmatpush1.msra.mxu0 0.0
      %5229 = vmatprep.subr.mxu0 0.0
      %5230 = vmatpush1.msra.mxu0 0.0
      %5231 = vmatprep.subr.mxu0 0.0
      %5232 = vmatpush1.msra.mxu0 0.0
      %5233 = vmatprep.subr.mxu0 0.0
      %5234 = vmatpush1.msra.mxu0 0.0
      %5235 = vmatprep.mubr.f32.mxu0 0.0
      %5236 = vmatmul.mubr.f32.gmra.mrb[0].mxu0 %v5169
      %v5237 = vpop.f32.mrb[0].mxu0
      %v5238 = vadd.f32 %v5167, %v5237
      %v5239 = vpop.f32.mrb[0].mxu0
      %5240 = vdwg.mxu0
      %5242 = vset.pattern.permute.xlu0 0
      %5243 = vperm.xlu0 %5242, %v5153
      %v5244 = vpop.permute.xlu0 %5243
      %v5246 = vmul.f32 %v5244, %v5238
      %5247 = vst [vmem:[#allocation4] sm:$0xff] %v5246
    $region45: #{_pallas_mlp_encode.1} parent=1 // pred_fallthru
      _
    // Predicated region
    $region46: #{_pallas_mlp_encode.1} parent=1 // pred_check
      _
    $region47: #{_pallas_mlp_encode.1} parent=1 // pred_check_branch
      %5249 = sbr.rel (0) target = $region49
    $region48: #{_pallas_mlp_encode.1} parent=1 // pred_region
      %s5251 = ssub.s32 128, 128
      %5252 = vsyncadd [#allocation5], %s5251
      %s5254 = sshll.u32 [#allocation4], 4
      %s5255 = int_to_ptr.vmem [resolvable:$true] %s5254
      %5257 = dma.vmem_to_hbm [thread:$0]  %s5255, 128, %s9, [#allocation5]
    $region49: #{_pallas_mlp_encode.1} parent=1 // pred_fallthru
      _
    // Predicated region
    $region50: #{_pallas_mlp_encode.1} parent=1 // pred_check
      _
    $region51: #{_pallas_mlp_encode.1} parent=1 // pred_check_branch
      %5259 = sbr.rel (0) target = $region53
    $region52: #{_pallas_mlp_encode.1} parent=1 // pred_region
      %5260 = dma.done [#allocation5], 128
    $region53: #{_pallas_mlp_encode.1} parent=1 // pred_fallthru
      _
    %5261 = vsyncpa [#allocation5], 1

</llo_original>
